<compile_context>
chip_gen: v6e
topology: v6e:2x2x1
jax: 0.10.0
libtpu: 0.0.40
codegen_flags: <defaults>
</compile_context>

<pallas_src>
import jax
import jax.numpy as jnp
from jax.experimental import pallas as pl
from jax.experimental.pallas import tpu as pltpu

# ----- module configuration (matches ResidualCouplingLayer.__init__ args) -----
CHANNELS = 4          # channels (must be even)
HALF = CHANNELS // 2  # half_channels
HIDDEN = 32           # hidden_channels
KSIZE = 5             # kernel_size (odd, "same" padding)
DILATION = 1          # dilation_rate
NLAYERS = 4           # n_layers
MEAN_ONLY = False
# gin_channels=0 (no conditioning), p_dropout=0 (dropout is identity)
B = 2                 # batch
T = 16                # sequence length (rows per grid tile)
R = B * T             # flattened rows

PAD = (KSIZE - 1) // 2
OFFSETS_PER_LAYER = tuple(
    tuple((j - PAD) * (DILATION ** l) for j in range(KSIZE))
    for l in range(NLAYERS))


def _coupling_kernel(x_ref, mask_ref, wn_w_ref, wn_b_ref, pre_ref, post_ref,
                     x_out_ref, rowsum_ref):
    rows = x_ref.shape[0]            # = T (one batch element / sequence per tile)
    x = x_ref[...]                   # (rows, C) f32
    mask = mask_ref[...]             # (rows, 1) f32
    x0 = x[:, :HALF]
    x1 = x[:, HALF:]

    # ---- hoisted broadcasts (JAX does not CSE broadcast_in_dim) ----
    mask_h = jnp.broadcast_to(mask, (rows, HIDDEN))

    # full-width f32 tap-validity masks: zero "same" padding inside each
    # sequence; tile boundary == batch boundary so in-tile rolls never bleed.
    t_idx = jax.lax.broadcasted_iota(jnp.int32, (rows, HIDDEN), 0)
    tap_mask = {}
    for offs in OFFSETS_PER_LAYER:
        for off in offs:
            if off != 0 and off not in tap_mask:
                tap_mask[off] = jnp.logical_and(
                    t_idx + off >= 0, t_idx + off < rows).astype(jnp.float32)

    # ---- pre 1x1 conv (half -> hidden) on the VPU: HALF broadcast FMAs ----
    h = jnp.broadcast_to(pre_ref[HALF:HALF + 1, :], (rows, HIDDEN))   # bias row
    for c in range(HALF):
        h = h + x0[:, c:c + 1] * pre_ref[c:c + 1, :]
    h = h * mask_h

    # ---- WN encoder (gin_channels=0 -> no cond term; p_dropout=0 -> identity) ----
    output = None
    for l in range(NLAYERS):
        h_bf = h.astype(jnp.bfloat16)
        # K-split accumulated gate matmuls: one (rows,H)@(H,2H) push per tap.
        gates = jnp.broadcast_to(wn_b_ref[l, 0:1, :], (rows, 2 * HIDDEN))
        for k, off in enumerate(OFFSETS_PER_LAYER[l]):
            if off == 0:
                tap = h_bf
            else:
                tap = (pltpu.roll(h, (-off) % rows, axis=0)
                       * tap_mask[off]).astype(jnp.bfloat16)
            gates = gates + jnp.dot(tap, wn_w_ref[l, k],
                                    preferred_element_type=jnp.float32)
        # fused_add_tanh_sigmoid_multiply (f32 on VPU/EUP)
        acts = jnp.tanh(gates[:, :HIDDEN]) * jax.nn.sigmoid(gates[:, HIDDEN:])
        acts_bf = acts.astype(jnp.bfloat16)

        if l < NLAYERS - 1:
            rs = (jnp.dot(acts_bf, wn_w_ref[l, KSIZE],
                          preferred_element_type=jnp.float32)
                  + wn_b_ref[l, 1:2, :])                    # (rows, 2H) res|skip
            h = (h + rs[:, :HIDDEN]) * mask_h
            skip = rs[:, HIDDEN:]
        else:  # last layer: real (H, H) skip-only weight, res path unused
            w_skip = wn_w_ref[l, KSIZE][:, :HIDDEN]
            skip = (jnp.dot(acts_bf, w_skip,
                            preferred_element_type=jnp.float32)
                    + wn_b_ref[l, 1:2, :HIDDEN])
        output = skip if output is None else output + skip

    h_out = output * mask_h

    # ---- post 1x1 conv (hidden -> [mean | log-scale]); kept f32 end-to-end ----
    stats = (jnp.dot(h_out, post_ref[:HIDDEN, :],
                     preferred_element_type=jnp.float32)
             + post_ref[HIDDEN:HIDDEN + 1, :]) * mask
    m = stats[:, :HALF]
    logs = stats[:, HALF:]

    x1_new = m + x1 * jnp.exp(logs) * mask
    x_out_ref[:, :HALF] = x0               # passthrough half (aliased buffer)
    x_out_ref[:, HALF:] = x1_new

    # logdet contribution: single lane reduction to per-row sums; the per-batch
    # sublane sum is finished by the wrapper.
    rowsum_ref[...] = jnp.sum(logs, axis=1, keepdims=True)


def _pallas_coupling(x_flat, mask_flat, wn_w, wn_b, pre_pack, post_pack):
    return pl.pallas_call(
        _coupling_kernel,
        grid=(B,),
        in_specs=[
            pl.BlockSpec((T, CHANNELS), lambda b: (b, 0)),       # x (aliased out 0)
            pl.BlockSpec((T, 1), lambda b: (b, 0)),              # mask
            pl.BlockSpec(wn_w.shape, lambda b: (0, 0, 0, 0)),    # resident weights
            pl.BlockSpec(wn_b.shape, lambda b: (0, 0, 0)),
            pl.BlockSpec(pre_pack.shape, lambda b: (0, 0)),
            pl.BlockSpec(post_pack.shape, lambda b: (0, 0)),
        ],
        out_specs=(
            pl.BlockSpec((T, CHANNELS), lambda b: (b, 0)),
            pl.BlockSpec((T, 1), lambda b: (b, 0)),
        ),
        out_shape=(
            jax.ShapeDtypeStruct((R, CHANNELS), jnp.float32),
            jax.ShapeDtypeStruct((R, 1), jnp.float32),
        ),
        input_output_aliases={0: 0},
        compiler_params=pltpu.CompilerParams(
            dimension_semantics=("parallel",),
            vmem_limit_bytes=32 * 1024 * 1024,
        ),
    )(x_flat, mask_flat, wn_w, wn_b, pre_pack, post_pack)


@jax.jit
def residual_coupling_forward(x_nct, x_mask_n1t, params):
    """x_nct: (B, C, T), x_mask_n1t: (B, 1, T)  ->  ((B, C, T), (B,))."""
    x_flat = jnp.transpose(x_nct, (0, 2, 1)).reshape(R, CHANNELS)     # (R, C)
    mask_flat = jnp.transpose(x_mask_n1t, (0, 2, 1)).reshape(R, 1)    # (R, 1)
    x_out_flat, row_sums = _pallas_coupling(
        x_flat, mask_flat, params['wn_w'], params['wn_b'],
        params['pre_pack'], params['post_pack'])
    x_out = jnp.transpose(x_out_flat.reshape(B, T, CHANNELS), (0, 2, 1))
    logdet = jnp.sum(row_sums.reshape(B, T), axis=1)
    return x_out, logdet


def make_params(key, zero_post=True):
    """Deterministic synthetic weights with the PyTorch module's shapes, packed
    into 4 buffers:
      wn_w : (L, K+1, H, 2H) bf16 — per-tap gate weights (slots 0..K-1, columns
             [tanh | sigmoid]) + res|skip projection (slot K; last layer stores
             the skip-only (H,H) weight in the first H columns).
      wn_b : (L, 2, 2H) f32 — row 0 = gate bias, row 1 = res|skip bias.
      pre_pack  : (HALF+1, H)     — pre conv weight rows + bias row.
      post_pack : (H+1, 2*HALF)   — post conv weight rows + bias row.
    weight_norm is folded (effective weight == raw weight at init)."""
    scale = 0.1
    keys = jax.random.split(key, 5)
    pre_w = scale * jax.random.normal(keys[0], (HIDDEN, HALF, 1), jnp.float32)
    pre_b = scale * jax.random.normal(keys[1], (HIDDEN,), jnp.float32)
    kk = jax.random.split(keys[2], 4 * NLAYERS)

    wn_w_l, wn_b_l = [], []
    for l in range(NLAYERS):
        w = scale * jax.random.normal(kk[4 * l + 0],
                                      (2 * HIDDEN, HIDDEN, KSIZE), jnp.float32)
        b = scale * jax.random.normal(kk[4 * l + 1], (2 * HIDDEN,), jnp.float32)
        taps = [w[:, :, k].T for k in range(KSIZE)]            # each (H, 2H)

        out_rs = 2 * HIDDEN if l < NLAYERS - 1 else HIDDEN
        rw = scale * jax.random.normal(kk[4 * l + 2],
                                       (out_rs, HIDDEN, 1), jnp.float32)
        rb = scale * jax.random.normal(kk[4 * l + 3], (out_rs,), jnp.float32)
        rs_w = rw[:, :, 0].T                                   # (H, out_rs)
        if l == NLAYERS - 1:   # skip-only weight in the first H columns
            rs_w = jnp.concatenate(
                [rs_w, jnp.zeros((HIDDEN, HIDDEN), jnp.float32)], axis=1)
            rb_full = jnp.concatenate([rb, jnp.zeros((HIDDEN,), jnp.float32)])
        else:
            rb_full = rb
        wn_w_l.append(jnp.stack(taps + [rs_w]))                # (K+1, H, 2H)
        wn_b_l.append(jnp.stack([b, rb_full]))                 # (2, 2H)

    if zero_post:  # faithful to __init__: post conv weights & bias zeroed
        post_w = jnp.zeros((2 * HALF, HIDDEN, 1), jnp.float32)
        post_b = jnp.zeros((2 * HALF,), jnp.float32)
    else:
        post_w = scale * jax.random.normal(keys[3], (2 * HALF, HIDDEN, 1), jnp.float32)
        post_b = scale * jax.random.normal(keys[4], (2 * HALF,), jnp.float32)

    return {
        'wn_w': jnp.stack(wn_w_l).astype(jnp.bfloat16),        # (L, K+1, H, 2H)
        'wn_b': jnp.stack(wn_b_l),                             # (L, 2, 2H)
        'pre_pack': jnp.concatenate([pre_w[:, :, 0].T, pre_b[None, :]], axis=0),
        'post_pack': jnp.concatenate([post_w[:, :, 0].T, post_b[None, :]], axis=0),
    }


def jnp_reference(x_nct, x_mask_n1t, p):
    """Pure-JAX f32 reference of the same forward (uses the same bf16-rounded
    WN weight values so only the kernel's bf16 activation casts differ)."""
    wn_w = p['wn_w'].astype(jnp.float32)
    wn_b = p['wn_b']
    pre_w, pre_b = p['pre_pack'][:HALF], p['pre_pack'][HALF]
    post_w, post_b = p['post_pack'][:HIDDEN], p['post_pack'][HIDDEN]

    x = jnp.transpose(x_nct, (0, 2, 1))              # (B, T, C)
    mask = jnp.transpose(x_mask_n1t, (0, 2, 1))      # (B, T, 1)
    x0, x1 = x[..., :HALF], x[..., HALF:]
    h = (x0 @ pre_w + pre_b) * mask

    def shift(a, off):                               # zero-padded shift along T
        if off == 0:
            return a
        z = jnp.zeros_like(a)
        if off > 0:
            return jnp.concatenate([a[:, off:, :], z[:, :off, :]], axis=1)
        return jnp.concatenate([z[:, :(-off), :], a[:, :off, :]], axis=1)

    output = jnp.zeros((B, T, HIDDEN), jnp.float32)
    for l in range(NLAYERS):
        gates = wn_b[l, 0]
        for k, off in enumerate(OFFSETS_PER_LAYER[l]):
            gates = gates + shift(h, off) @ wn_w[l, k]
        acts = jnp.tanh(gates[..., :HIDDEN]) * jax.nn.sigmoid(gates[..., HIDDEN:])
        rs = acts @ wn_w[l, KSIZE] + wn_b[l, 1]
        if l < NLAYERS - 1:
            h = (h + rs[..., :HIDDEN]) * mask
            skip = rs[..., HIDDEN:]
        else:
            skip = rs[..., :HIDDEN]
        output = output + skip
    h_out = output * mask
    stats = (h_out @ post_w + post_b) * mask
    m, logs = stats[..., :HALF], stats[..., HALF:]
    x1n = m + x1 * jnp.exp(logs) * mask
    xout = jnp.concatenate([x0, x1n], axis=-1)
    return jnp.transpose(xout, (0, 2, 1)), jnp.sum(logs, axis=(1, 2))


if __name__ == "__main__":
    key = jax.random.PRNGKey(0)
    kx, kp = jax.random.split(key, 2)
    x = jax.random.normal(kx, (B, CHANNELS, T), jnp.float32)        # NCT like PyTorch
    lengths = jnp.array([T, T - 4])
    x_mask = (jnp.arange(T)[None, :] < lengths[:, None]
              ).astype(jnp.float32)[:, None, :]                     # (B, 1, T)

    # Faithful parameters (post conv zero-initialized as in __init__).
    params = make_params(kp, zero_post=True)
    x_out, logdet = residual_coupling_forward(x, x_mask, params)
    jax.block_until_ready((x_out, logdet))

    # Validation: non-zero post weights exercise the full pipeline numerically.
    # (tolerances loosened vs rev-2 because the WN matmuls feed bf16 to the MXU)
    vparams = make_params(kp, zero_post=False)
    x_out_v, logdet_v = residual_coupling_forward(x, x_mask, vparams)
    x_ref, logdet_ref = jnp_reference(x, x_mask, vparams)
    assert jnp.allclose(x_out_v, x_ref, atol=2e-2, rtol=2e-2)
    assert jnp.allclose(logdet_v, logdet_ref, atol=2e-2, rtol=2e-2)

    # TODO(synk): mean_only=True, reverse=True and g (gin_channels>0) conditioning
    # paths are not wired into this kernel (forward, gin_channels=0, mean_only=False).
    print("KERNEL_OK")
</pallas_src>

<mosaic_0001>
module attributes {stable_mosaic.version = 11 : i64} {
  func.func @_coupling_kernel(%arg0: i32, %arg1: memref<16x4xf32, #tpu.memory_space<vmem>>, %arg2: memref<16x1xf32, #tpu.memory_space<vmem>>, %arg3: memref<4x6x32x64xbf16, #tpu.memory_space<vmem>>, %arg4: memref<4x2x64xf32, #tpu.memory_space<vmem>>, %arg5: memref<3x32xf32, #tpu.memory_space<vmem>>, %arg6: memref<33x4xf32, #tpu.memory_space<vmem>>, %arg7: memref<16x4xf32, #tpu.memory_space<vmem>>, %arg8: memref<16x1xf32, #tpu.memory_space<vmem>>) attributes {dimension_semantics = [#tpu.dimension_semantics<parallel>], iteration_bounds = array<i64: 2>, scalar_prefetch = 0 : i64, scratch_operands = 0 : i64, tpu.core_type = #tpu.core_type<tc>, window_params = [{transform_indices = @transform_0, window_bounds = array<i64: 16, 4>}, {transform_indices = @transform_1, window_bounds = array<i64: 16, 1>}, {pipeline_mode = #tpu.pipeline_mode<synchronous>, transform_indices = @transform_2, window_bounds = array<i64: 4, 6, 32, 64>}, {pipeline_mode = #tpu.pipeline_mode<synchronous>, transform_indices = @transform_3, window_bounds = array<i64: 4, 2, 64>}, {pipeline_mode = #tpu.pipeline_mode<synchronous>, transform_indices = @transform_4, window_bounds = array<i64: 3, 32>}, {pipeline_mode = #tpu.pipeline_mode<synchronous>, transform_indices = @transform_5, window_bounds = array<i64: 33, 4>}, {transform_indices = @transform_6, window_bounds = array<i64: 16, 4>}, {transform_indices = @transform_7, window_bounds = array<i64: 16, 1>}]} {
    %c0 = arith.constant 0 : index
    %c0_0 = arith.constant 0 : index
    %0 = vector.load %arg1[%c0, %c0_0] : memref<16x4xf32, #tpu.memory_space<vmem>>, vector<16x4xf32>
    %c0_1 = arith.constant 0 : index
    %c0_2 = arith.constant 0 : index
    %1 = vector.load %arg2[%c0_1, %c0_2] : memref<16x1xf32, #tpu.memory_space<vmem>>, vector<16x1xf32>
    %2 = vector.extract_strided_slice %0 {offsets = [0, 0], sizes = [16, 2], strides = [1, 1]} : vector<16x4xf32> to vector<16x2xf32>
    %3 = vector.extract_strided_slice %0 {offsets = [0, 2], sizes = [16, 2], strides = [1, 1]} : vector<16x4xf32> to vector<16x2xf32>
    %4 = vector.shape_cast %1 : vector<16x1xf32> to vector<16x1xf32>
    %5 = vector.broadcast %4 : vector<16x1xf32> to vector<16x32xf32>
    %6 = tpu.iota {dimensions = array<i32: 0>} : vector<16x32xi32>
    %c-2_i32 = arith.constant -2 : i32
    %7 = vector.broadcast %c-2_i32 : i32 to vector<16x32xi32>
    %8 = arith.addi %6, %7 : vector<16x32xi32>
    %c0_i32 = arith.constant 0 : i32
    %9 = vector.broadcast %c0_i32 : i32 to vector<16x32xi32>
    %10 = arith.cmpi sge, %8, %9 : vector<16x32xi32>
    %c-2_i32_3 = arith.constant -2 : i32
    %11 = vector.broadcast %c-2_i32_3 : i32 to vector<16x32xi32>
    %12 = arith.addi %6, %11 : vector<16x32xi32>
    %c16_i32 = arith.constant 16 : i32
    %13 = vector.broadcast %c16_i32 : i32 to vector<16x32xi32>
    %14 = arith.cmpi slt, %12, %13 : vector<16x32xi32>
    %15 = arith.andi %10, %14 : vector<16x32xi1>
    %16 = arith.extui %15 : vector<16x32xi1> to vector<16x32xi32>
    %17 = arith.sitofp %16 : vector<16x32xi32> to vector<16x32xf32>
    %c-1_i32 = arith.constant -1 : i32
    %18 = vector.broadcast %c-1_i32 : i32 to vector<16x32xi32>
    %19 = arith.addi %6, %18 : vector<16x32xi32>
    %c0_i32_4 = arith.constant 0 : i32
    %20 = vector.broadcast %c0_i32_4 : i32 to vector<16x32xi32>
    %21 = arith.cmpi sge, %19, %20 : vector<16x32xi32>
    %c-1_i32_5 = arith.constant -1 : i32
    %22 = vector.broadcast %c-1_i32_5 : i32 to vector<16x32xi32>
    %23 = arith.addi %6, %22 : vector<16x32xi32>
    %c16_i32_6 = arith.constant 16 : i32
    %24 = vector.broadcast %c16_i32_6 : i32 to vector<16x32xi32>
    %25 = arith.cmpi slt, %23, %24 : vector<16x32xi32>
    %26 = arith.andi %21, %25 : vector<16x32xi1>
    %27 = arith.extui %26 : vector<16x32xi1> to vector<16x32xi32>
    %28 = arith.sitofp %27 : vector<16x32xi32> to vector<16x32xf32>
    %c1_i32 = arith.constant 1 : i32
    %29 = vector.broadcast %c1_i32 : i32 to vector<16x32xi32>
    %30 = arith.addi %6, %29 : vector<16x32xi32>
    %c0_i32_7 = arith.constant 0 : i32
    %31 = vector.broadcast %c0_i32_7 : i32 to vector<16x32xi32>
    %32 = arith.cmpi sge, %30, %31 : vector<16x32xi32>
    %c1_i32_8 = arith.constant 1 : i32
    %33 = vector.broadcast %c1_i32_8 : i32 to vector<16x32xi32>
    %34 = arith.addi %6, %33 : vector<16x32xi32>
    %c16_i32_9 = arith.constant 16 : i32
    %35 = vector.broadcast %c16_i32_9 : i32 to vector<16x32xi32>
    %36 = arith.cmpi slt, %34, %35 : vector<16x32xi32>
    %37 = arith.andi %32, %36 : vector<16x32xi1>
    %38 = arith.extui %37 : vector<16x32xi1> to vector<16x32xi32>
    %39 = arith.sitofp %38 : vector<16x32xi32> to vector<16x32xf32>
    %c2_i32 = arith.constant 2 : i32
    %40 = vector.broadcast %c2_i32 : i32 to vector<16x32xi32>
    %41 = arith.addi %6, %40 : vector<16x32xi32>
    %c0_i32_10 = arith.constant 0 : i32
    %42 = vector.broadcast %c0_i32_10 : i32 to vector<16x32xi32>
    %43 = arith.cmpi sge, %41, %42 : vector<16x32xi32>
    %c2_i32_11 = arith.constant 2 : i32
    %44 = vector.broadcast %c2_i32_11 : i32 to vector<16x32xi32>
    %45 = arith.addi %6, %44 : vector<16x32xi32>
    %c16_i32_12 = arith.constant 16 : i32
    %46 = vector.broadcast %c16_i32_12 : i32 to vector<16x32xi32>
    %47 = arith.cmpi slt, %45, %46 : vector<16x32xi32>
    %48 = arith.andi %43, %47 : vector<16x32xi1>
    %49 = arith.extui %48 : vector<16x32xi1> to vector<16x32xi32>
    %50 = arith.sitofp %49 : vector<16x32xi32> to vector<16x32xf32>
    %c2 = arith.constant 2 : index
    %c0_13 = arith.constant 0 : index
    %51 = vector.load %arg5[%c2, %c0_13] : memref<3x32xf32, #tpu.memory_space<vmem>>, vector<1x32xf32>
    %52 = vector.shape_cast %51 : vector<1x32xf32> to vector<1x32xf32>
    %53 = vector.broadcast %52 : vector<1x32xf32> to vector<16x32xf32>
    %54 = vector.extract_strided_slice %2 {offsets = [0, 0], sizes = [16, 1], strides = [1, 1]} : vector<16x2xf32> to vector<16x1xf32>
    %c0_14 = arith.constant 0 : index
    %c0_15 = arith.constant 0 : index
    %55 = vector.load %arg5[%c0_14, %c0_15] : memref<3x32xf32, #tpu.memory_space<vmem>>, vector<1x32xf32>
    %56 = vector.broadcast %54 : vector<16x1xf32> to vector<16x32xf32>
    %57 = vector.broadcast %55 : vector<1x32xf32> to vector<16x32xf32>
    %58 = arith.mulf %56, %57 : vector<16x32xf32>
    %59 = arith.addf %53, %58 : vector<16x32xf32>
    %60 = vector.extract_strided_slice %2 {offsets = [0, 1], sizes = [16, 1], strides = [1, 1]} : vector<16x2xf32> to vector<16x1xf32>
    %c1 = arith.constant 1 : index
    %c0_16 = arith.constant 0 : index
    %61 = vector.load %arg5[%c1, %c0_16] : memref<3x32xf32, #tpu.memory_space<vmem>>, vector<1x32xf32>
    %62 = vector.broadcast %60 : vector<16x1xf32> to vector<16x32xf32>
    %63 = vector.broadcast %61 : vector<1x32xf32> to vector<16x32xf32>
    %64 = arith.mulf %62, %63 : vector<16x32xf32>
    %65 = arith.addf %59, %64 : vector<16x32xf32>
    %66 = arith.mulf %65, %5 : vector<16x32xf32>
    %67 = arith.truncf %66 : vector<16x32xf32> to vector<16x32xbf16>
    %c0_17 = arith.constant 0 : index
    %c0_18 = arith.constant 0 : index
    %c0_19 = arith.constant 0 : index
    %68 = vector.load %arg4[%c0_17, %c0_18, %c0_19] : memref<4x2x64xf32, #tpu.memory_space<vmem>>, vector<1x1x64xf32>
    %69 = vector.shape_cast %68 : vector<1x1x64xf32> to vector<1x64xf32>
    %70 = vector.shape_cast %69 : vector<1x64xf32> to vector<1x64xf32>
    %71 = vector.broadcast %70 : vector<1x64xf32> to vector<16x64xf32>
    %c2_i32_20 = arith.constant 2 : i32
    %72 = tpu.dynamic_rotate %66 by %c2_i32_20 dim 0 : vector<16x32xf32>, i32 -> vector<16x32xf32>
    %73 = arith.mulf %72, %17 : vector<16x32xf32>
    %74 = arith.truncf %73 : vector<16x32xf32> to vector<16x32xbf16>
    %c0_21 = arith.constant 0 : index
    %c0_22 = arith.constant 0 : index
    %c0_23 = arith.constant 0 : index
    %c0_24 = arith.constant 0 : index
    %75 = vector.load %arg3[%c0_21, %c0_22, %c0_23, %c0_24] : memref<4x6x32x64xbf16, #tpu.memory_space<vmem>>, vector<1x1x32x64xbf16>
    %76 = vector.shape_cast %75 : vector<1x1x32x64xbf16> to vector<32x64xbf16>
    %cst = arith.constant dense<0.000000e+00> : vector<16x64xf32>
    %77 = tpu.matmul %74, %76, %cst {dimension_numbers = #tpu.dot_dimension_numbers<[1], [0], [0], [1], [0, 0, 1, 1], [], []>} : vector<16x32xbf16>, vector<32x64xbf16>, vector<16x64xf32> -> vector<16x64xf32>
    %78 = arith.addf %71, %77 : vector<16x64xf32>
    %c1_i32_25 = arith.constant 1 : i32
    %79 = tpu.dynamic_rotate %66 by %c1_i32_25 dim 0 : vector<16x32xf32>, i32 -> vector<16x32xf32>
    %80 = arith.mulf %79, %28 : vector<16x32xf32>
    %81 = arith.truncf %80 : vector<16x32xf32> to vector<16x32xbf16>
    %c0_26 = arith.constant 0 : index
    %c1_27 = arith.constant 1 : index
    %c0_28 = arith.constant 0 : index
    %c0_29 = arith.constant 0 : index
    %82 = vector.load %arg3[%c0_26, %c1_27, %c0_28, %c0_29] : memref<4x6x32x64xbf16, #tpu.memory_space<vmem>>, vector<1x1x32x64xbf16>
    %83 = vector.shape_cast %82 : vector<1x1x32x64xbf16> to vector<32x64xbf16>
    %cst_30 = arith.constant dense<0.000000e+00> : vector<16x64xf32>
    %84 = tpu.matmul %81, %83, %cst_30 {dimension_numbers = #tpu.dot_dimension_numbers<[1], [0], [0], [1], [0, 0, 1, 1], [], []>} : vector<16x32xbf16>, vector<32x64xbf16>, vector<16x64xf32> -> vector<16x64xf32>
    %85 = arith.addf %78, %84 : vector<16x64xf32>
    %c0_31 = arith.constant 0 : index
    %c2_32 = arith.constant 2 : index
    %c0_33 = arith.constant 0 : index
    %c0_34 = arith.constant 0 : index
    %86 = vector.load %arg3[%c0_31, %c2_32, %c0_33, %c0_34] : memref<4x6x32x64xbf16, #tpu.memory_space<vmem>>, vector<1x1x32x64xbf16>
    %87 = vector.shape_cast %86 : vector<1x1x32x64xbf16> to vector<32x64xbf16>
    %cst_35 = arith.constant dense<0.000000e+00> : vector<16x64xf32>
    %88 = tpu.matmul %67, %87, %cst_35 {dimension_numbers = #tpu.dot_dimension_numbers<[1], [0], [0], [1], [0, 0, 1, 1], [], []>} : vector<16x32xbf16>, vector<32x64xbf16>, vector<16x64xf32> -> vector<16x64xf32>
    %89 = arith.addf %85, %88 : vector<16x64xf32>
    %c15_i32 = arith.constant 15 : i32
    %90 = tpu.dynamic_rotate %66 by %c15_i32 dim 0 : vector<16x32xf32>, i32 -> vector<16x32xf32>
    %91 = arith.mulf %90, %39 : vector<16x32xf32>
    %92 = arith.truncf %91 : vector<16x32xf32> to vector<16x32xbf16>
    %c0_36 = arith.constant 0 : index
    %c3 = arith.constant 3 : index
    %c0_37 = arith.constant 0 : index
    %c0_38 = arith.constant 0 : index
    %93 = vector.load %arg3[%c0_36, %c3, %c0_37, %c0_38] : memref<4x6x32x64xbf16, #tpu.memory_space<vmem>>, vector<1x1x32x64xbf16>
    %94 = vector.shape_cast %93 : vector<1x1x32x64xbf16> to vector<32x64xbf16>
    %cst_39 = arith.constant dense<0.000000e+00> : vector<16x64xf32>
    %95 = tpu.matmul %92, %94, %cst_39 {dimension_numbers = #tpu.dot_dimension_numbers<[1], [0], [0], [1], [0, 0, 1, 1], [], []>} : vector<16x32xbf16>, vector<32x64xbf16>, vector<16x64xf32> -> vector<16x64xf32>
    %96 = arith.addf %89, %95 : vector<16x64xf32>
    %c14_i32 = arith.constant 14 : i32
    %97 = tpu.dynamic_rotate %66 by %c14_i32 dim 0 : vector<16x32xf32>, i32 -> vector<16x32xf32>
    %98 = arith.mulf %97, %50 : vector<16x32xf32>
    %99 = arith.truncf %98 : vector<16x32xf32> to vector<16x32xbf16>
    %c0_40 = arith.constant 0 : index
    %c4 = arith.constant 4 : index
    %c0_41 = arith.constant 0 : index
    %c0_42 = arith.constant 0 : index
    %100 = vector.load %arg3[%c0_40, %c4, %c0_41, %c0_42] : memref<4x6x32x64xbf16, #tpu.memory_space<vmem>>, vector<1x1x32x64xbf16>
    %101 = vector.shape_cast %100 : vector<1x1x32x64xbf16> to vector<32x64xbf16>
    %cst_43 = arith.constant dense<0.000000e+00> : vector<16x64xf32>
    %102 = tpu.matmul %99, %101, %cst_43 {dimension_numbers = #tpu.dot_dimension_numbers<[1], [0], [0], [1], [0, 0, 1, 1], [], []>} : vector<16x32xbf16>, vector<32x64xbf16>, vector<16x64xf32> -> vector<16x64xf32>
    %103 = arith.addf %96, %102 : vector<16x64xf32>
    %104 = vector.extract_strided_slice %103 {offsets = [0, 0], sizes = [16, 32], strides = [1, 1]} : vector<16x64xf32> to vector<16x32xf32>
    %105 = math.tanh %104 : vector<16x32xf32>
    %106 = vector.extract_strided_slice %103 {offsets = [0, 32], sizes = [16, 32], strides = [1, 1]} : vector<16x64xf32> to vector<16x32xf32>
    %107 = arith.negf %106 : vector<16x32xf32>
    %108 = math.exp %107 : vector<16x32xf32>
    %cst_44 = arith.constant 1.000000e+00 : f32
    %109 = vector.broadcast %cst_44 : f32 to vector<16x32xf32>
    %110 = arith.addf %109, %108 : vector<16x32xf32>
    %111 = arith.divf %109, %110 : vector<16x32xf32>
    %112 = arith.mulf %105, %111 : vector<16x32xf32>
    %113 = arith.truncf %112 : vector<16x32xf32> to vector<16x32xbf16>
    %c0_45 = arith.constant 0 : index
    %c5 = arith.constant 5 : index
    %c0_46 = arith.constant 0 : index
    %c0_47 = arith.constant 0 : index
    %114 = vector.load %arg3[%c0_45, %c5, %c0_46, %c0_47] : memref<4x6x32x64xbf16, #tpu.memory_space<vmem>>, vector<1x1x32x64xbf16>
    %115 = vector.shape_cast %114 : vector<1x1x32x64xbf16> to vector<32x64xbf16>
    %cst_48 = arith.constant dense<0.000000e+00> : vector<16x64xf32>
    %116 = tpu.matmul %113, %115, %cst_48 {dimension_numbers = #tpu.dot_dimension_numbers<[1], [0], [0], [1], [0, 0, 1, 1], [], []>} : vector<16x32xbf16>, vector<32x64xbf16>, vector<16x64xf32> -> vector<16x64xf32>
    %c0_49 = arith.constant 0 : index
    %c1_50 = arith.constant 1 : index
    %c0_51 = arith.constant 0 : index
    %117 = vector.load %arg4[%c0_49, %c1_50, %c0_51] : memref<4x2x64xf32, #tpu.memory_space<vmem>>, vector<1x1x64xf32>
    %118 = vector.shape_cast %117 : vector<1x1x64xf32> to vector<1x64xf32>
    %119 = vector.broadcast %118 : vector<1x64xf32> to vector<16x64xf32>
    %120 = arith.addf %116, %119 : vector<16x64xf32>
    %121 = vector.extract_strided_slice %120 {offsets = [0, 0], sizes = [16, 32], strides = [1, 1]} : vector<16x64xf32> to vector<16x32xf32>
    %122 = arith.addf %66, %121 : vector<16x32xf32>
    %123 = arith.mulf %122, %5 : vector<16x32xf32>
    %124 = vector.extract_strided_slice %120 {offsets = [0, 32], sizes = [16, 32], strides = [1, 1]} : vector<16x64xf32> to vector<16x32xf32>
    %125 = arith.truncf %123 : vector<16x32xf32> to vector<16x32xbf16>
    %c1_52 = arith.constant 1 : index
    %c0_53 = arith.constant 0 : index
    %c0_54 = arith.constant 0 : index
    %126 = vector.load %arg4[%c1_52, %c0_53, %c0_54] : memref<4x2x64xf32, #tpu.memory_space<vmem>>, vector<1x1x64xf32>
    %127 = vector.shape_cast %126 : vector<1x1x64xf32> to vector<1x64xf32>
    %128 = vector.shape_cast %127 : vector<1x64xf32> to vector<1x64xf32>
    %129 = vector.broadcast %128 : vector<1x64xf32> to vector<16x64xf32>
    %c2_i32_55 = arith.constant 2 : i32
    %130 = tpu.dynamic_rotate %123 by %c2_i32_55 dim 0 : vector<16x32xf32>, i32 -> vector<16x32xf32>
    %131 = arith.mulf %130, %17 : vector<16x32xf32>
    %132 = arith.truncf %131 : vector<16x32xf32> to vector<16x32xbf16>
    %c1_56 = arith.constant 1 : index
    %c0_57 = arith.constant 0 : index
    %c0_58 = arith.constant 0 : index
    %c0_59 = arith.constant 0 : index
    %133 = vector.load %arg3[%c1_56, %c0_57, %c0_58, %c0_59] : memref<4x6x32x64xbf16, #tpu.memory_space<vmem>>, vector<1x1x32x64xbf16>
    %134 = vector.shape_cast %133 : vector<1x1x32x64xbf16> to vector<32x64xbf16>
    %cst_60 = arith.constant dense<0.000000e+00> : vector<16x64xf32>
    %135 = tpu.matmul %132, %134, %cst_60 {dimension_numbers = #tpu.dot_dimension_numbers<[1], [0], [0], [1], [0, 0, 1, 1], [], []>} : vector<16x32xbf16>, vector<32x64xbf16>, vector<16x64xf32> -> vector<16x64xf32>
    %136 = arith.addf %129, %135 : vector<16x64xf32>
    %c1_i32_61 = arith.constant 1 : i32
    %137 = tpu.dynamic_rotate %123 by %c1_i32_61 dim 0 : vector<16x32xf32>, i32 -> vector<16x32xf32>
    %138 = arith.mulf %137, %28 : vector<16x32xf32>
    %139 = arith.truncf %138 : vector<16x32xf32> to vector<16x32xbf16>
    %c1_62 = arith.constant 1 : index
    %c1_63 = arith.constant 1 : index
    %c0_64 = arith.constant 0 : index
    %c0_65 = arith.constant 0 : index
    %140 = vector.load %arg3[%c1_62, %c1_63, %c0_64, %c0_65] : memref<4x6x32x64xbf16, #tpu.memory_space<vmem>>, vector<1x1x32x64xbf16>
    %141 = vector.shape_cast %140 : vector<1x1x32x64xbf16> to vector<32x64xbf16>
    %cst_66 = arith.constant dense<0.000000e+00> : vector<16x64xf32>
    %142 = tpu.matmul %139, %141, %cst_66 {dimension_numbers = #tpu.dot_dimension_numbers<[1], [0], [0], [1], [0, 0, 1, 1], [], []>} : vector<16x32xbf16>, vector<32x64xbf16>, vector<16x64xf32> -> vector<16x64xf32>
    %143 = arith.addf %136, %142 : vector<16x64xf32>
    %c1_67 = arith.constant 1 : index
    %c2_68 = arith.constant 2 : index
    %c0_69 = arith.constant 0 : index
    %c0_70 = arith.constant 0 : index
    %144 = vector.load %arg3[%c1_67, %c2_68, %c0_69, %c0_70] : memref<4x6x32x64xbf16, #tpu.memory_space<vmem>>, vector<1x1x32x64xbf16>
    %145 = vector.shape_cast %144 : vector<1x1x32x64xbf16> to vector<32x64xbf16>
    %cst_71 = arith.constant dense<0.000000e+00> : vector<16x64xf32>
    %146 = tpu.matmul %125, %145, %cst_71 {dimension_numbers = #tpu.dot_dimension_numbers<[1], [0], [0], [1], [0, 0, 1, 1], [], []>} : vector<16x32xbf16>, vector<32x64xbf16>, vector<16x64xf32> -> vector<16x64xf32>
    %147 = arith.addf %143, %146 : vector<16x64xf32>
    %c15_i32_72 = arith.constant 15 : i32
    %148 = tpu.dynamic_rotate %123 by %c15_i32_72 dim 0 : vector<16x32xf32>, i32 -> vector<16x32xf32>
    %149 = arith.mulf %148, %39 : vector<16x32xf32>
    %150 = arith.truncf %149 : vector<16x32xf32> to vector<16x32xbf16>
    %c1_73 = arith.constant 1 : index
    %c3_74 = arith.constant 3 : index
    %c0_75 = arith.constant 0 : index
    %c0_76 = arith.constant 0 : index
    %151 = vector.load %arg3[%c1_73, %c3_74, %c0_75, %c0_76] : memref<4x6x32x64xbf16, #tpu.memory_space<vmem>>, vector<1x1x32x64xbf16>
    %152 = vector.shape_cast %151 : vector<1x1x32x64xbf16> to vector<32x64xbf16>
    %cst_77 = arith.constant dense<0.000000e+00> : vector<16x64xf32>
    %153 = tpu.matmul %150, %152, %cst_77 {dimension_numbers = #tpu.dot_dimension_numbers<[1], [0], [0], [1], [0, 0, 1, 1], [], []>} : vector<16x32xbf16>, vector<32x64xbf16>, vector<16x64xf32> -> vector<16x64xf32>
    %154 = arith.addf %147, %153 : vector<16x64xf32>
    %c14_i32_78 = arith.constant 14 : i32
    %155 = tpu.dynamic_rotate %123 by %c14_i32_78 dim 0 : vector<16x32xf32>, i32 -> vector<16x32xf32>
    %156 = arith.mulf %155, %50 : vector<16x32xf32>
    %157 = arith.truncf %156 : vector<16x32xf32> to vector<16x32xbf16>
    %c1_79 = arith.constant 1 : index
    %c4_80 = arith.constant 4 : index
    %c0_81 = arith.constant 0 : index
    %c0_82 = arith.constant 0 : index
    %158 = vector.load %arg3[%c1_79, %c4_80, %c0_81, %c0_82] : memref<4x6x32x64xbf16, #tpu.memory_space<vmem>>, vector<1x1x32x64xbf16>
    %159 = vector.shape_cast %158 : vector<1x1x32x64xbf16> to vector<32x64xbf16>
    %cst_83 = arith.constant dense<0.000000e+00> : vector<16x64xf32>
    %160 = tpu.matmul %157, %159, %cst_83 {dimension_numbers = #tpu.dot_dimension_numbers<[1], [0], [0], [1], [0, 0, 1, 1], [], []>} : vector<16x32xbf16>, vector<32x64xbf16>, vector<16x64xf32> -> vector<16x64xf32>
    %161 = arith.addf %154, %160 : vector<16x64xf32>
    %162 = vector.extract_strided_slice %161 {offsets = [0, 0], sizes = [16, 32], strides = [1, 1]} : vector<16x64xf32> to vector<16x32xf32>
    %163 = math.tanh %162 : vector<16x32xf32>
    %164 = vector.extract_strided_slice %161 {offsets = [0, 32], sizes = [16, 32], strides = [1, 1]} : vector<16x64xf32> to vector<16x32xf32>
    %165 = arith.negf %164 : vector<16x32xf32>
    %166 = math.exp %165 : vector<16x32xf32>
    %cst_84 = arith.constant 1.000000e+00 : f32
    %167 = vector.broadcast %cst_84 : f32 to vector<16x32xf32>
    %168 = arith.addf %167, %166 : vector<16x32xf32>
    %169 = arith.divf %167, %168 : vector<16x32xf32>
    %170 = arith.mulf %163, %169 : vector<16x32xf32>
    %171 = arith.truncf %170 : vector<16x32xf32> to vector<16x32xbf16>
    %c1_85 = arith.constant 1 : index
    %c5_86 = arith.constant 5 : index
    %c0_87 = arith.constant 0 : index
    %c0_88 = arith.constant 0 : index
    %172 = vector.load %arg3[%c1_85, %c5_86, %c0_87, %c0_88] : memref<4x6x32x64xbf16, #tpu.memory_space<vmem>>, vector<1x1x32x64xbf16>
    %173 = vector.shape_cast %172 : vector<1x1x32x64xbf16> to vector<32x64xbf16>
    %cst_89 = arith.constant dense<0.000000e+00> : vector<16x64xf32>
    %174 = tpu.matmul %171, %173, %cst_89 {dimension_numbers = #tpu.dot_dimension_numbers<[1], [0], [0], [1], [0, 0, 1, 1], [], []>} : vector<16x32xbf16>, vector<32x64xbf16>, vector<16x64xf32> -> vector<16x64xf32>
    %c1_90 = arith.constant 1 : index
    %c1_91 = arith.constant 1 : index
    %c0_92 = arith.constant 0 : index
    %175 = vector.load %arg4[%c1_90, %c1_91, %c0_92] : memref<4x2x64xf32, #tpu.memory_space<vmem>>, vector<1x1x64xf32>
    %176 = vector.shape_cast %175 : vector<1x1x64xf32> to vector<1x64xf32>
    %177 = vector.broadcast %176 : vector<1x64xf32> to vector<16x64xf32>
    %178 = arith.addf %174, %177 : vector<16x64xf32>
    %179 = vector.extract_strided_slice %178 {offsets = [0, 0], sizes = [16, 32], strides = [1, 1]} : vector<16x64xf32> to vector<16x32xf32>
    %180 = arith.addf %123, %179 : vector<16x32xf32>
    %181 = arith.mulf %180, %5 : vector<16x32xf32>
    %182 = vector.extract_strided_slice %178 {offsets = [0, 32], sizes = [16, 32], strides = [1, 1]} : vector<16x64xf32> to vector<16x32xf32>
    %183 = arith.addf %124, %182 : vector<16x32xf32>
    %184 = arith.truncf %181 : vector<16x32xf32> to vector<16x32xbf16>
    %c2_93 = arith.constant 2 : index
    %c0_94 = arith.constant 0 : index
    %c0_95 = arith.constant 0 : index
    %185 = vector.load %arg4[%c2_93, %c0_94, %c0_95] : memref<4x2x64xf32, #tpu.memory_space<vmem>>, vector<1x1x64xf32>
    %186 = vector.shape_cast %185 : vector<1x1x64xf32> to vector<1x64xf32>
    %187 = vector.shape_cast %186 : vector<1x64xf32> to vector<1x64xf32>
    %188 = vector.broadcast %187 : vector<1x64xf32> to vector<16x64xf32>
    %c2_i32_96 = arith.constant 2 : i32
    %189 = tpu.dynamic_rotate %181 by %c2_i32_96 dim 0 : vector<16x32xf32>, i32 -> vector<16x32xf32>
    %190 = arith.mulf %189, %17 : vector<16x32xf32>
    %191 = arith.truncf %190 : vector<16x32xf32> to vector<16x32xbf16>
    %c2_97 = arith.constant 2 : index
    %c0_98 = arith.constant 0 : index
    %c0_99 = arith.constant 0 : index
    %c0_100 = arith.constant 0 : index
    %192 = vector.load %arg3[%c2_97, %c0_98, %c0_99, %c0_100] : memref<4x6x32x64xbf16, #tpu.memory_space<vmem>>, vector<1x1x32x64xbf16>
    %193 = vector.shape_cast %192 : vector<1x1x32x64xbf16> to vector<32x64xbf16>
    %cst_101 = arith.constant dense<0.000000e+00> : vector<16x64xf32>
    %194 = tpu.matmul %191, %193, %cst_101 {dimension_numbers = #tpu.dot_dimension_numbers<[1], [0], [0], [1], [0, 0, 1, 1], [], []>} : vector<16x32xbf16>, vector<32x64xbf16>, vector<16x64xf32> -> vector<16x64xf32>
    %195 = arith.addf %188, %194 : vector<16x64xf32>
    %c1_i32_102 = arith.constant 1 : i32
    %196 = tpu.dynamic_rotate %181 by %c1_i32_102 dim 0 : vector<16x32xf32>, i32 -> vector<16x32xf32>
    %197 = arith.mulf %196, %28 : vector<16x32xf32>
    %198 = arith.truncf %197 : vector<16x32xf32> to vector<16x32xbf16>
    %c2_103 = arith.constant 2 : index
    %c1_104 = arith.constant 1 : index
    %c0_105 = arith.constant 0 : index
    %c0_106 = arith.constant 0 : index
    %199 = vector.load %arg3[%c2_103, %c1_104, %c0_105, %c0_106] : memref<4x6x32x64xbf16, #tpu.memory_space<vmem>>, vector<1x1x32x64xbf16>
    %200 = vector.shape_cast %199 : vector<1x1x32x64xbf16> to vector<32x64xbf16>
    %cst_107 = arith.constant dense<0.000000e+00> : vector<16x64xf32>
    %201 = tpu.matmul %198, %200, %cst_107 {dimension_numbers = #tpu.dot_dimension_numbers<[1], [0], [0], [1], [0, 0, 1, 1], [], []>} : vector<16x32xbf16>, vector<32x64xbf16>, vector<16x64xf32> -> vector<16x64xf32>
    %202 = arith.addf %195, %201 : vector<16x64xf32>
    %c2_108 = arith.constant 2 : index
    %c2_109 = arith.constant 2 : index
    %c0_110 = arith.constant 0 : index
    %c0_111 = arith.constant 0 : index
    %203 = vector.load %arg3[%c2_108, %c2_109, %c0_110, %c0_111] : memref<4x6x32x64xbf16, #tpu.memory_space<vmem>>, vector<1x1x32x64xbf16>
    %204 = vector.shape_cast %203 : vector<1x1x32x64xbf16> to vector<32x64xbf16>
    %cst_112 = arith.constant dense<0.000000e+00> : vector<16x64xf32>
    %205 = tpu.matmul %184, %204, %cst_112 {dimension_numbers = #tpu.dot_dimension_numbers<[1], [0], [0], [1], [0, 0, 1, 1], [], []>} : vector<16x32xbf16>, vector<32x64xbf16>, vector<16x64xf32> -> vector<16x64xf32>
    %206 = arith.addf %202, %205 : vector<16x64xf32>
    %c15_i32_113 = arith.constant 15 : i32
    %207 = tpu.dynamic_rotate %181 by %c15_i32_113 dim 0 : vector<16x32xf32>, i32 -> vector<16x32xf32>
    %208 = arith.mulf %207, %39 : vector<16x32xf32>
    %209 = arith.truncf %208 : vector<16x32xf32> to vector<16x32xbf16>
    %c2_114 = arith.constant 2 : index
    %c3_115 = arith.constant 3 : index
    %c0_116 = arith.constant 0 : index
    %c0_117 = arith.constant 0 : index
    %210 = vector.load %arg3[%c2_114, %c3_115, %c0_116, %c0_117] : memref<4x6x32x64xbf16, #tpu.memory_space<vmem>>, vector<1x1x32x64xbf16>
    %211 = vector.shape_cast %210 : vector<1x1x32x64xbf16> to vector<32x64xbf16>
    %cst_118 = arith.constant dense<0.000000e+00> : vector<16x64xf32>
    %212 = tpu.matmul %209, %211, %cst_118 {dimension_numbers = #tpu.dot_dimension_numbers<[1], [0], [0], [1], [0, 0, 1, 1], [], []>} : vector<16x32xbf16>, vector<32x64xbf16>, vector<16x64xf32> -> vector<16x64xf32>
    %213 = arith.addf %206, %212 : vector<16x64xf32>
    %c14_i32_119 = arith.constant 14 : i32
    %214 = tpu.dynamic_rotate %181 by %c14_i32_119 dim 0 : vector<16x32xf32>, i32 -> vector<16x32xf32>
    %215 = arith.mulf %214, %50 : vector<16x32xf32>
    %216 = arith.truncf %215 : vector<16x32xf32> to vector<16x32xbf16>
    %c2_120 = arith.constant 2 : index
    %c4_121 = arith.constant 4 : index
    %c0_122 = arith.constant 0 : index
    %c0_123 = arith.constant 0 : index
    %217 = vector.load %arg3[%c2_120, %c4_121, %c0_122, %c0_123] : memref<4x6x32x64xbf16, #tpu.memory_space<vmem>>, vector<1x1x32x64xbf16>
    %218 = vector.shape_cast %217 : vector<1x1x32x64xbf16> to vector<32x64xbf16>
    %cst_124 = arith.constant dense<0.000000e+00> : vector<16x64xf32>
    %219 = tpu.matmul %216, %218, %cst_124 {dimension_numbers = #tpu.dot_dimension_numbers<[1], [0], [0], [1], [0, 0, 1, 1], [], []>} : vector<16x32xbf16>, vector<32x64xbf16>, vector<16x64xf32> -> vector<16x64xf32>
    %220 = arith.addf %213, %219 : vector<16x64xf32>
    %221 = vector.extract_strided_slice %220 {offsets = [0, 0], sizes = [16, 32], strides = [1, 1]} : vector<16x64xf32> to vector<16x32xf32>
    %222 = math.tanh %221 : vector<16x32xf32>
    %223 = vector.extract_strided_slice %220 {offsets = [0, 32], sizes = [16, 32], strides = [1, 1]} : vector<16x64xf32> to vector<16x32xf32>
    %224 = arith.negf %223 : vector<16x32xf32>
    %225 = math.exp %224 : vector<16x32xf32>
    %cst_125 = arith.constant 1.000000e+00 : f32
    %226 = vector.broadcast %cst_125 : f32 to vector<16x32xf32>
    %227 = arith.addf %226, %225 : vector<16x32xf32>
    %228 = arith.divf %226, %227 : vector<16x32xf32>
    %229 = arith.mulf %222, %228 : vector<16x32xf32>
    %230 = arith.truncf %229 : vector<16x32xf32> to vector<16x32xbf16>
    %c2_126 = arith.constant 2 : index
    %c5_127 = arith.constant 5 : index
    %c0_128 = arith.constant 0 : index
    %c0_129 = arith.constant 0 : index
    %231 = vector.load %arg3[%c2_126, %c5_127, %c0_128, %c0_129] : memref<4x6x32x64xbf16, #tpu.memory_space<vmem>>, vector<1x1x32x64xbf16>
    %232 = vector.shape_cast %231 : vector<1x1x32x64xbf16> to vector<32x64xbf16>
    %cst_130 = arith.constant dense<0.000000e+00> : vector<16x64xf32>
    %233 = tpu.matmul %230, %232, %cst_130 {dimension_numbers = #tpu.dot_dimension_numbers<[1], [0], [0], [1], [0, 0, 1, 1], [], []>} : vector<16x32xbf16>, vector<32x64xbf16>, vector<16x64xf32> -> vector<16x64xf32>
    %c2_131 = arith.constant 2 : index
    %c1_132 = arith.constant 1 : index
    %c0_133 = arith.constant 0 : index
    %234 = vector.load %arg4[%c2_131, %c1_132, %c0_133] : memref<4x2x64xf32, #tpu.memory_space<vmem>>, vector<1x1x64xf32>
    %235 = vector.shape_cast %234 : vector<1x1x64xf32> to vector<1x64xf32>
    %236 = vector.broadcast %235 : vector<1x64xf32> to vector<16x64xf32>
    %237 = arith.addf %233, %236 : vector<16x64xf32>
    %238 = vector.extract_strided_slice %237 {offsets = [0, 0], sizes = [16, 32], strides = [1, 1]} : vector<16x64xf32> to vector<16x32xf32>
    %239 = arith.addf %181, %238 : vector<16x32xf32>
    %240 = arith.mulf %239, %5 : vector<16x32xf32>
    %241 = vector.extract_strided_slice %237 {offsets = [0, 32], sizes = [16, 32], strides = [1, 1]} : vector<16x64xf32> to vector<16x32xf32>
    %242 = arith.addf %183, %241 : vector<16x32xf32>
    %243 = arith.truncf %240 : vector<16x32xf32> to vector<16x32xbf16>
    %c3_134 = arith.constant 3 : index
    %c0_135 = arith.constant 0 : index
    %c0_136 = arith.constant 0 : index
    %244 = vector.load %arg4[%c3_134, %c0_135, %c0_136] : memref<4x2x64xf32, #tpu.memory_space<vmem>>, vector<1x1x64xf32>
    %245 = vector.shape_cast %244 : vector<1x1x64xf32> to vector<1x64xf32>
    %246 = vector.shape_cast %245 : vector<1x64xf32> to vector<1x64xf32>
    %247 = vector.broadcast %246 : vector<1x64xf32> to vector<16x64xf32>
    %c2_i32_137 = arith.constant 2 : i32
    %248 = tpu.dynamic_rotate %240 by %c2_i32_137 dim 0 : vector<16x32xf32>, i32 -> vector<16x32xf32>
    %249 = arith.mulf %248, %17 : vector<16x32xf32>
    %250 = arith.truncf %249 : vector<16x32xf32> to vector<16x32xbf16>
    %c3_138 = arith.constant 3 : index
    %c0_139 = arith.constant 0 : index
    %c0_140 = arith.constant 0 : index
    %c0_141 = arith.constant 0 : index
    %251 = vector.load %arg3[%c3_138, %c0_139, %c0_140, %c0_141] : memref<4x6x32x64xbf16, #tpu.memory_space<vmem>>, vector<1x1x32x64xbf16>
    %252 = vector.shape_cast %251 : vector<1x1x32x64xbf16> to vector<32x64xbf16>
    %cst_142 = arith.constant dense<0.000000e+00> : vector<16x64xf32>
    %253 = tpu.matmul %250, %252, %cst_142 {dimension_numbers = #tpu.dot_dimension_numbers<[1], [0], [0], [1], [0, 0, 1, 1], [], []>} : vector<16x32xbf16>, vector<32x64xbf16>, vector<16x64xf32> -> vector<16x64xf32>
    %254 = arith.addf %247, %253 : vector<16x64xf32>
    %c1_i32_143 = arith.constant 1 : i32
    %255 = tpu.dynamic_rotate %240 by %c1_i32_143 dim 0 : vector<16x32xf32>, i32 -> vector<16x32xf32>
    %256 = arith.mulf %255, %28 : vector<16x32xf32>
    %257 = arith.truncf %256 : vector<16x32xf32> to vector<16x32xbf16>
    %c3_144 = arith.constant 3 : index
    %c1_145 = arith.constant 1 : index
    %c0_146 = arith.constant 0 : index
    %c0_147 = arith.constant 0 : index
    %258 = vector.load %arg3[%c3_144, %c1_145, %c0_146, %c0_147] : memref<4x6x32x64xbf16, #tpu.memory_space<vmem>>, vector<1x1x32x64xbf16>
    %259 = vector.shape_cast %258 : vector<1x1x32x64xbf16> to vector<32x64xbf16>
    %cst_148 = arith.constant dense<0.000000e+00> : vector<16x64xf32>
    %260 = tpu.matmul %257, %259, %cst_148 {dimension_numbers = #tpu.dot_dimension_numbers<[1], [0], [0], [1], [0, 0, 1, 1], [], []>} : vector<16x32xbf16>, vector<32x64xbf16>, vector<16x64xf32> -> vector<16x64xf32>
    %261 = arith.addf %254, %260 : vector<16x64xf32>
    %c3_149 = arith.constant 3 : index
    %c2_150 = arith.constant 2 : index
    %c0_151 = arith.constant 0 : index
    %c0_152 = arith.constant 0 : index
    %262 = vector.load %arg3[%c3_149, %c2_150, %c0_151, %c0_152] : memref<4x6x32x64xbf16, #tpu.memory_space<vmem>>, vector<1x1x32x64xbf16>
    %263 = vector.shape_cast %262 : vector<1x1x32x64xbf16> to vector<32x64xbf16>
    %cst_153 = arith.constant dense<0.000000e+00> : vector<16x64xf32>
    %264 = tpu.matmul %243, %263, %cst_153 {dimension_numbers = #tpu.dot_dimension_numbers<[1], [0], [0], [1], [0, 0, 1, 1], [], []>} : vector<16x32xbf16>, vector<32x64xbf16>, vector<16x64xf32> -> vector<16x64xf32>
    %265 = arith.addf %261, %264 : vector<16x64xf32>
    %c15_i32_154 = arith.constant 15 : i32
    %266 = tpu.dynamic_rotate %240 by %c15_i32_154 dim 0 : vector<16x32xf32>, i32 -> vector<16x32xf32>
    %267 = arith.mulf %266, %39 : vector<16x32xf32>
    %268 = arith.truncf %267 : vector<16x32xf32> to vector<16x32xbf16>
    %c3_155 = arith.constant 3 : index
    %c3_156 = arith.constant 3 : index
    %c0_157 = arith.constant 0 : index
    %c0_158 = arith.constant 0 : index
    %269 = vector.load %arg3[%c3_155, %c3_156, %c0_157, %c0_158] : memref<4x6x32x64xbf16, #tpu.memory_space<vmem>>, vector<1x1x32x64xbf16>
    %270 = vector.shape_cast %269 : vector<1x1x32x64xbf16> to vector<32x64xbf16>
    %cst_159 = arith.constant dense<0.000000e+00> : vector<16x64xf32>
    %271 = tpu.matmul %268, %270, %cst_159 {dimension_numbers = #tpu.dot_dimension_numbers<[1], [0], [0], [1], [0, 0, 1, 1], [], []>} : vector<16x32xbf16>, vector<32x64xbf16>, vector<16x64xf32> -> vector<16x64xf32>
    %272 = arith.addf %265, %271 : vector<16x64xf32>
    %c14_i32_160 = arith.constant 14 : i32
    %273 = tpu.dynamic_rotate %240 by %c14_i32_160 dim 0 : vector<16x32xf32>, i32 -> vector<16x32xf32>
    %274 = arith.mulf %273, %50 : vector<16x32xf32>
    %275 = arith.truncf %274 : vector<16x32xf32> to vector<16x32xbf16>
    %c3_161 = arith.constant 3 : index
    %c4_162 = arith.constant 4 : index
    %c0_163 = arith.constant 0 : index
    %c0_164 = arith.constant 0 : index
    %276 = vector.load %arg3[%c3_161, %c4_162, %c0_163, %c0_164] : memref<4x6x32x64xbf16, #tpu.memory_space<vmem>>, vector<1x1x32x64xbf16>
    %277 = vector.shape_cast %276 : vector<1x1x32x64xbf16> to vector<32x64xbf16>
    %cst_165 = arith.constant dense<0.000000e+00> : vector<16x64xf32>
    %278 = tpu.matmul %275, %277, %cst_165 {dimension_numbers = #tpu.dot_dimension_numbers<[1], [0], [0], [1], [0, 0, 1, 1], [], []>} : vector<16x32xbf16>, vector<32x64xbf16>, vector<16x64xf32> -> vector<16x64xf32>
    %279 = arith.addf %272, %278 : vector<16x64xf32>
    %280 = vector.extract_strided_slice %279 {offsets = [0, 0], sizes = [16, 32], strides = [1, 1]} : vector<16x64xf32> to vector<16x32xf32>
    %281 = math.tanh %280 : vector<16x32xf32>
    %282 = vector.extract_strided_slice %279 {offsets = [0, 32], sizes = [16, 32], strides = [1, 1]} : vector<16x64xf32> to vector<16x32xf32>
    %283 = arith.negf %282 : vector<16x32xf32>
    %284 = math.exp %283 : vector<16x32xf32>
    %cst_166 = arith.constant 1.000000e+00 : f32
    %285 = vector.broadcast %cst_166 : f32 to vector<16x32xf32>
    %286 = arith.addf %285, %284 : vector<16x32xf32>
    %287 = arith.divf %285, %286 : vector<16x32xf32>
    %288 = arith.mulf %281, %287 : vector<16x32xf32>
    %289 = arith.truncf %288 : vector<16x32xf32> to vector<16x32xbf16>
    %c3_167 = arith.constant 3 : index
    %c5_168 = arith.constant 5 : index
    %c0_169 = arith.constant 0 : index
    %c0_170 = arith.constant 0 : index
    %290 = vector.load %arg3[%c3_167, %c5_168, %c0_169, %c0_170] : memref<4x6x32x64xbf16, #tpu.memory_space<vmem>>, vector<1x1x32x64xbf16>
    %291 = vector.shape_cast %290 : vector<1x1x32x64xbf16> to vector<32x64xbf16>
    %292 = vector.extract_strided_slice %291 {offsets = [0, 0], sizes = [32, 32], strides = [1, 1]} : vector<32x64xbf16> to vector<32x32xbf16>
    %cst_171 = arith.constant dense<0.000000e+00> : vector<16x32xf32>
    %293 = tpu.matmul %289, %292, %cst_171 {dimension_numbers = #tpu.dot_dimension_numbers<[1], [0], [0], [1], [0, 0, 1, 1], [], []>} : vector<16x32xbf16>, vector<32x32xbf16>, vector<16x32xf32> -> vector<16x32xf32>
    %c3_172 = arith.constant 3 : index
    %c1_173 = arith.constant 1 : index
    %c0_174 = arith.constant 0 : index
    %294 = vector.load %arg4[%c3_172, %c1_173, %c0_174] : memref<4x2x64xf32, #tpu.memory_space<vmem>>, vector<1x1x32xf32>
    %295 = vector.shape_cast %294 : vector<1x1x32xf32> to vector<1x32xf32>
    %296 = vector.broadcast %295 : vector<1x32xf32> to vector<16x32xf32>
    %297 = arith.addf %293, %296 : vector<16x32xf32>
    %298 = arith.addf %242, %297 : vector<16x32xf32>
    %299 = arith.mulf %298, %5 : vector<16x32xf32>
    %c0_175 = arith.constant 0 : index
    %c0_176 = arith.constant 0 : index
    %300 = vector.load %arg6[%c0_175, %c0_176] : memref<33x4xf32, #tpu.memory_space<vmem>>, vector<32x4xf32>
    %cst_177 = arith.constant dense<0.000000e+00> : vector<16x4xf32>
    %301 = tpu.matmul %299, %300, %cst_177 {dimension_numbers = #tpu.dot_dimension_numbers<[1], [0], [0], [1], [0, 0, 1, 1], [], []>} : vector<16x32xf32>, vector<32x4xf32>, vector<16x4xf32> -> vector<16x4xf32>
    %c32 = arith.constant 32 : index
    %c0_178 = arith.constant 0 : index
    %302 = vector.load %arg6[%c32, %c0_178] : memref<33x4xf32, #tpu.memory_space<vmem>>, vector<1x4xf32>
    %303 = vector.broadcast %302 : vector<1x4xf32> to vector<16x4xf32>
    %304 = arith.addf %301, %303 : vector<16x4xf32>
    %305 = vector.broadcast %1 : vector<16x1xf32> to vector<16x4xf32>
    %306 = arith.mulf %304, %305 : vector<16x4xf32>
    %307 = vector.extract_strided_slice %306 {offsets = [0, 0], sizes = [16, 2], strides = [1, 1]} : vector<16x4xf32> to vector<16x2xf32>
    %308 = vector.extract_strided_slice %306 {offsets = [0, 2], sizes = [16, 2], strides = [1, 1]} : vector<16x4xf32> to vector<16x2xf32>
    %309 = math.exp %308 : vector<16x2xf32>
    %310 = arith.mulf %3, %309 : vector<16x2xf32>
    %311 = vector.broadcast %1 : vector<16x1xf32> to vector<16x2xf32>
    %312 = arith.mulf %310, %311 : vector<16x2xf32>
    %313 = arith.addf %307, %312 : vector<16x2xf32>
    %c0_179 = arith.constant 0 : index
    %c0_180 = arith.constant 0 : index
    %314 = vector.load %arg7[%c0_179, %c0_180] : memref<16x4xf32, #tpu.memory_space<vmem>>, vector<16x2xf32>
    tpu.vector_store %arg7[%c0_179, %c0_180], %2 {strides = array<i32>} : memref<16x4xf32, #tpu.memory_space<vmem>>, vector<16x2xf32>,
    %c0_181 = arith.constant 0 : index
    %c2_182 = arith.constant 2 : index
    %315 = vector.load %arg7[%c0_181, %c2_182] : memref<16x4xf32, #tpu.memory_space<vmem>>, vector<16x2xf32>
    tpu.vector_store %arg7[%c0_181, %c2_182], %313 {strides = array<i32>} : memref<16x4xf32, #tpu.memory_space<vmem>>, vector<16x2xf32>,
    %cst_183 = arith.constant dense<0.000000e+00> : vector<16xf32>
    %316 = vector.multi_reduction <add>, %308, %cst_183 [1] : vector<16x2xf32> to vector<16xf32>
    %317 = vector.shape_cast %316 : vector<16xf32> to vector<16x1xf32>
    %c0_184 = arith.constant 0 : index
    %c0_185 = arith.constant 0 : index
    %318 = vector.load %arg8[%c0_184, %c0_185] : memref<16x1xf32, #tpu.memory_space<vmem>>, vector<16x1xf32>
    tpu.vector_store %arg8[%c0_184, %c0_185], %317 {strides = array<i32>} : memref<16x1xf32, #tpu.memory_space<vmem>>, vector<16x1xf32>,
    return
  }
  func.func @transform_0(%arg0: i32) -> (i32, i32) {
    %c0_i32 = arith.constant 0 : i32
    %c0_i32_0 = arith.constant 0 : i32
    return %arg0, %c0_i32 : i32, i32
  }
  func.func @transform_1(%arg0: i32) -> (i32, i32) {
    %c0_i32 = arith.constant 0 : i32
    %c0_i32_0 = arith.constant 0 : i32
    return %arg0, %c0_i32 : i32, i32
  }
  func.func @transform_2(%arg0: i32) -> (i32, i32, i32, i32) {
    %c0_i32 = arith.constant 0 : i32
    %c0_i32_0 = arith.constant 0 : i32
    %c0_i32_1 = arith.constant 0 : i32
    %c0_i32_2 = arith.constant 0 : i32
    %c0_i32_3 = arith.constant 0 : i32
    return %c0_i32, %c0_i32_0, %c0_i32_1, %c0_i32_2 : i32, i32, i32, i32
  }
  func.func @transform_3(%arg0: i32) -> (i32, i32, i32) {
    %c0_i32 = arith.constant 0 : i32
    %c0_i32_0 = arith.constant 0 : i32
    %c0_i32_1 = arith.constant 0 : i32
    %c0_i32_2 = arith.constant 0 : i32
    return %c0_i32, %c0_i32_0, %c0_i32_1 : i32, i32, i32
  }
  func.func @transform_4(%arg0: i32) -> (i32, i32) {
    %c0_i32 = arith.constant 0 : i32
    %c0_i32_0 = arith.constant 0 : i32
    %c0_i32_1 = arith.constant 0 : i32
    return %c0_i32, %c0_i32_0 : i32, i32
  }
  func.func @transform_5(%arg0: i32) -> (i32, i32) {
    %c0_i32 = arith.constant 0 : i32
    %c0_i32_0 = arith.constant 0 : i32
    %c0_i32_1 = arith.constant 0 : i32
    return %c0_i32, %c0_i32_0 : i32, i32
  }
  func.func @transform_6(%arg0: i32) -> (i32, i32) {
    %c0_i32 = arith.constant 0 : i32
    %c0_i32_0 = arith.constant 0 : i32
    return %arg0, %c0_i32 : i32, i32
  }
  func.func @transform_7(%arg0: i32) -> (i32, i32) {
    %c0_i32 = arith.constant 0 : i32
    %c0_i32_0 = arith.constant 0 : i32
    return %arg0, %c0_i32 : i32, i32
  }
}

</mosaic_0001>

<llo_original>
// kernel: residual_coupling_forward.1
$region0: #{residual_coupling_forward.1}
  #allocation0 [shape = 'u32[]', space=smem, size = 0x4, offset = 0x4, fixed_abs, tag = 'smem constant byte address 0x4 - core index']
  #allocation1 [shape = 'u32[144,128]{1,0:T(1,128)}', space=vmem, size = 0x12000, scoped, tag = 'internal scratch']
  %s0 = inlined_call_operand.vmem [shape: f32[32,4], index: 0, kind: input, shape index: {}, may-alias: {0,6}]
  %s1 = inlined_call_operand.vmem [shape: f32[32,1], index: 1, kind: input, shape index: {}]
  %s2 = inlined_call_operand.hbm [shape: bf16[4,6,32,64], index: 2, kind: input, shape index: {}]
  %s3 = inlined_call_operand.vmem [shape: f32[4,2,64], index: 3, kind: input, shape index: {}]
  %s4 = inlined_call_operand.vmem [shape: f32[3,32], index: 4, kind: input, shape index: {}]
  %s5 = inlined_call_operand.vmem [shape: f32[33,4], index: 5, kind: input, shape index: {}]
  %s6 = inlined_call_operand.vmem [shape: f32[32,4], index: 6, kind: output, shape index: {0}, may-alias: {0,6}]
  %s7 = inlined_call_operand.vmem [shape: f32[32,1], index: 7, kind: output, shape index: {1}]
  %8 = xla_tuple %s6, %s7
  %s9 = sld [smem:[#allocation0]]
  $region69: #{residual_coupling_forward.1} parent=0
    _
  %s11 = ssub.s32 1, %s9
  %s12 = scalar_select 0, %s11, %s9
  $region1: #{residual_coupling_forward.1} parent=0
    #allocation2 [shape = 'u8[196608]{0}', space=vmem, size = 0x30000, scoped, tag = 'input window, operand 2, single buffered']
    #allocation3 [shape = 's32[2]{0}', space=sflag, size = 0x8, scoped, tag = 'scoped memory for residual_coupling_forward.1']
    %13 = vsyncpa [#allocation3], 0
    loop: start=0, step=1, limit=4
    $region2: #{residual_coupling_forward.1} parent=1 // loop_pre_header
      _
    $region3: #{residual_coupling_forward.1} parent=1 // loop_header
      %s15 = sphi 0, %s19
      %p16 = scmp.ge.s32.totalorder %s15, 4
      %s25 = sphi 0, %s27
      %s28 = sphi 0, %s25
      %s29 = sphi 0, %s28
      %s45 = sphi 0, %s29
      %s51 = sphi 0, %s53
      %s54 = sphi 0, %s51
      %s55 = sphi 0, %s54
      %s71 = sphi 0, %s55
      %s75 = sphi 0, %s75
      %s77 = sphi 0, %s75
      %s78 = sphi 0, %s77
      %s92 = sphi 0, %s78
      %s96 = sphi 0, %s96
      %s98 = sphi 0, %s96
      %s99 = sphi 0, %s98
      %s113 = sphi 0, %s99
      %s117 = sphi 0, %s117
      %s119 = sphi 0, %s117
      %s120 = sphi 0, %s119
      %s134 = sphi 0, %s120
      %s138 = sphi 0, %s138
      %s140 = sphi 0, %s138
      %s141 = sphi 0, %s140
      %s155 = sphi 0, %s141
      %s161 = sphi 0, %s163
      %s164 = sphi 0, %s161
      %s165 = sphi 0, %s164
      %s181 = sphi 0, %s165
      %s187 = sphi 0, %s189
      %s190 = sphi 0, %s187
      %s191 = sphi 0, %s190
      %s207 = sphi 0, %s191
    $region4: #{residual_coupling_forward.1} parent=1 // loop_header_branch
      %18 = sbr.rel (%p16) target = $region8
    $region5: #{residual_coupling_forward.1} parent=1 // loop_body
      %s20 = ssub.s32 %s15, 1
      %s21 = ssub.s32 %s15, 2
      %s22 = sadd.s32 %s15, 1
      %s23 = ssub.s32 %s15, %s22
      %p24 = scmp.eq.s32.totalorder %s23, 0
      %s26 = sadd.s32 %s25, 1
      %s27 = scalar_select %p24, %s25, %s26
      %p30 = pneg %p24
      %p31 = scmp.eq.s32.totalorder %s15, 1
      %p32 = por %p30, %p31
      %p33 = scmp.ne.s32.totalorder %s25, %s28
      %p34 = scmp.eq.s32.totalorder %s15, 0
      %p35 = por %p33, %p34
      %p36 = scmp.ne.s32.totalorder %s25, %s28
      %p37 = scmp.eq.s32.totalorder %s20, 1
      %p38 = por %p36, %p37
      %p39 = scmp.ne.s32.totalorder %s28, %s29
      %p40 = scmp.eq.s32.totalorder %s20, 0
      %p41 = por %p39, %p40
      %p42 = scmp.ne.s32.totalorder %s28, %s29
      %p43 = scmp.eq.s32.totalorder %s21, 1
      %p44 = por %p42, %p43
      %p46 = scmp.ne.s32.totalorder %s29, %s45
      %p47 = scmp.eq.s32.totalorder %s21, 0
      %p48 = por %p46, %p47
      %s49 = ssub.s32 %s15, %s22
      %p50 = scmp.eq.s32.totalorder %s49, 0
      %s52 = sadd.s32 %s51, 1
      %s53 = scalar_select %p50, %s51, %s52
      %p56 = pneg %p50
      %p57 = scmp.eq.s32.totalorder %s15, 1
      %p58 = por %p56, %p57
      %p59 = scmp.ne.s32.totalorder %s51, %s54
      %p60 = scmp.eq.s32.totalorder %s15, 0
      %p61 = por %p59, %p60
      %p62 = scmp.ne.s32.totalorder %s51, %s54
      %p63 = scmp.eq.s32.totalorder %s20, 1
      %p64 = por %p62, %p63
      %p65 = scmp.ne.s32.totalorder %s54, %s55
      %p66 = scmp.eq.s32.totalorder %s20, 0
      %p67 = por %p65, %p66
      %p68 = scmp.ne.s32.totalorder %s54, %s55
      %p69 = scmp.eq.s32.totalorder %s21, 1
      %p70 = por %p68, %p69
      %p72 = scmp.ne.s32.totalorder %s55, %s71
      %p73 = scmp.eq.s32.totalorder %s21, 0
      %p74 = por %p72, %p73
      %s76 = sadd.s32 %s75, 1
      %p79 = scmp.eq.s32.totalorder %s15, 1
      %p80 = scmp.ne.s32.totalorder %s75, %s77
      %p81 = scmp.eq.s32.totalorder %s15, 0
      %p82 = por %p80, %p81
      %p83 = scmp.ne.s32.totalorder %s75, %s77
      %p84 = scmp.eq.s32.totalorder %s20, 1
      %p85 = por %p83, %p84
      %p86 = scmp.ne.s32.totalorder %s77, %s78
      %p87 = scmp.eq.s32.totalorder %s20, 0
      %p88 = por %p86, %p87
      %p89 = scmp.ne.s32.totalorder %s77, %s78
      %p90 = scmp.eq.s32.totalorder %s21, 1
      %p91 = por %p89, %p90
      %p93 = scmp.ne.s32.totalorder %s78, %s92
      %p94 = scmp.eq.s32.totalorder %s21, 0
      %p95 = por %p93, %p94
      %s97 = sadd.s32 %s96, 1
      %p100 = scmp.eq.s32.totalorder %s15, 1
      %p101 = scmp.ne.s32.totalorder %s96, %s98
      %p102 = scmp.eq.s32.totalorder %s15, 0
      %p103 = por %p101, %p102
      %p104 = scmp.ne.s32.totalorder %s96, %s98
      %p105 = scmp.eq.s32.totalorder %s20, 1
      %p106 = por %p104, %p105
      %p107 = scmp.ne.s32.totalorder %s98, %s99
      %p108 = scmp.eq.s32.totalorder %s20, 0
      %p109 = por %p107, %p108
      %p110 = scmp.ne.s32.totalorder %s98, %s99
      %p111 = scmp.eq.s32.totalorder %s21, 1
      %p112 = por %p110, %p111
      %p114 = scmp.ne.s32.totalorder %s99, %s113
      %p115 = scmp.eq.s32.totalorder %s21, 0
      %p116 = por %p114, %p115
      %s118 = sadd.s32 %s117, 1
      %p121 = scmp.eq.s32.totalorder %s15, 1
      %p122 = scmp.ne.s32.totalorder %s117, %s119
      %p123 = scmp.eq.s32.totalorder %s15, 0
      %p124 = por %p122, %p123
      %p125 = scmp.ne.s32.totalorder %s117, %s119
      %p126 = scmp.eq.s32.totalorder %s20, 1
      %p127 = por %p125, %p126
      %p128 = scmp.ne.s32.totalorder %s119, %s120
      %p129 = scmp.eq.s32.totalorder %s20, 0
      %p130 = por %p128, %p129
      %p131 = scmp.ne.s32.totalorder %s119, %s120
      %p132 = scmp.eq.s32.totalorder %s21, 1
      %p133 = por %p131, %p132
      %p135 = scmp.ne.s32.totalorder %s120, %s134
      %p136 = scmp.eq.s32.totalorder %s21, 0
      %p137 = por %p135, %p136
      %s139 = sadd.s32 %s138, 1
      %p142 = scmp.eq.s32.totalorder %s15, 1
      %p143 = scmp.ne.s32.totalorder %s138, %s140
      %p144 = scmp.eq.s32.totalorder %s15, 0
      %p145 = por %p143, %p144
      %p146 = scmp.ne.s32.totalorder %s138, %s140
      %p147 = scmp.eq.s32.totalorder %s20, 1
      %p148 = por %p146, %p147
      %p149 = scmp.ne.s32.totalorder %s140, %s141
      %p150 = scmp.eq.s32.totalorder %s20, 0
      %p151 = por %p149, %p150
      %p152 = scmp.ne.s32.totalorder %s140, %s141
      %p153 = scmp.eq.s32.totalorder %s21, 1
      %p154 = por %p152, %p153
      %p156 = scmp.ne.s32.totalorder %s141, %s155
      %p157 = scmp.eq.s32.totalorder %s21, 0
      %p158 = por %p156, %p157
      %s159 = ssub.s32 %s15, %s22
      %p160 = scmp.eq.s32.totalorder %s159, 0
      %s162 = sadd.s32 %s161, 1
      %s163 = scalar_select %p160, %s161, %s162
      %p166 = pneg %p160
      %p167 = scmp.eq.s32.totalorder %s15, 1
      %p168 = por %p166, %p167
      %p169 = scmp.ne.s32.totalorder %s161, %s164
      %p170 = scmp.eq.s32.totalorder %s15, 0
      %p171 = por %p169, %p170
      %p172 = scmp.ne.s32.totalorder %s161, %s164
      %p173 = scmp.eq.s32.totalorder %s20, 1
      %p174 = por %p172, %p173
      %p175 = scmp.ne.s32.totalorder %s164, %s165
      %p176 = scmp.eq.s32.totalorder %s20, 0
      %p177 = por %p175, %p176
      %p178 = scmp.ne.s32.totalorder %s164, %s165
      %p179 = scmp.eq.s32.totalorder %s21, 1
      %p180 = por %p178, %p179
      %p182 = scmp.ne.s32.totalorder %s165, %s181
      %p183 = scmp.eq.s32.totalorder %s21, 0
      %p184 = por %p182, %p183
      %s185 = ssub.s32 %s15, %s22
      %p186 = scmp.eq.s32.totalorder %s185, 0
      %s188 = sadd.s32 %s187, 1
      %s189 = scalar_select %p186, %s187, %s188
      %p192 = pneg %p186
      %p193 = scmp.eq.s32.totalorder %s15, 1
      %p194 = por %p192, %p193
      %p195 = scmp.ne.s32.totalorder %s187, %s190
      %p196 = scmp.eq.s32.totalorder %s15, 0
      %p197 = por %p195, %p196
      %p198 = scmp.ne.s32.totalorder %s187, %s190
      %p199 = scmp.eq.s32.totalorder %s20, 1
      %p200 = por %p198, %p199
      %p201 = scmp.ne.s32.totalorder %s190, %s191
      %p202 = scmp.eq.s32.totalorder %s20, 0
      %p203 = por %p201, %p202
      %p204 = scmp.ne.s32.totalorder %s190, %s191
      %p205 = scmp.eq.s32.totalorder %s21, 1
      %p206 = por %p204, %p205
      %p208 = scmp.ne.s32.totalorder %s191, %s207
      %p209 = scmp.eq.s32.totalorder %s21, 0
      %p210 = por %p208, %p209
      %p211 = scmp.le.s32.totalorder 1, %s15
      %p212 = scmp.lt.s32.totalorder %s15, 3
      %p213 = pnand %p211, %p212
      %p214 = pneg %p213
      // Predicated region
      $region9: #{residual_coupling_forward.1} parent=5 // pred_check
        _
      $region10: #{residual_coupling_forward.1} parent=5 // pred_check_branch
        %216 = sbr.rel (%p213) target = $region12
      $region11: #{residual_coupling_forward.1} parent=5 // pred_region
        %s217 = ssub.s32 %s15, 1
        // Predicated region
        $region13: #{residual_coupling_forward.1} parent=11 // pred_check
          %p218 = pneg %p88
        $region14: #{residual_coupling_forward.1} parent=11 // pred_check_branch
          %220 = sbr.rel (%p218) target = $region16
        $region15: #{residual_coupling_forward.1} parent=11 // pred_region
          %s222 = ssub.s32 6144, 6144
          %223 = vsyncadd [#allocation3], %s222
          %s224 = sshll.u32 [#allocation2], 4
          %s225 = int_to_ptr.vmem [resolvable:$true] %s224
          %230 = dma.hbm_to_vmem [thread:$0]  %s2, 6144, %s225, [#allocation3], 64, 64, 4
        $region16: #{residual_coupling_forward.1} parent=11 // pred_fallthru
          _
        // Predicated region
        $region17: #{residual_coupling_forward.1} parent=11 // pred_check
          %p231 = pneg %p109
        $region18: #{residual_coupling_forward.1} parent=11 // pred_check_branch
          %233 = sbr.rel (%p231) target = $region20
        $region19: #{residual_coupling_forward.1} parent=11 // pred_region
          _
        $region20: #{residual_coupling_forward.1} parent=11 // pred_fallthru
          _
        // Predicated region
        $region21: #{residual_coupling_forward.1} parent=11 // pred_check
          %p234 = pneg %p130
        $region22: #{residual_coupling_forward.1} parent=11 // pred_check_branch
          %236 = sbr.rel (%p234) target = $region24
        $region23: #{residual_coupling_forward.1} parent=11 // pred_region
          _
        $region24: #{residual_coupling_forward.1} parent=11 // pred_fallthru
          _
        // Predicated region
        $region25: #{residual_coupling_forward.1} parent=11 // pred_check
          %p237 = pneg %p151
        $region26: #{residual_coupling_forward.1} parent=11 // pred_check_branch
          %239 = sbr.rel (%p237) target = $region28
        $region27: #{residual_coupling_forward.1} parent=11 // pred_region
          _
        $region28: #{residual_coupling_forward.1} parent=11 // pred_fallthru
          _
      $region12: #{residual_coupling_forward.1} parent=5 // pred_fallthru
        _
      %p240 = scmp.lt.s32.totalorder %s15, 2
      // Predicated region
      $region29: #{residual_coupling_forward.1} parent=5 // pred_check
        %p241 = pneg %p240
      $region30: #{residual_coupling_forward.1} parent=5 // pred_check_branch
        %243 = sbr.rel (%p241) target = $region32
      $region31: #{residual_coupling_forward.1} parent=5 // pred_region
        // Predicated region
        $region33: #{residual_coupling_forward.1} parent=31 // pred_check
          %p244 = pneg %p35
        $region34: #{residual_coupling_forward.1} parent=31 // pred_check_branch
          %246 = sbr.rel (%p244) target = $region36
        $region35: #{residual_coupling_forward.1} parent=31 // pred_region
          %s247 = smul.u32 2, %s15
          %p248 = scmp.lt.s32.totalorder %s247, 3
          %s249 = scalar_select %p248, %s247, 3
          %s250 = smul.addr %s249, 8
          %s251 = scalar_lea.vmem %s0, %s250
          %s252 = smul.u32 2, %s15
        $region36: #{residual_coupling_forward.1} parent=31 // pred_fallthru
          _
        // Predicated region
        $region37: #{residual_coupling_forward.1} parent=31 // pred_check
          %p253 = pneg %p61
        $region38: #{residual_coupling_forward.1} parent=31 // pred_check_branch
          %255 = sbr.rel (%p253) target = $region40
        $region39: #{residual_coupling_forward.1} parent=31 // pred_region
          %s256 = smul.u32 2, %s15
          %p257 = scmp.lt.s32.totalorder %s256, 3
          %s258 = scalar_select %p257, %s256, 3
          %s259 = smul.addr %s258, 8
          %s260 = scalar_lea.vmem %s1, %s259
          %s261 = smul.u32 2, %s15
        $region40: #{residual_coupling_forward.1} parent=31 // pred_fallthru
          _
      $region32: #{residual_coupling_forward.1} parent=5 // pred_fallthru
        _
      %p262 = scmp.le.s32.totalorder 1, %s15
      %p263 = scmp.lt.s32.totalorder %s15, 3
      %p264 = pnand %p262, %p263
      %p265 = pneg %p264
      // Predicated region
      $region41: #{residual_coupling_forward.1} parent=5 // pred_check
        _
      $region42: #{residual_coupling_forward.1} parent=5 // pred_check_branch
        %267 = sbr.rel (%p264) target = $region44
      $region43: #{residual_coupling_forward.1} parent=5 // pred_region
        %s268 = ssub.s32 %s15, 1
        // Predicated region
        $region45: #{residual_coupling_forward.1} parent=43 // pred_check
          %p269 = pneg %p88
        $region46: #{residual_coupling_forward.1} parent=43 // pred_check_branch
          %271 = sbr.rel (%p269) target = $region48
        $region47: #{residual_coupling_forward.1} parent=43 // pred_region
          %272 = dma.done [#allocation3], 6144
        $region48: #{residual_coupling_forward.1} parent=43 // pred_fallthru
          _
        %s273 = smul.u32 2, %s20
        %p274 = scmp.lt.s32.totalorder %s273, 3
        %s275 = scalar_select %p274, %s273, 3
        %s276 = smul.addr %s275, 8
        %s277 = scalar_lea.vmem %s0, %s276
        %p278 = pneg %p41
        %p279 = pneg %p38
        %s280 = smul.u32 2, %s20
        %p281 = scmp.lt.s32.totalorder %s280, 3
        %s282 = scalar_select %p281, %s280, 3
        %s283 = smul.addr %s282, 8
        %s284 = scalar_lea.vmem %s1, %s283
        %p285 = pneg %p67
        %p286 = pneg %p64
        %p287 = pneg %p88
        %p288 = pneg %p85
        %p289 = pneg %p109
        %p290 = pneg %p106
        %p291 = pneg %p130
        %p292 = pneg %p127
        %p293 = pneg %p151
        %p294 = pneg %p148
        %p295 = pneg %p177
        %p296 = pneg %p174
        %s297 = smul.u32 2, %s20
        %p298 = scmp.lt.s32.totalorder %s297, 3
        %s299 = scalar_select %p298, %s297, 3
        %s300 = smul.addr %s299, 8
        %s301 = scalar_lea.vmem %s6, %s300
        %p302 = pneg %p203
        %p303 = pneg %p200
        %s304 = smul.u32 2, %s20
        %p305 = scmp.lt.s32.totalorder %s304, 3
        %s306 = scalar_select %p305, %s304, 3
        %s307 = smul.addr %s306, 8
        %s308 = scalar_lea.vmem %s7, %s307
        %s309 = smul.u32 2, %s20
        %p310 = scmp.lt.s32.totalorder %s309, 3
        %s311 = scalar_select %p310, %s309, 3
        %s312 = smul.addr %s311, 8
        %s313 = scalar_lea.vmem %s0, %s312
        %s314 = smul.u32 2, %s20
        %s315 = smul.u32 2, %s20
        %p316 = scmp.lt.s32.totalorder %s315, 3
        %s317 = scalar_select %p316, %s315, 3
        %s318 = smul.addr %s317, 8
        %s319 = scalar_lea.vmem %s1, %s318
        %s320 = smul.u32 2, %s20
        %s321 = smul.u32 2, %s20
        %p322 = scmp.lt.s32.totalorder %s321, 3
        %s323 = scalar_select %p322, %s321, 3
        %s324 = smul.addr %s323, 8
        %s325 = scalar_lea.vmem %s6, %s324
        %s326 = smul.u32 2, %s20
        %s327 = smul.u32 2, %s20
        %p328 = scmp.lt.s32.totalorder %s327, 3
        %s329 = scalar_select %p328, %s327, 3
        %s330 = smul.addr %s329, 8
        %s331 = scalar_lea.vmem %s7, %s330
        %s332 = smul.u32 2, %s20
        %v334 = vld [vmem:[%s313] sm:$0xff]
        %v335 = vld [vmem:[%s313 + $0x8] sm:$0xff]
        %v336 = vld [vmem:[%s319] sm:$0xff]
        %v337 = vld [vmem:[%s319 + $0x8] sm:$0xff]
        %339 = vset.pattern.permute.xlu0 0
        %340 = vperm.xlu0 %339, %v336
        %v341 = vpop.permute.xlu0 %340
        %344 = vset.pattern.permute.xlu0 0
        %345 = vperm.xlu0 %344, %v337
        %v346 = vpop.permute.xlu0 %345
        %v348 = vlaneseq
        %v349 = vshrl.u32 %v348, 7
        %v350 = vadd.s32 %v349, 8
        %v351 = vadd.s32 %v349, 4294967294
        %v352 = vadd.s32 %v350, 4294967294
        %vm353 = vcmp.ge.s32.totalorder %v351, 0
        %vm354 = vcmp.ge.s32.totalorder %v352, 0
        %vm355 = vcmp.lt.s32.totalorder %v351, 16
        %vm356 = vcmp.lt.s32.totalorder %v352, 16
        %vm357 = vmand %vm353, %vm355
        %vm358 = vmand %vm354, %vm356
        %v359 = vsel %vm357, 1, 0
        %v360 = vsel %vm358, 1, 0
        %v361 = vcvt.s32.f32 %v359
        %v362 = vcvt.s32.f32 %v360
        %v363 = vadd.s32 %v349, 4294967295
        %v364 = vadd.s32 %v350, 4294967295
        %vm365 = vcmp.ge.s32.totalorder %v363, 0
        %vm366 = vcmp.ge.s32.totalorder %v364, 0
        %vm367 = vcmp.lt.s32.totalorder %v363, 16
        %vm368 = vcmp.lt.s32.totalorder %v364, 16
        %vm369 = vmand %vm365, %vm367
        %vm370 = vmand %vm366, %vm368
        %v371 = vsel %vm369, 1, 0
        %v372 = vsel %vm370, 1, 0
        %v373 = vcvt.s32.f32 %v371
        %v374 = vcvt.s32.f32 %v372
        %v375 = vadd.s32 %v349, 1
        %v376 = vadd.s32 %v350, 1
        %vm377 = vcmp.ge.s32.totalorder %v375, 0
        %vm378 = vcmp.ge.s32.totalorder %v376, 0
        %vm379 = vcmp.lt.s32.totalorder %v375, 16
        %vm380 = vcmp.lt.s32.totalorder %v376, 16
        %vm381 = vmand %vm377, %vm379
        %vm382 = vmand %vm378, %vm380
        %v383 = vsel %vm381, 1, 0
        %v384 = vsel %vm382, 1, 0
        %v385 = vcvt.s32.f32 %v383
        %v386 = vcvt.s32.f32 %v384
        %v387 = vadd.s32 %v349, 2
        %v388 = vadd.s32 %v350, 2
        %vm389 = vcmp.ge.s32.totalorder %v387, 0
        %vm390 = vcmp.ge.s32.totalorder %v388, 0
        %vm391 = vcmp.lt.s32.totalorder %v387, 16
        %vm392 = vcmp.lt.s32.totalorder %v388, 16
        %vm393 = vmand %vm389, %vm391
        %vm394 = vmand %vm390, %vm392
        %v395 = vsel %vm393, 1, 0
        %v396 = vsel %vm394, 1, 0
        %v397 = vcvt.s32.f32 %v395
        %v398 = vcvt.s32.f32 %v396
        %v399 = vld [vmem:[%s4 + $0x2] sm:$0x1]
        %v400 = vlaneseq
        %v401 = vshrl.u32 %v400, 7
        %v402 = vsub.s32 0, %v401
        %v403 = vrot.slane %v399, %v402
        %v404 = vld [vmem:[%s4] sm:$0x1]
        %406 = vset.pattern.permute.xlu0 0
        %407 = vperm.xlu0 %406, %v334
        %v408 = vpop.permute.xlu0 %407
        %411 = vset.pattern.permute.xlu0 0
        %412 = vperm.xlu0 %411, %v335
        %v413 = vpop.permute.xlu0 %412
        %v415 = vlaneseq
        %v416 = vshrl.u32 %v415, 7
        %v417 = vsub.s32 0, %v416
        %v418 = vrot.slane %v404, %v417
        %v419 = vmul.f32 %v408, %v418
        %v420 = vmul.f32 %v413, %v418
        %v421 = vadd.f32 %v403, %v419
        %v422 = vadd.f32 %v403, %v420
        %v423 = vld [vmem:[%s4 + $0x1] sm:$0x1]
        %424 = vset.pattern.permute.xlu0 1
        %425 = vperm.xlu0 %424, %v334
        %v426 = vpop.permute.xlu0 %425
        %428 = vset.pattern.permute.xlu0 1
        %429 = vperm.xlu0 %428, %v335
        %v430 = vpop.permute.xlu0 %429
        %v432 = vlaneseq
        %v433 = vshrl.u32 %v432, 7
        %v434 = vsub.s32 0, %v433
        %v435 = vrot.slane %v423, %v434
        %v436 = vmul.f32 %v426, %v435
        %v437 = vmul.f32 %v430, %v435
        %v438 = vadd.f32 %v421, %v436
        %v439 = vadd.f32 %v422, %v437
        %v440 = vmul.f32 %v438, %v341
        %v441 = vmul.f32 %v439, %v346
        %v442 = vpack.c.bf16 %v441, %v440
        %v443 = vld [vmem:[%s3] sm:$0x1]
        %v444 = vlaneseq
        %v445 = vshrl.u32 %v444, 7
        %v446 = vsub.s32 0, %v445
        %v447 = vrot.slane %v443, %v446
        %v448 = vrot.slane %v440, 6
        %v449 = vrot.slane %v441, 6
        %vm450 = vcmp.lt.s32.totalorder %v349, 2
        %v451 = vsel %vm450, %v448, %v449
        %v452 = vsel %vm450, %v449, %v448
        %v453 = vmul.f32 %v452, %v361
        %v454 = vmul.f32 %v451, %v362
        %v455 = vpack.c.bf16 %v454, %v453
        %v456 = vld [vmem:[#allocation2] sm:$0xf]
        %v457 = vld [vmem:[#allocation2 + $0x4] sm:$0xf]
        %v458 = vld [vmem:[#allocation2 + $0x8] sm:$0xf]
        %v459 = vld [vmem:[#allocation2 + $0xc] sm:$0xf]
        %v464 = vunpack.c.l.b16 %v456
        %v465 = vunpack.c.l.b16 %v457
        %v466 = vunpack.c.l.b16 %v458
        %v467 = vunpack.c.l.b16 %v459
        %v468 = vpack.c.b16 %v465, %v464
        %v469 = vpack.c.b16 %v467, %v466
        %vm472 = vcmask 261120
        %v474 = vsel %vm472, %v455, 0
        %476 = vmatprep.subr.bf16.mxu0 0
        %477 = vmatpush1.bf16.msra.mxu0 0
        %478 = vmatprep.subr.bf16.mxu0 0
        %479 = vmatpush1.bf16.msra.mxu0 0
        %480 = vmatprep.subr.bf16.mxu0 0
        %481 = vmatpush1.bf16.msra.mxu0 0
        %482 = vmatprep.subr.bf16.mxu0 0
        %483 = vmatpush1.bf16.msra.mxu0 0
        %484 = vmatprep.subr.bf16.mxu0 0
        %485 = vmatpush1.bf16.msra.mxu0 0
        %486 = vmatprep.subr.bf16.mxu0 0
        %487 = vmatpush1.bf16.msra.mxu0 0
        %488 = vmatprep.subr.bf16.mxu0 0
        %489 = vmatpush1.bf16.msra.mxu0 %v469
        %490 = vmatprep.subr.bf16.mxu0 0
        %491 = vmatpush1.bf16.msra.mxu0 %v468
        %492 = vmatprep.subr.bf16.mxu0 0
        %493 = vmatpush2.bf16.msra.mxu0 0
        %494 = vmatprep.subr.bf16.mxu0 0
        %495 = vmatpush2.bf16.msra.mxu0 0
        %496 = vmatprep.subr.bf16.mxu0 0
        %497 = vmatpush2.bf16.msra.mxu0 0
        %498 = vmatprep.subr.bf16.mxu0 0
        %499 = vmatpush2.bf16.msra.mxu0 0
        %500 = vmatprep.subr.bf16.mxu0 0
        %501 = vmatpush2.bf16.msra.mxu0 0
        %502 = vmatprep.subr.bf16.mxu0 0
        %503 = vmatpush2.bf16.msra.mxu0 0
        %504 = vmatprep.subr.bf16.mxu0 0
        %505 = vmatpush2.bf16.msra.mxu0 0
        %506 = vmatprep.subr.bf16.mxu0 0
        %507 = vmatpush2.bf16.msra.mxu0 0
        %508 = vmatprep.mubr.bf16.mxu0 0
        %509 = vmatmul.mubr.bf16.gmra.mxu0 %v474
        %v510 = vpop.f32.mrf.mxu0
        %v511 = vadd.f32 0.0, %v510
        %v512 = vpop.f32.mrf.mxu0
        %v513 = vpop.f32.mrf.mxu0
        %v514 = vadd.f32 0.0, %v513
        %v515 = vpop.f32.mrf.mxu0
        %516 = vdwg.mxu0
        %v517 = vadd.f32 %v447, %v511
        %v518 = vadd.f32 %v447, %v514
        %v519 = vrot.slane %v440, 7
        %v520 = vrot.slane %v441, 7
        %vm521 = vcmp.lt.s32.totalorder %v349, 1
        %v522 = vsel %vm521, %v519, %v520
        %v523 = vsel %vm521, %v520, %v519
        %v524 = vmul.f32 %v523, %v373
        %v525 = vmul.f32 %v522, %v374
        %v526 = vpack.c.bf16 %v525, %v524
        %s527 = scalar_lea.vmem [#allocation2], 16
        %v528 = vld [vmem:[%s527] sm:$0xf]
        %v529 = vld [vmem:[%s527 + $0x4] sm:$0xf]
        %v530 = vld [vmem:[%s527 + $0x8] sm:$0xf]
        %v531 = vld [vmem:[%s527 + $0xc] sm:$0xf]
        %v536 = vunpack.c.l.b16 %v528
        %v537 = vunpack.c.l.b16 %v529
        %v538 = vunpack.c.l.b16 %v530
        %v539 = vunpack.c.l.b16 %v531
        %v540 = vpack.c.b16 %v537, %v536
        %v541 = vpack.c.b16 %v539, %v538
        %v545 = vsel %vm472, %v526, 0
        %547 = vmatprep.subr.bf16.mxu0 0
        %548 = vmatpush1.bf16.msra.mxu0 0
        %549 = vmatprep.subr.bf16.mxu0 0
        %550 = vmatpush1.bf16.msra.mxu0 0
        %551 = vmatprep.subr.bf16.mxu0 0
        %552 = vmatpush1.bf16.msra.mxu0 0
        %553 = vmatprep.subr.bf16.mxu0 0
        %554 = vmatpush1.bf16.msra.mxu0 0
        %555 = vmatprep.subr.bf16.mxu0 0
        %556 = vmatpush1.bf16.msra.mxu0 0
        %557 = vmatprep.subr.bf16.mxu0 0
        %558 = vmatpush1.bf16.msra.mxu0 0
        %559 = vmatprep.subr.bf16.mxu0 0
        %560 = vmatpush1.bf16.msra.mxu0 %v541
        %561 = vmatprep.subr.bf16.mxu0 0
        %562 = vmatpush1.bf16.msra.mxu0 %v540
        %563 = vmatprep.subr.bf16.mxu0 0
        %564 = vmatpush2.bf16.msra.mxu0 0
        %565 = vmatprep.subr.bf16.mxu0 0
        %566 = vmatpush2.bf16.msra.mxu0 0
        %567 = vmatprep.subr.bf16.mxu0 0
        %568 = vmatpush2.bf16.msra.mxu0 0
        %569 = vmatprep.subr.bf16.mxu0 0
        %570 = vmatpush2.bf16.msra.mxu0 0
        %571 = vmatprep.subr.bf16.mxu0 0
        %572 = vmatpush2.bf16.msra.mxu0 0
        %573 = vmatprep.subr.bf16.mxu0 0
        %574 = vmatpush2.bf16.msra.mxu0 0
        %575 = vmatprep.subr.bf16.mxu0 0
        %576 = vmatpush2.bf16.msra.mxu0 0
        %577 = vmatprep.subr.bf16.mxu0 0
        %578 = vmatpush2.bf16.msra.mxu0 0
        %579 = vmatprep.mubr.bf16.mxu0 0
        %580 = vmatmul.mubr.bf16.gmra.mxu0 %v545
        %v581 = vpop.f32.mrf.mxu0
        %v582 = vadd.f32 0.0, %v581
        %v583 = vpop.f32.mrf.mxu0
        %v584 = vpop.f32.mrf.mxu0
        %v585 = vadd.f32 0.0, %v584
        %v586 = vpop.f32.mrf.mxu0
        %587 = vdwg.mxu0
        %v588 = vadd.f32 %v517, %v582
        %v589 = vadd.f32 %v518, %v585
        %s590 = scalar_lea.vmem [#allocation2], 32
        %v591 = vld [vmem:[%s590] sm:$0xf]
        %v592 = vld [vmem:[%s590 + $0x4] sm:$0xf]
        %v593 = vld [vmem:[%s590 + $0x8] sm:$0xf]
        %v594 = vld [vmem:[%s590 + $0xc] sm:$0xf]
        %v599 = vunpack.c.l.b16 %v591
        %v600 = vunpack.c.l.b16 %v592
        %v601 = vunpack.c.l.b16 %v593
        %v602 = vunpack.c.l.b16 %v594
        %v603 = vpack.c.b16 %v600, %v599
        %v604 = vpack.c.b16 %v602, %v601
        %v608 = vsel %vm472, %v442, 0
        %610 = vmatprep.subr.bf16.mxu0 0
        %611 = vmatpush1.bf16.msra.mxu0 0
        %612 = vmatprep.subr.bf16.mxu0 0
        %613 = vmatpush1.bf16.msra.mxu0 0
        %614 = vmatprep.subr.bf16.mxu0 0
        %615 = vmatpush1.bf16.msra.mxu0 0
        %616 = vmatprep.subr.bf16.mxu0 0
        %617 = vmatpush1.bf16.msra.mxu0 0
        %618 = vmatprep.subr.bf16.mxu0 0
        %619 = vmatpush1.bf16.msra.mxu0 0
        %620 = vmatprep.subr.bf16.mxu0 0
        %621 = vmatpush1.bf16.msra.mxu0 0
        %622 = vmatprep.subr.bf16.mxu0 0
        %623 = vmatpush1.bf16.msra.mxu0 %v604
        %624 = vmatprep.subr.bf16.mxu0 0
        %625 = vmatpush1.bf16.msra.mxu0 %v603
        %626 = vmatprep.subr.bf16.mxu0 0
        %627 = vmatpush2.bf16.msra.mxu0 0
        %628 = vmatprep.subr.bf16.mxu0 0
        %629 = vmatpush2.bf16.msra.mxu0 0
        %630 = vmatprep.subr.bf16.mxu0 0
        %631 = vmatpush2.bf16.msra.mxu0 0
        %632 = vmatprep.subr.bf16.mxu0 0
        %633 = vmatpush2.bf16.msra.mxu0 0
        %634 = vmatprep.subr.bf16.mxu0 0
        %635 = vmatpush2.bf16.msra.mxu0 0
        %636 = vmatprep.subr.bf16.mxu0 0
        %637 = vmatpush2.bf16.msra.mxu0 0
        %638 = vmatprep.subr.bf16.mxu0 0
        %639 = vmatpush2.bf16.msra.mxu0 0
        %640 = vmatprep.subr.bf16.mxu0 0
        %641 = vmatpush2.bf16.msra.mxu0 0
        %642 = vmatprep.mubr.bf16.mxu0 0
        %643 = vmatmul.mubr.bf16.gmra.mxu0 %v608
        %v644 = vpop.f32.mrf.mxu0
        %v645 = vadd.f32 0.0, %v644
        %v646 = vpop.f32.mrf.mxu0
        %v647 = vpop.f32.mrf.mxu0
        %v648 = vadd.f32 0.0, %v647
        %v649 = vpop.f32.mrf.mxu0
        %650 = vdwg.mxu0
        %v651 = vadd.f32 %v588, %v645
        %v652 = vadd.f32 %v589, %v648
        %v653 = vrot.slane %v440, 1
        %v654 = vrot.slane %v441, 1
        %vm655 = vcmp.lt.s32.totalorder %v349, 7
        %v656 = vsel %vm655, %v653, %v654
        %v657 = vsel %vm655, %v654, %v653
        %v658 = vmul.f32 %v656, %v385
        %v659 = vmul.f32 %v657, %v386
        %v660 = vpack.c.bf16 %v659, %v658
        %s661 = scalar_lea.vmem [#allocation2], 48
        %v662 = vld [vmem:[%s661] sm:$0xf]
        %v663 = vld [vmem:[%s661 + $0x4] sm:$0xf]
        %v664 = vld [vmem:[%s661 + $0x8] sm:$0xf]
        %v665 = vld [vmem:[%s661 + $0xc] sm:$0xf]
        %v670 = vunpack.c.l.b16 %v662
        %v671 = vunpack.c.l.b16 %v663
        %v672 = vunpack.c.l.b16 %v664
        %v673 = vunpack.c.l.b16 %v665
        %v674 = vpack.c.b16 %v671, %v670
        %v675 = vpack.c.b16 %v673, %v672
        %v679 = vsel %vm472, %v660, 0
        %681 = vmatprep.subr.bf16.mxu0 0
        %682 = vmatpush1.bf16.msra.mxu0 0
        %683 = vmatprep.subr.bf16.mxu0 0
        %684 = vmatpush1.bf16.msra.mxu0 0
        %685 = vmatprep.subr.bf16.mxu0 0
        %686 = vmatpush1.bf16.msra.mxu0 0
        %687 = vmatprep.subr.bf16.mxu0 0
        %688 = vmatpush1.bf16.msra.mxu0 0
        %689 = vmatprep.subr.bf16.mxu0 0
        %690 = vmatpush1.bf16.msra.mxu0 0
        %691 = vmatprep.subr.bf16.mxu0 0
        %692 = vmatpush1.bf16.msra.mxu0 0
        %693 = vmatprep.subr.bf16.mxu0 0
        %694 = vmatpush1.bf16.msra.mxu0 %v675
        %695 = vmatprep.subr.bf16.mxu0 0
        %696 = vmatpush1.bf16.msra.mxu0 %v674
        %697 = vmatprep.subr.bf16.mxu0 0
        %698 = vmatpush2.bf16.msra.mxu0 0
        %699 = vmatprep.subr.bf16.mxu0 0
        %700 = vmatpush2.bf16.msra.mxu0 0
        %701 = vmatprep.subr.bf16.mxu0 0
        %702 = vmatpush2.bf16.msra.mxu0 0
        %703 = vmatprep.subr.bf16.mxu0 0
        %704 = vmatpush2.bf16.msra.mxu0 0
        %705 = vmatprep.subr.bf16.mxu0 0
        %706 = vmatpush2.bf16.msra.mxu0 0
        %707 = vmatprep.subr.bf16.mxu0 0
        %708 = vmatpush2.bf16.msra.mxu0 0
        %709 = vmatprep.subr.bf16.mxu0 0
        %710 = vmatpush2.bf16.msra.mxu0 0
        %711 = vmatprep.subr.bf16.mxu0 0
        %712 = vmatpush2.bf16.msra.mxu0 0
        %713 = vmatprep.mubr.bf16.mxu0 0
        %714 = vmatmul.mubr.bf16.gmra.mxu0 %v679
        %v715 = vpop.f32.mrf.mxu0
        %v716 = vadd.f32 0.0, %v715
        %v717 = vpop.f32.mrf.mxu0
        %v718 = vpop.f32.mrf.mxu0
        %v719 = vadd.f32 0.0, %v718
        %v720 = vpop.f32.mrf.mxu0
        %721 = vdwg.mxu0
        %v722 = vadd.f32 %v651, %v716
        %v723 = vadd.f32 %v652, %v719
        %v724 = vrot.slane %v440, 2
        %v725 = vrot.slane %v441, 2
        %vm726 = vcmp.lt.s32.totalorder %v349, 6
        %v727 = vsel %vm726, %v724, %v725
        %v728 = vsel %vm726, %v725, %v724
        %v729 = vmul.f32 %v727, %v397
        %v730 = vmul.f32 %v728, %v398
        %v731 = vpack.c.bf16 %v730, %v729
        %s732 = scalar_lea.vmem [#allocation2], 64
        %v733 = vld [vmem:[%s732] sm:$0xf]
        %v734 = vld [vmem:[%s732 + $0x4] sm:$0xf]
        %v735 = vld [vmem:[%s732 + $0x8] sm:$0xf]
        %v736 = vld [vmem:[%s732 + $0xc] sm:$0xf]
        %v741 = vunpack.c.l.b16 %v733
        %v742 = vunpack.c.l.b16 %v734
        %v743 = vunpack.c.l.b16 %v735
        %v744 = vunpack.c.l.b16 %v736
        %v745 = vpack.c.b16 %v742, %v741
        %v746 = vpack.c.b16 %v744, %v743
        %v750 = vsel %vm472, %v731, 0
        %752 = vmatprep.subr.bf16.mxu0 0
        %753 = vmatpush1.bf16.msra.mxu0 0
        %754 = vmatprep.subr.bf16.mxu0 0
        %755 = vmatpush1.bf16.msra.mxu0 0
        %756 = vmatprep.subr.bf16.mxu0 0
        %757 = vmatpush1.bf16.msra.mxu0 0
        %758 = vmatprep.subr.bf16.mxu0 0
        %759 = vmatpush1.bf16.msra.mxu0 0
        %760 = vmatprep.subr.bf16.mxu0 0
        %761 = vmatpush1.bf16.msra.mxu0 0
        %762 = vmatprep.subr.bf16.mxu0 0
        %763 = vmatpush1.bf16.msra.mxu0 0
        %764 = vmatprep.subr.bf16.mxu0 0
        %765 = vmatpush1.bf16.msra.mxu0 %v746
        %766 = vmatprep.subr.bf16.mxu0 0
        %767 = vmatpush1.bf16.msra.mxu0 %v745
        %768 = vmatprep.subr.bf16.mxu0 0
        %769 = vmatpush2.bf16.msra.mxu0 0
        %770 = vmatprep.subr.bf16.mxu0 0
        %771 = vmatpush2.bf16.msra.mxu0 0
        %772 = vmatprep.subr.bf16.mxu0 0
        %773 = vmatpush2.bf16.msra.mxu0 0
        %774 = vmatprep.subr.bf16.mxu0 0
        %775 = vmatpush2.bf16.msra.mxu0 0
        %776 = vmatprep.subr.bf16.mxu0 0
        %777 = vmatpush2.bf16.msra.mxu0 0
        %778 = vmatprep.subr.bf16.mxu0 0
        %779 = vmatpush2.bf16.msra.mxu0 0
        %780 = vmatprep.subr.bf16.mxu0 0
        %781 = vmatpush2.bf16.msra.mxu0 0
        %782 = vmatprep.subr.bf16.mxu0 0
        %783 = vmatpush2.bf16.msra.mxu0 0
        %784 = vmatprep.mubr.bf16.mxu0 0
        %785 = vmatmul.mubr.bf16.gmra.mxu0 %v750
        %v786 = vpop.f32.mrf.mxu0
        %v787 = vadd.f32 0.0, %v786
        %v788 = vpop.f32.mrf.mxu0
        %v789 = vpop.f32.mrf.mxu0
        %v790 = vadd.f32 0.0, %v789
        %v791 = vpop.f32.mrf.mxu0
        %792 = vdwg.mxu0
        %v793 = vadd.f32 %v722, %v787
        %v794 = vadd.f32 %v723, %v790
        %v795 = vtanh.pop %v793
        %v796 = vtanh.pop %v794
        %v797 = vxor.u32 %v793, 2147483648
        %v798 = vxor.u32 %v794, 2147483648
        %v799 = vmul.f32 %v797, 1.442695
        %v800 = vpow.pop %v799
        %v801 = vmul.f32 %v798, 1.442695
        %v802 = vpow.pop %v801
        %v803 = vadd.f32 %v800, 1.0
        %v804 = vadd.f32 %v802, 1.0
        %v805 = vrcp.pop %v803
        %v806 = vmul.f32 1.0, %v805
        %v807 = vrcp.pop %v804
        %v808 = vmul.f32 1.0, %v807
        %811 = vrot.lane.b32.xlu0 %v806, 96
        %v812 = vpop.permute.xlu0 %811
        %813 = vrot.lane.b32.xlu0 %v808, 96
        %v814 = vpop.permute.xlu0 %813
        %v817 = vmul.f32 %v795, %v812
        %v818 = vmul.f32 %v796, %v814
        %v819 = vpack.c.bf16 %v818, %v817
        %s820 = scalar_lea.vmem [#allocation2], 80
        %v821 = vld [vmem:[%s820] sm:$0xf]
        %v822 = vld [vmem:[%s820 + $0x4] sm:$0xf]
        %v823 = vld [vmem:[%s820 + $0x8] sm:$0xf]
        %v824 = vld [vmem:[%s820 + $0xc] sm:$0xf]
        %v825 = vld [vmem:[%s3 + $0x1] sm:$0x1]
        %v826 = vlaneseq
        %v827 = vshrl.u32 %v826, 7
        %v828 = vsub.s32 0, %v827
        %v829 = vrot.slane %v825, %v828
        %v834 = vunpack.c.l.b16 %v821
        %v835 = vunpack.c.l.b16 %v822
        %v836 = vunpack.c.l.b16 %v823
        %v837 = vunpack.c.l.b16 %v824
        %v838 = vpack.c.b16 %v835, %v834
        %v839 = vpack.c.b16 %v837, %v836
        %v843 = vsel %vm472, %v819, 0
        %845 = vmatprep.subr.bf16.mxu0 0
        %846 = vmatpush1.bf16.msra.mxu0 0
        %847 = vmatprep.subr.bf16.mxu0 0
        %848 = vmatpush1.bf16.msra.mxu0 0
        %849 = vmatprep.subr.bf16.mxu0 0
        %850 = vmatpush1.bf16.msra.mxu0 0
        %851 = vmatprep.subr.bf16.mxu0 0
        %852 = vmatpush1.bf16.msra.mxu0 0
        %853 = vmatprep.subr.bf16.mxu0 0
        %854 = vmatpush1.bf16.msra.mxu0 0
        %855 = vmatprep.subr.bf16.mxu0 0
        %856 = vmatpush1.bf16.msra.mxu0 0
        %857 = vmatprep.subr.bf16.mxu0 0
        %858 = vmatpush1.bf16.msra.mxu0 %v839
        %859 = vmatprep.subr.bf16.mxu0 0
        %860 = vmatpush1.bf16.msra.mxu0 %v838
        %861 = vmatprep.subr.bf16.mxu0 0
        %862 = vmatpush2.bf16.msra.mxu0 0
        %863 = vmatprep.subr.bf16.mxu0 0
        %864 = vmatpush2.bf16.msra.mxu0 0
        %865 = vmatprep.subr.bf16.mxu0 0
        %866 = vmatpush2.bf16.msra.mxu0 0
        %867 = vmatprep.subr.bf16.mxu0 0
        %868 = vmatpush2.bf16.msra.mxu0 0
        %869 = vmatprep.subr.bf16.mxu0 0
        %870 = vmatpush2.bf16.msra.mxu0 0
        %871 = vmatprep.subr.bf16.mxu0 0
        %872 = vmatpush2.bf16.msra.mxu0 0
        %873 = vmatprep.subr.bf16.mxu0 0
        %874 = vmatpush2.bf16.msra.mxu0 0
        %875 = vmatprep.subr.bf16.mxu0 0
        %876 = vmatpush2.bf16.msra.mxu0 0
        %877 = vmatprep.mubr.bf16.mxu0 0
        %878 = vmatmul.mubr.bf16.gmra.mxu0 %v843
        %v879 = vpop.f32.mrf.mxu0
        %v880 = vadd.f32 %v829, %v879
        %v881 = vpop.f32.mrf.mxu0
        %v882 = vpop.f32.mrf.mxu0
        %v883 = vadd.f32 %v829, %v882
        %v884 = vpop.f32.mrf.mxu0
        %885 = vdwg.mxu0
        %v886 = vadd.f32 %v440, %v880
        %v887 = vadd.f32 %v441, %v883
        %v888 = vmul.f32 %v886, %v341
        %v889 = vmul.f32 %v887, %v346
        %v890 = vpack.c.bf16 %v889, %v888
        %s891 = scalar_lea.vmem %s3, 2
        %v892 = vld [vmem:[%s891] sm:$0x1]
        %v893 = vlaneseq
        %v894 = vshrl.u32 %v893, 7
        %v895 = vsub.s32 0, %v894
        %v896 = vrot.slane %v892, %v895
        %v897 = vrot.slane %v888, 6
        %v898 = vrot.slane %v889, 6
        %v899 = vsel %vm450, %v897, %v898
        %v900 = vsel %vm450, %v898, %v897
        %v901 = vmul.f32 %v900, %v361
        %v902 = vmul.f32 %v899, %v362
        %v903 = vpack.c.bf16 %v902, %v901
        %s904 = scalar_lea.vmem [#allocation2], 96
        %v905 = vld [vmem:[%s904] sm:$0xf]
        %v906 = vld [vmem:[%s904 + $0x4] sm:$0xf]
        %v907 = vld [vmem:[%s904 + $0x8] sm:$0xf]
        %v908 = vld [vmem:[%s904 + $0xc] sm:$0xf]
        %v913 = vunpack.c.l.b16 %v905
        %v914 = vunpack.c.l.b16 %v906
        %v915 = vunpack.c.l.b16 %v907
        %v916 = vunpack.c.l.b16 %v908
        %v917 = vpack.c.b16 %v914, %v913
        %v918 = vpack.c.b16 %v916, %v915
        %v922 = vsel %vm472, %v903, 0
        %924 = vmatprep.subr.bf16.mxu0 0
        %925 = vmatpush1.bf16.msra.mxu0 0
        %926 = vmatprep.subr.bf16.mxu0 0
        %927 = vmatpush1.bf16.msra.mxu0 0
        %928 = vmatprep.subr.bf16.mxu0 0
        %929 = vmatpush1.bf16.msra.mxu0 0
        %930 = vmatprep.subr.bf16.mxu0 0
        %931 = vmatpush1.bf16.msra.mxu0 0
        %932 = vmatprep.subr.bf16.mxu0 0
        %933 = vmatpush1.bf16.msra.mxu0 0
        %934 = vmatprep.subr.bf16.mxu0 0
        %935 = vmatpush1.bf16.msra.mxu0 0
        %936 = vmatprep.subr.bf16.mxu0 0
        %937 = vmatpush1.bf16.msra.mxu0 %v918
        %938 = vmatprep.subr.bf16.mxu0 0
        %939 = vmatpush1.bf16.msra.mxu0 %v917
        %940 = vmatprep.subr.bf16.mxu0 0
        %941 = vmatpush2.bf16.msra.mxu0 0
        %942 = vmatprep.subr.bf16.mxu0 0
        %943 = vmatpush2.bf16.msra.mxu0 0
        %944 = vmatprep.subr.bf16.mxu0 0
        %945 = vmatpush2.bf16.msra.mxu0 0
        %946 = vmatprep.subr.bf16.mxu0 0
        %947 = vmatpush2.bf16.msra.mxu0 0
        %948 = vmatprep.subr.bf16.mxu0 0
        %949 = vmatpush2.bf16.msra.mxu0 0
        %950 = vmatprep.subr.bf16.mxu0 0
        %951 = vmatpush2.bf16.msra.mxu0 0
        %952 = vmatprep.subr.bf16.mxu0 0
        %953 = vmatpush2.bf16.msra.mxu0 0
        %954 = vmatprep.subr.bf16.mxu0 0
        %955 = vmatpush2.bf16.msra.mxu0 0
        %956 = vmatprep.mubr.bf16.mxu0 0
        %957 = vmatmul.mubr.bf16.gmra.mxu0 %v922
        %v958 = vpop.f32.mrf.mxu0
        %v959 = vadd.f32 0.0, %v958
        %v960 = vpop.f32.mrf.mxu0
        %v961 = vpop.f32.mrf.mxu0
        %v962 = vadd.f32 0.0, %v961
        %v963 = vpop.f32.mrf.mxu0
        %964 = vdwg.mxu0
        %v965 = vadd.f32 %v896, %v959
        %v966 = vadd.f32 %v896, %v962
        %v967 = vrot.slane %v888, 7
        %v968 = vrot.slane %v889, 7
        %v969 = vsel %vm521, %v967, %v968
        %v970 = vsel %vm521, %v968, %v967
        %v971 = vmul.f32 %v970, %v373
        %v972 = vmul.f32 %v969, %v374
        %v973 = vpack.c.bf16 %v972, %v971
        %s974 = scalar_lea.vmem [#allocation2], 112
        %v975 = vld [vmem:[%s974] sm:$0xf]
        %v976 = vld [vmem:[%s974 + $0x4] sm:$0xf]
        %v977 = vld [vmem:[%s974 + $0x8] sm:$0xf]
        %v978 = vld [vmem:[%s974 + $0xc] sm:$0xf]
        %v983 = vunpack.c.l.b16 %v975
        %v984 = vunpack.c.l.b16 %v976
        %v985 = vunpack.c.l.b16 %v977
        %v986 = vunpack.c.l.b16 %v978
        %v987 = vpack.c.b16 %v984, %v983
        %v988 = vpack.c.b16 %v986, %v985
        %v992 = vsel %vm472, %v973, 0
        %994 = vmatprep.subr.bf16.mxu0 0
        %995 = vmatpush1.bf16.msra.mxu0 0
        %996 = vmatprep.subr.bf16.mxu0 0
        %997 = vmatpush1.bf16.msra.mxu0 0
        %998 = vmatprep.subr.bf16.mxu0 0
        %999 = vmatpush1.bf16.msra.mxu0 0
        %1000 = vmatprep.subr.bf16.mxu0 0
        %1001 = vmatpush1.bf16.msra.mxu0 0
        %1002 = vmatprep.subr.bf16.mxu0 0
        %1003 = vmatpush1.bf16.msra.mxu0 0
        %1004 = vmatprep.subr.bf16.mxu0 0
        %1005 = vmatpush1.bf16.msra.mxu0 0
        %1006 = vmatprep.subr.bf16.mxu0 0
        %1007 = vmatpush1.bf16.msra.mxu0 %v988
        %1008 = vmatprep.subr.bf16.mxu0 0
        %1009 = vmatpush1.bf16.msra.mxu0 %v987
        %1010 = vmatprep.subr.bf16.mxu0 0
        %1011 = vmatpush2.bf16.msra.mxu0 0
        %1012 = vmatprep.subr.bf16.mxu0 0
        %1013 = vmatpush2.bf16.msra.mxu0 0
        %1014 = vmatprep.subr.bf16.mxu0 0
        %1015 = vmatpush2.bf16.msra.mxu0 0
        %1016 = vmatprep.subr.bf16.mxu0 0
        %1017 = vmatpush2.bf16.msra.mxu0 0
        %1018 = vmatprep.subr.bf16.mxu0 0
        %1019 = vmatpush2.bf16.msra.mxu0 0
        %1020 = vmatprep.subr.bf16.mxu0 0
        %1021 = vmatpush2.bf16.msra.mxu0 0
        %1022 = vmatprep.subr.bf16.mxu0 0
        %1023 = vmatpush2.bf16.msra.mxu0 0
        %1024 = vmatprep.subr.bf16.mxu0 0
        %1025 = vmatpush2.bf16.msra.mxu0 0
        %1026 = vmatprep.mubr.bf16.mxu0 0
        %1027 = vmatmul.mubr.bf16.gmra.mxu0 %v992
        %v1028 = vpop.f32.mrf.mxu0
        %v1029 = vadd.f32 0.0, %v1028
        %v1030 = vpop.f32.mrf.mxu0
        %v1031 = vpop.f32.mrf.mxu0
        %v1032 = vadd.f32 0.0, %v1031
        %v1033 = vpop.f32.mrf.mxu0
        %1034 = vdwg.mxu0
        %v1035 = vadd.f32 %v965, %v1029
        %v1036 = vadd.f32 %v966, %v1032
        %s1037 = scalar_lea.vmem [#allocation2], 128
        %v1038 = vld [vmem:[%s1037] sm:$0xf]
        %v1039 = vld [vmem:[%s1037 + $0x4] sm:$0xf]
        %v1040 = vld [vmem:[%s1037 + $0x8] sm:$0xf]
        %v1041 = vld [vmem:[%s1037 + $0xc] sm:$0xf]
        %v1046 = vunpack.c.l.b16 %v1038
        %v1047 = vunpack.c.l.b16 %v1039
        %v1048 = vunpack.c.l.b16 %v1040
        %v1049 = vunpack.c.l.b16 %v1041
        %v1050 = vpack.c.b16 %v1047, %v1046
        %v1051 = vpack.c.b16 %v1049, %v1048
        %v1055 = vsel %vm472, %v890, 0
        %1057 = vmatprep.subr.bf16.mxu0 0
        %1058 = vmatpush1.bf16.msra.mxu0 0
        %1059 = vmatprep.subr.bf16.mxu0 0
        %1060 = vmatpush1.bf16.msra.mxu0 0
        %1061 = vmatprep.subr.bf16.mxu0 0
        %1062 = vmatpush1.bf16.msra.mxu0 0
        %1063 = vmatprep.subr.bf16.mxu0 0
        %1064 = vmatpush1.bf16.msra.mxu0 0
        %1065 = vmatprep.subr.bf16.mxu0 0
        %1066 = vmatpush1.bf16.msra.mxu0 0
        %1067 = vmatprep.subr.bf16.mxu0 0
        %1068 = vmatpush1.bf16.msra.mxu0 0
        %1069 = vmatprep.subr.bf16.mxu0 0
        %1070 = vmatpush1.bf16.msra.mxu0 %v1051
        %1071 = vmatprep.subr.bf16.mxu0 0
        %1072 = vmatpush1.bf16.msra.mxu0 %v1050
        %1073 = vmatprep.subr.bf16.mxu0 0
        %1074 = vmatpush2.bf16.msra.mxu0 0
        %1075 = vmatprep.subr.bf16.mxu0 0
        %1076 = vmatpush2.bf16.msra.mxu0 0
        %1077 = vmatprep.subr.bf16.mxu0 0
        %1078 = vmatpush2.bf16.msra.mxu0 0
        %1079 = vmatprep.subr.bf16.mxu0 0
        %1080 = vmatpush2.bf16.msra.mxu0 0
        %1081 = vmatprep.subr.bf16.mxu0 0
        %1082 = vmatpush2.bf16.msra.mxu0 0
        %1083 = vmatprep.subr.bf16.mxu0 0
        %1084 = vmatpush2.bf16.msra.mxu0 0
        %1085 = vmatprep.subr.bf16.mxu0 0
        %1086 = vmatpush2.bf16.msra.mxu0 0
        %1087 = vmatprep.subr.bf16.mxu0 0
        %1088 = vmatpush2.bf16.msra.mxu0 0
        %1089 = vmatprep.mubr.bf16.mxu0 0
        %1090 = vmatmul.mubr.bf16.gmra.mxu0 %v1055
        %v1091 = vpop.f32.mrf.mxu0
        %v1092 = vadd.f32 0.0, %v1091
        %v1093 = vpop.f32.mrf.mxu0
        %v1094 = vpop.f32.mrf.mxu0
        %v1095 = vadd.f32 0.0, %v1094
        %v1096 = vpop.f32.mrf.mxu0
        %1097 = vdwg.mxu0
        %v1098 = vadd.f32 %v1035, %v1092
        %v1099 = vadd.f32 %v1036, %v1095
        %v1100 = vrot.slane %v888, 1
        %v1101 = vrot.slane %v889, 1
        %v1102 = vsel %vm655, %v1100, %v1101
        %v1103 = vsel %vm655, %v1101, %v1100
        %v1104 = vmul.f32 %v1102, %v385
        %v1105 = vmul.f32 %v1103, %v386
        %v1106 = vpack.c.bf16 %v1105, %v1104
        %s1107 = scalar_lea.vmem [#allocation2], 144
        %v1108 = vld [vmem:[%s1107] sm:$0xf]
        %v1109 = vld [vmem:[%s1107 + $0x4] sm:$0xf]
        %v1110 = vld [vmem:[%s1107 + $0x8] sm:$0xf]
        %v1111 = vld [vmem:[%s1107 + $0xc] sm:$0xf]
        %v1116 = vunpack.c.l.b16 %v1108
        %v1117 = vunpack.c.l.b16 %v1109
        %v1118 = vunpack.c.l.b16 %v1110
        %v1119 = vunpack.c.l.b16 %v1111
        %v1120 = vpack.c.b16 %v1117, %v1116
        %v1121 = vpack.c.b16 %v1119, %v1118
        %v1125 = vsel %vm472, %v1106, 0
        %1127 = vmatprep.subr.bf16.mxu0 0
        %1128 = vmatpush1.bf16.msra.mxu0 0
        %1129 = vmatprep.subr.bf16.mxu0 0
        %1130 = vmatpush1.bf16.msra.mxu0 0
        %1131 = vmatprep.subr.bf16.mxu0 0
        %1132 = vmatpush1.bf16.msra.mxu0 0
        %1133 = vmatprep.subr.bf16.mxu0 0
        %1134 = vmatpush1.bf16.msra.mxu0 0
        %1135 = vmatprep.subr.bf16.mxu0 0
        %1136 = vmatpush1.bf16.msra.mxu0 0
        %1137 = vmatprep.subr.bf16.mxu0 0
        %1138 = vmatpush1.bf16.msra.mxu0 0
        %1139 = vmatprep.subr.bf16.mxu0 0
        %1140 = vmatpush1.bf16.msra.mxu0 %v1121
        %1141 = vmatprep.subr.bf16.mxu0 0
        %1142 = vmatpush1.bf16.msra.mxu0 %v1120
        %1143 = vmatprep.subr.bf16.mxu0 0
        %1144 = vmatpush2.bf16.msra.mxu0 0
        %1145 = vmatprep.subr.bf16.mxu0 0
        %1146 = vmatpush2.bf16.msra.mxu0 0
        %1147 = vmatprep.subr.bf16.mxu0 0
        %1148 = vmatpush2.bf16.msra.mxu0 0
        %1149 = vmatprep.subr.bf16.mxu0 0
        %1150 = vmatpush2.bf16.msra.mxu0 0
        %1151 = vmatprep.subr.bf16.mxu0 0
        %1152 = vmatpush2.bf16.msra.mxu0 0
        %1153 = vmatprep.subr.bf16.mxu0 0
        %1154 = vmatpush2.bf16.msra.mxu0 0
        %1155 = vmatprep.subr.bf16.mxu0 0
        %1156 = vmatpush2.bf16.msra.mxu0 0
        %1157 = vmatprep.subr.bf16.mxu0 0
        %1158 = vmatpush2.bf16.msra.mxu0 0
        %1159 = vmatprep.mubr.bf16.mxu0 0
        %1160 = vmatmul.mubr.bf16.gmra.mxu0 %v1125
        %v1161 = vpop.f32.mrf.mxu0
        %v1162 = vadd.f32 0.0, %v1161
        %v1163 = vpop.f32.mrf.mxu0
        %v1164 = vpop.f32.mrf.mxu0
        %v1165 = vadd.f32 0.0, %v1164
        %v1166 = vpop.f32.mrf.mxu0
        %1167 = vdwg.mxu0
        %v1168 = vadd.f32 %v1098, %v1162
        %v1169 = vadd.f32 %v1099, %v1165
        %v1170 = vrot.slane %v888, 2
        %v1171 = vrot.slane %v889, 2
        %v1172 = vsel %vm726, %v1170, %v1171
        %v1173 = vsel %vm726, %v1171, %v1170
        %v1174 = vmul.f32 %v1172, %v397
        %v1175 = vmul.f32 %v1173, %v398
        %v1176 = vpack.c.bf16 %v1175, %v1174
        %s1177 = scalar_lea.vmem [#allocation2], 160
        %v1178 = vld [vmem:[%s1177] sm:$0xf]
        %v1179 = vld [vmem:[%s1177 + $0x4] sm:$0xf]
        %v1180 = vld [vmem:[%s1177 + $0x8] sm:$0xf]
        %v1181 = vld [vmem:[%s1177 + $0xc] sm:$0xf]
        %v1186 = vunpack.c.l.b16 %v1178
        %v1187 = vunpack.c.l.b16 %v1179
        %v1188 = vunpack.c.l.b16 %v1180
        %v1189 = vunpack.c.l.b16 %v1181
        %v1190 = vpack.c.b16 %v1187, %v1186
        %v1191 = vpack.c.b16 %v1189, %v1188
        %v1195 = vsel %vm472, %v1176, 0
        %1197 = vmatprep.subr.bf16.mxu0 0
        %1198 = vmatpush1.bf16.msra.mxu0 0
        %1199 = vmatprep.subr.bf16.mxu0 0
        %1200 = vmatpush1.bf16.msra.mxu0 0
        %1201 = vmatprep.subr.bf16.mxu0 0
        %1202 = vmatpush1.bf16.msra.mxu0 0
        %1203 = vmatprep.subr.bf16.mxu0 0
        %1204 = vmatpush1.bf16.msra.mxu0 0
        %1205 = vmatprep.subr.bf16.mxu0 0
        %1206 = vmatpush1.bf16.msra.mxu0 0
        %1207 = vmatprep.subr.bf16.mxu0 0
        %1208 = vmatpush1.bf16.msra.mxu0 0
        %1209 = vmatprep.subr.bf16.mxu0 0
        %1210 = vmatpush1.bf16.msra.mxu0 %v1191
        %1211 = vmatprep.subr.bf16.mxu0 0
        %1212 = vmatpush1.bf16.msra.mxu0 %v1190
        %1213 = vmatprep.subr.bf16.mxu0 0
        %1214 = vmatpush2.bf16.msra.mxu0 0
        %1215 = vmatprep.subr.bf16.mxu0 0
        %1216 = vmatpush2.bf16.msra.mxu0 0
        %1217 = vmatprep.subr.bf16.mxu0 0
        %1218 = vmatpush2.bf16.msra.mxu0 0
        %1219 = vmatprep.subr.bf16.mxu0 0
        %1220 = vmatpush2.bf16.msra.mxu0 0
        %1221 = vmatprep.subr.bf16.mxu0 0
        %1222 = vmatpush2.bf16.msra.mxu0 0
        %1223 = vmatprep.subr.bf16.mxu0 0
        %1224 = vmatpush2.bf16.msra.mxu0 0
        %1225 = vmatprep.subr.bf16.mxu0 0
        %1226 = vmatpush2.bf16.msra.mxu0 0
        %1227 = vmatprep.subr.bf16.mxu0 0
        %1228 = vmatpush2.bf16.msra.mxu0 0
        %1229 = vmatprep.mubr.bf16.mxu0 0
        %1230 = vmatmul.mubr.bf16.gmra.mxu0 %v1195
        %v1231 = vpop.f32.mrf.mxu0
        %v1232 = vadd.f32 0.0, %v1231
        %v1233 = vpop.f32.mrf.mxu0
        %v1234 = vpop.f32.mrf.mxu0
        %v1235 = vadd.f32 0.0, %v1234
        %v1236 = vpop.f32.mrf.mxu0
        %1237 = vdwg.mxu0
        %v1238 = vadd.f32 %v1168, %v1232
        %v1239 = vadd.f32 %v1169, %v1235
        %v1240 = vtanh.pop %v1238
        %v1241 = vtanh.pop %v1239
        %v1242 = vxor.u32 %v1238, 2147483648
        %v1243 = vxor.u32 %v1239, 2147483648
        %v1244 = vmul.f32 %v1242, 1.442695
        %v1245 = vpow.pop %v1244
        %v1246 = vmul.f32 %v1243, 1.442695
        %v1247 = vpow.pop %v1246
        %v1248 = vadd.f32 %v1245, 1.0
        %v1249 = vadd.f32 %v1247, 1.0
        %v1250 = vrcp.pop %v1248
        %v1251 = vmul.f32 1.0, %v1250
        %v1252 = vrcp.pop %v1249
        %v1253 = vmul.f32 1.0, %v1252
        %1256 = vrot.lane.b32.xlu0 %v1251, 96
        %v1257 = vpop.permute.xlu0 %1256
        %1258 = vrot.lane.b32.xlu0 %v1253, 96
        %v1259 = vpop.permute.xlu0 %1258
        %v1262 = vmul.f32 %v1240, %v1257
        %v1263 = vmul.f32 %v1241, %v1259
        %v1264 = vpack.c.bf16 %v1263, %v1262
        %s1265 = scalar_lea.vmem [#allocation2], 176
        %v1266 = vld [vmem:[%s1265] sm:$0xf]
        %v1267 = vld [vmem:[%s1265 + $0x4] sm:$0xf]
        %v1268 = vld [vmem:[%s1265 + $0x8] sm:$0xf]
        %v1269 = vld [vmem:[%s1265 + $0xc] sm:$0xf]
        %v1270 = vld [vmem:[%s891 + $0x1] sm:$0x1]
        %v1271 = vlaneseq
        %v1272 = vshrl.u32 %v1271, 7
        %v1273 = vsub.s32 0, %v1272
        %v1274 = vrot.slane %v1270, %v1273
        %v1279 = vunpack.c.l.b16 %v1266
        %v1280 = vunpack.c.l.b16 %v1267
        %v1281 = vunpack.c.l.b16 %v1268
        %v1282 = vunpack.c.l.b16 %v1269
        %v1283 = vpack.c.b16 %v1280, %v1279
        %v1284 = vpack.c.b16 %v1282, %v1281
        %v1288 = vsel %vm472, %v1264, 0
        %1290 = vmatprep.subr.bf16.mxu0 0
        %1291 = vmatpush1.bf16.msra.mxu0 0
        %1292 = vmatprep.subr.bf16.mxu0 0
        %1293 = vmatpush1.bf16.msra.mxu0 0
        %1294 = vmatprep.subr.bf16.mxu0 0
        %1295 = vmatpush1.bf16.msra.mxu0 0
        %1296 = vmatprep.subr.bf16.mxu0 0
        %1297 = vmatpush1.bf16.msra.mxu0 0
        %1298 = vmatprep.subr.bf16.mxu0 0
        %1299 = vmatpush1.bf16.msra.mxu0 0
        %1300 = vmatprep.subr.bf16.mxu0 0
        %1301 = vmatpush1.bf16.msra.mxu0 0
        %1302 = vmatprep.subr.bf16.mxu0 0
        %1303 = vmatpush1.bf16.msra.mxu0 %v1284
        %1304 = vmatprep.subr.bf16.mxu0 0
        %1305 = vmatpush1.bf16.msra.mxu0 %v1283
        %1306 = vmatprep.subr.bf16.mxu0 0
        %1307 = vmatpush2.bf16.msra.mxu0 0
        %1308 = vmatprep.subr.bf16.mxu0 0
        %1309 = vmatpush2.bf16.msra.mxu0 0
        %1310 = vmatprep.subr.bf16.mxu0 0
        %1311 = vmatpush2.bf16.msra.mxu0 0
        %1312 = vmatprep.subr.bf16.mxu0 0
        %1313 = vmatpush2.bf16.msra.mxu0 0
        %1314 = vmatprep.subr.bf16.mxu0 0
        %1315 = vmatpush2.bf16.msra.mxu0 0
        %1316 = vmatprep.subr.bf16.mxu0 0
        %1317 = vmatpush2.bf16.msra.mxu0 0
        %1318 = vmatprep.subr.bf16.mxu0 0
        %1319 = vmatpush2.bf16.msra.mxu0 0
        %1320 = vmatprep.subr.bf16.mxu0 0
        %1321 = vmatpush2.bf16.msra.mxu0 0
        %1322 = vmatprep.mubr.bf16.mxu0 0
        %1323 = vmatmul.mubr.bf16.gmra.mxu0 %v1288
        %v1324 = vpop.f32.mrf.mxu0
        %v1325 = vadd.f32 %v1274, %v1324
        %v1326 = vpop.f32.mrf.mxu0
        %v1327 = vpop.f32.mrf.mxu0
        %v1328 = vadd.f32 %v1274, %v1327
        %v1329 = vpop.f32.mrf.mxu0
        %1330 = vdwg.mxu0
        %v1331 = vadd.f32 %v888, %v1325
        %v1332 = vadd.f32 %v889, %v1328
        %v1333 = vmul.f32 %v1331, %v341
        %v1334 = vmul.f32 %v1332, %v346
        %v1335 = vadd.f32 %v880, %v1325
        %v1336 = vadd.f32 %v883, %v1328
        %v1337 = vpack.c.bf16 %v1334, %v1333
        %s1338 = scalar_lea.vmem %s3, 4
        %v1339 = vld [vmem:[%s1338] sm:$0x1]
        %v1340 = vlaneseq
        %v1341 = vshrl.u32 %v1340, 7
        %v1342 = vsub.s32 0, %v1341
        %v1343 = vrot.slane %v1339, %v1342
        %v1344 = vrot.slane %v1333, 6
        %v1345 = vrot.slane %v1334, 6
        %v1346 = vsel %vm450, %v1344, %v1345
        %v1347 = vsel %vm450, %v1345, %v1344
        %v1348 = vmul.f32 %v1347, %v361
        %v1349 = vmul.f32 %v1346, %v362
        %v1350 = vpack.c.bf16 %v1349, %v1348
        %s1351 = scalar_lea.vmem [#allocation2], 192
        %v1352 = vld [vmem:[%s1351] sm:$0xf]
        %v1353 = vld [vmem:[%s1351 + $0x4] sm:$0xf]
        %v1354 = vld [vmem:[%s1351 + $0x8] sm:$0xf]
        %v1355 = vld [vmem:[%s1351 + $0xc] sm:$0xf]
        %v1360 = vunpack.c.l.b16 %v1352
        %v1361 = vunpack.c.l.b16 %v1353
        %v1362 = vunpack.c.l.b16 %v1354
        %v1363 = vunpack.c.l.b16 %v1355
        %v1364 = vpack.c.b16 %v1361, %v1360
        %v1365 = vpack.c.b16 %v1363, %v1362
        %v1369 = vsel %vm472, %v1350, 0
        %1371 = vmatprep.subr.bf16.mxu0 0
        %1372 = vmatpush1.bf16.msra.mxu0 0
        %1373 = vmatprep.subr.bf16.mxu0 0
        %1374 = vmatpush1.bf16.msra.mxu0 0
        %1375 = vmatprep.subr.bf16.mxu0 0
        %1376 = vmatpush1.bf16.msra.mxu0 0
        %1377 = vmatprep.subr.bf16.mxu0 0
        %1378 = vmatpush1.bf16.msra.mxu0 0
        %1379 = vmatprep.subr.bf16.mxu0 0
        %1380 = vmatpush1.bf16.msra.mxu0 0
        %1381 = vmatprep.subr.bf16.mxu0 0
        %1382 = vmatpush1.bf16.msra.mxu0 0
        %1383 = vmatprep.subr.bf16.mxu0 0
        %1384 = vmatpush1.bf16.msra.mxu0 %v1365
        %1385 = vmatprep.subr.bf16.mxu0 0
        %1386 = vmatpush1.bf16.msra.mxu0 %v1364
        %1387 = vmatprep.subr.bf16.mxu0 0
        %1388 = vmatpush2.bf16.msra.mxu0 0
        %1389 = vmatprep.subr.bf16.mxu0 0
        %1390 = vmatpush2.bf16.msra.mxu0 0
        %1391 = vmatprep.subr.bf16.mxu0 0
        %1392 = vmatpush2.bf16.msra.mxu0 0
        %1393 = vmatprep.subr.bf16.mxu0 0
        %1394 = vmatpush2.bf16.msra.mxu0 0
        %1395 = vmatprep.subr.bf16.mxu0 0
        %1396 = vmatpush2.bf16.msra.mxu0 0
        %1397 = vmatprep.subr.bf16.mxu0 0
        %1398 = vmatpush2.bf16.msra.mxu0 0
        %1399 = vmatprep.subr.bf16.mxu0 0
        %1400 = vmatpush2.bf16.msra.mxu0 0
        %1401 = vmatprep.subr.bf16.mxu0 0
        %1402 = vmatpush2.bf16.msra.mxu0 0
        %1403 = vmatprep.mubr.bf16.mxu0 0
        %1404 = vmatmul.mubr.bf16.gmra.mxu0 %v1369
        %v1405 = vpop.f32.mrf.mxu0
        %v1406 = vadd.f32 0.0, %v1405
        %v1407 = vpop.f32.mrf.mxu0
        %v1408 = vpop.f32.mrf.mxu0
        %v1409 = vadd.f32 0.0, %v1408
        %v1410 = vpop.f32.mrf.mxu0
        %1411 = vdwg.mxu0
        %v1412 = vadd.f32 %v1343, %v1406
        %v1413 = vadd.f32 %v1343, %v1409
        %v1414 = vrot.slane %v1333, 7
        %v1415 = vrot.slane %v1334, 7
        %v1416 = vsel %vm521, %v1414, %v1415
        %v1417 = vsel %vm521, %v1415, %v1414
        %v1418 = vmul.f32 %v1417, %v373
        %v1419 = vmul.f32 %v1416, %v374
        %v1420 = vpack.c.bf16 %v1419, %v1418
        %s1421 = scalar_lea.vmem [#allocation2], 208
        %v1422 = vld [vmem:[%s1421] sm:$0xf]
        %v1423 = vld [vmem:[%s1421 + $0x4] sm:$0xf]
        %v1424 = vld [vmem:[%s1421 + $0x8] sm:$0xf]
        %v1425 = vld [vmem:[%s1421 + $0xc] sm:$0xf]
        %v1430 = vunpack.c.l.b16 %v1422
        %v1431 = vunpack.c.l.b16 %v1423
        %v1432 = vunpack.c.l.b16 %v1424
        %v1433 = vunpack.c.l.b16 %v1425
        %v1434 = vpack.c.b16 %v1431, %v1430
        %v1435 = vpack.c.b16 %v1433, %v1432
        %v1439 = vsel %vm472, %v1420, 0
        %1441 = vmatprep.subr.bf16.mxu0 0
        %1442 = vmatpush1.bf16.msra.mxu0 0
        %1443 = vmatprep.subr.bf16.mxu0 0
        %1444 = vmatpush1.bf16.msra.mxu0 0
        %1445 = vmatprep.subr.bf16.mxu0 0
        %1446 = vmatpush1.bf16.msra.mxu0 0
        %1447 = vmatprep.subr.bf16.mxu0 0
        %1448 = vmatpush1.bf16.msra.mxu0 0
        %1449 = vmatprep.subr.bf16.mxu0 0
        %1450 = vmatpush1.bf16.msra.mxu0 0
        %1451 = vmatprep.subr.bf16.mxu0 0
        %1452 = vmatpush1.bf16.msra.mxu0 0
        %1453 = vmatprep.subr.bf16.mxu0 0
        %1454 = vmatpush1.bf16.msra.mxu0 %v1435
        %1455 = vmatprep.subr.bf16.mxu0 0
        %1456 = vmatpush1.bf16.msra.mxu0 %v1434
        %1457 = vmatprep.subr.bf16.mxu0 0
        %1458 = vmatpush2.bf16.msra.mxu0 0
        %1459 = vmatprep.subr.bf16.mxu0 0
        %1460 = vmatpush2.bf16.msra.mxu0 0
        %1461 = vmatprep.subr.bf16.mxu0 0
        %1462 = vmatpush2.bf16.msra.mxu0 0
        %1463 = vmatprep.subr.bf16.mxu0 0
        %1464 = vmatpush2.bf16.msra.mxu0 0
        %1465 = vmatprep.subr.bf16.mxu0 0
        %1466 = vmatpush2.bf16.msra.mxu0 0
        %1467 = vmatprep.subr.bf16.mxu0 0
        %1468 = vmatpush2.bf16.msra.mxu0 0
        %1469 = vmatprep.subr.bf16.mxu0 0
        %1470 = vmatpush2.bf16.msra.mxu0 0
        %1471 = vmatprep.subr.bf16.mxu0 0
        %1472 = vmatpush2.bf16.msra.mxu0 0
        %1473 = vmatprep.mubr.bf16.mxu0 0
        %1474 = vmatmul.mubr.bf16.gmra.mxu0 %v1439
        %v1475 = vpop.f32.mrf.mxu0
        %v1476 = vadd.f32 0.0, %v1475
        %v1477 = vpop.f32.mrf.mxu0
        %v1478 = vpop.f32.mrf.mxu0
        %v1479 = vadd.f32 0.0, %v1478
        %v1480 = vpop.f32.mrf.mxu0
        %1481 = vdwg.mxu0
        %v1482 = vadd.f32 %v1412, %v1476
        %v1483 = vadd.f32 %v1413, %v1479
        %s1484 = scalar_lea.vmem [#allocation2], 224
        %v1485 = vld [vmem:[%s1484] sm:$0xf]
        %v1486 = vld [vmem:[%s1484 + $0x4] sm:$0xf]
        %v1487 = vld [vmem:[%s1484 + $0x8] sm:$0xf]
        %v1488 = vld [vmem:[%s1484 + $0xc] sm:$0xf]
        %v1493 = vunpack.c.l.b16 %v1485
        %v1494 = vunpack.c.l.b16 %v1486
        %v1495 = vunpack.c.l.b16 %v1487
        %v1496 = vunpack.c.l.b16 %v1488
        %v1497 = vpack.c.b16 %v1494, %v1493
        %v1498 = vpack.c.b16 %v1496, %v1495
        %v1502 = vsel %vm472, %v1337, 0
        %1504 = vmatprep.subr.bf16.mxu0 0
        %1505 = vmatpush1.bf16.msra.mxu0 0
        %1506 = vmatprep.subr.bf16.mxu0 0
        %1507 = vmatpush1.bf16.msra.mxu0 0
        %1508 = vmatprep.subr.bf16.mxu0 0
        %1509 = vmatpush1.bf16.msra.mxu0 0
        %1510 = vmatprep.subr.bf16.mxu0 0
        %1511 = vmatpush1.bf16.msra.mxu0 0
        %1512 = vmatprep.subr.bf16.mxu0 0
        %1513 = vmatpush1.bf16.msra.mxu0 0
        %1514 = vmatprep.subr.bf16.mxu0 0
        %1515 = vmatpush1.bf16.msra.mxu0 0
        %1516 = vmatprep.subr.bf16.mxu0 0
        %1517 = vmatpush1.bf16.msra.mxu0 %v1498
        %1518 = vmatprep.subr.bf16.mxu0 0
        %1519 = vmatpush1.bf16.msra.mxu0 %v1497
        %1520 = vmatprep.subr.bf16.mxu0 0
        %1521 = vmatpush2.bf16.msra.mxu0 0
        %1522 = vmatprep.subr.bf16.mxu0 0
        %1523 = vmatpush2.bf16.msra.mxu0 0
        %1524 = vmatprep.subr.bf16.mxu0 0
        %1525 = vmatpush2.bf16.msra.mxu0 0
        %1526 = vmatprep.subr.bf16.mxu0 0
        %1527 = vmatpush2.bf16.msra.mxu0 0
        %1528 = vmatprep.subr.bf16.mxu0 0
        %1529 = vmatpush2.bf16.msra.mxu0 0
        %1530 = vmatprep.subr.bf16.mxu0 0
        %1531 = vmatpush2.bf16.msra.mxu0 0
        %1532 = vmatprep.subr.bf16.mxu0 0
        %1533 = vmatpush2.bf16.msra.mxu0 0
        %1534 = vmatprep.subr.bf16.mxu0 0
        %1535 = vmatpush2.bf16.msra.mxu0 0
        %1536 = vmatprep.mubr.bf16.mxu0 0
        %1537 = vmatmul.mubr.bf16.gmra.mxu0 %v1502
        %v1538 = vpop.f32.mrf.mxu0
        %v1539 = vadd.f32 0.0, %v1538
        %v1540 = vpop.f32.mrf.mxu0
        %v1541 = vpop.f32.mrf.mxu0
        %v1542 = vadd.f32 0.0, %v1541
        %v1543 = vpop.f32.mrf.mxu0
        %1544 = vdwg.mxu0
        %v1545 = vadd.f32 %v1482, %v1539
        %v1546 = vadd.f32 %v1483, %v1542
        %v1547 = vrot.slane %v1333, 1
        %v1548 = vrot.slane %v1334, 1
        %v1549 = vsel %vm655, %v1547, %v1548
        %v1550 = vsel %vm655, %v1548, %v1547
        %v1551 = vmul.f32 %v1549, %v385
        %v1552 = vmul.f32 %v1550, %v386
        %v1553 = vpack.c.bf16 %v1552, %v1551
        %s1554 = scalar_lea.vmem [#allocation2], 240
        %v1555 = vld [vmem:[%s1554] sm:$0xf]
        %v1556 = vld [vmem:[%s1554 + $0x4] sm:$0xf]
        %v1557 = vld [vmem:[%s1554 + $0x8] sm:$0xf]
        %v1558 = vld [vmem:[%s1554 + $0xc] sm:$0xf]
        %v1563 = vunpack.c.l.b16 %v1555
        %v1564 = vunpack.c.l.b16 %v1556
        %v1565 = vunpack.c.l.b16 %v1557
        %v1566 = vunpack.c.l.b16 %v1558
        %v1567 = vpack.c.b16 %v1564, %v1563
        %v1568 = vpack.c.b16 %v1566, %v1565
        %v1572 = vsel %vm472, %v1553, 0
        %1574 = vmatprep.subr.bf16.mxu0 0
        %1575 = vmatpush1.bf16.msra.mxu0 0
        %1576 = vmatprep.subr.bf16.mxu0 0
        %1577 = vmatpush1.bf16.msra.mxu0 0
        %1578 = vmatprep.subr.bf16.mxu0 0
        %1579 = vmatpush1.bf16.msra.mxu0 0
        %1580 = vmatprep.subr.bf16.mxu0 0
        %1581 = vmatpush1.bf16.msra.mxu0 0
        %1582 = vmatprep.subr.bf16.mxu0 0
        %1583 = vmatpush1.bf16.msra.mxu0 0
        %1584 = vmatprep.subr.bf16.mxu0 0
        %1585 = vmatpush1.bf16.msra.mxu0 0
        %1586 = vmatprep.subr.bf16.mxu0 0
        %1587 = vmatpush1.bf16.msra.mxu0 %v1568
        %1588 = vmatprep.subr.bf16.mxu0 0
        %1589 = vmatpush1.bf16.msra.mxu0 %v1567
        %1590 = vmatprep.subr.bf16.mxu0 0
        %1591 = vmatpush2.bf16.msra.mxu0 0
        %1592 = vmatprep.subr.bf16.mxu0 0
        %1593 = vmatpush2.bf16.msra.mxu0 0
        %1594 = vmatprep.subr.bf16.mxu0 0
        %1595 = vmatpush2.bf16.msra.mxu0 0
        %1596 = vmatprep.subr.bf16.mxu0 0
        %1597 = vmatpush2.bf16.msra.mxu0 0
        %1598 = vmatprep.subr.bf16.mxu0 0
        %1599 = vmatpush2.bf16.msra.mxu0 0
        %1600 = vmatprep.subr.bf16.mxu0 0
        %1601 = vmatpush2.bf16.msra.mxu0 0
        %1602 = vmatprep.subr.bf16.mxu0 0
        %1603 = vmatpush2.bf16.msra.mxu0 0
        %1604 = vmatprep.subr.bf16.mxu0 0
        %1605 = vmatpush2.bf16.msra.mxu0 0
        %1606 = vmatprep.mubr.bf16.mxu0 0
        %1607 = vmatmul.mubr.bf16.gmra.mxu0 %v1572
        %v1608 = vpop.f32.mrf.mxu0
        %v1609 = vadd.f32 0.0, %v1608
        %v1610 = vpop.f32.mrf.mxu0
        %v1611 = vpop.f32.mrf.mxu0
        %v1612 = vadd.f32 0.0, %v1611
        %v1613 = vpop.f32.mrf.mxu0
        %1614 = vdwg.mxu0
        %v1615 = vadd.f32 %v1545, %v1609
        %v1616 = vadd.f32 %v1546, %v1612
        %v1617 = vrot.slane %v1333, 2
        %v1618 = vrot.slane %v1334, 2
        %v1619 = vsel %vm726, %v1617, %v1618
        %v1620 = vsel %vm726, %v1618, %v1617
        %v1621 = vmul.f32 %v1619, %v397
        %v1622 = vmul.f32 %v1620, %v398
        %v1623 = vpack.c.bf16 %v1622, %v1621
        %s1624 = scalar_lea.vmem [#allocation2], 256
        %v1625 = vld [vmem:[%s1624] sm:$0xf]
        %v1626 = vld [vmem:[%s1624 + $0x4] sm:$0xf]
        %v1627 = vld [vmem:[%s1624 + $0x8] sm:$0xf]
        %v1628 = vld [vmem:[%s1624 + $0xc] sm:$0xf]
        %v1633 = vunpack.c.l.b16 %v1625
        %v1634 = vunpack.c.l.b16 %v1626
        %v1635 = vunpack.c.l.b16 %v1627
        %v1636 = vunpack.c.l.b16 %v1628
        %v1637 = vpack.c.b16 %v1634, %v1633
        %v1638 = vpack.c.b16 %v1636, %v1635
        %v1642 = vsel %vm472, %v1623, 0
        %1644 = vmatprep.subr.bf16.mxu0 0
        %1645 = vmatpush1.bf16.msra.mxu0 0
        %1646 = vmatprep.subr.bf16.mxu0 0
        %1647 = vmatpush1.bf16.msra.mxu0 0
        %1648 = vmatprep.subr.bf16.mxu0 0
        %1649 = vmatpush1.bf16.msra.mxu0 0
        %1650 = vmatprep.subr.bf16.mxu0 0
        %1651 = vmatpush1.bf16.msra.mxu0 0
        %1652 = vmatprep.subr.bf16.mxu0 0
        %1653 = vmatpush1.bf16.msra.mxu0 0
        %1654 = vmatprep.subr.bf16.mxu0 0
        %1655 = vmatpush1.bf16.msra.mxu0 0
        %1656 = vmatprep.subr.bf16.mxu0 0
        %1657 = vmatpush1.bf16.msra.mxu0 %v1638
        %1658 = vmatprep.subr.bf16.mxu0 0
        %1659 = vmatpush1.bf16.msra.mxu0 %v1637
        %1660 = vmatprep.subr.bf16.mxu0 0
        %1661 = vmatpush2.bf16.msra.mxu0 0
        %1662 = vmatprep.subr.bf16.mxu0 0
        %1663 = vmatpush2.bf16.msra.mxu0 0
        %1664 = vmatprep.subr.bf16.mxu0 0
        %1665 = vmatpush2.bf16.msra.mxu0 0
        %1666 = vmatprep.subr.bf16.mxu0 0
        %1667 = vmatpush2.bf16.msra.mxu0 0
        %1668 = vmatprep.subr.bf16.mxu0 0
        %1669 = vmatpush2.bf16.msra.mxu0 0
        %1670 = vmatprep.subr.bf16.mxu0 0
        %1671 = vmatpush2.bf16.msra.mxu0 0
        %1672 = vmatprep.subr.bf16.mxu0 0
        %1673 = vmatpush2.bf16.msra.mxu0 0
        %1674 = vmatprep.subr.bf16.mxu0 0
        %1675 = vmatpush2.bf16.msra.mxu0 0
        %1676 = vmatprep.mubr.bf16.mxu0 0
        %1677 = vmatmul.mubr.bf16.gmra.mxu0 %v1642
        %v1678 = vpop.f32.mrf.mxu0
        %v1679 = vadd.f32 0.0, %v1678
        %v1680 = vpop.f32.mrf.mxu0
        %v1681 = vpop.f32.mrf.mxu0
        %v1682 = vadd.f32 0.0, %v1681
        %v1683 = vpop.f32.mrf.mxu0
        %1684 = vdwg.mxu0
        %v1685 = vadd.f32 %v1615, %v1679
        %v1686 = vadd.f32 %v1616, %v1682
        %v1687 = vtanh.pop %v1685
        %v1688 = vtanh.pop %v1686
        %v1689 = vxor.u32 %v1685, 2147483648
        %v1690 = vxor.u32 %v1686, 2147483648
        %v1691 = vmul.f32 %v1689, 1.442695
        %v1692 = vpow.pop %v1691
        %v1693 = vmul.f32 %v1690, 1.442695
        %v1694 = vpow.pop %v1693
        %v1695 = vadd.f32 %v1692, 1.0
        %v1696 = vadd.f32 %v1694, 1.0
        %v1697 = vrcp.pop %v1695
        %v1698 = vmul.f32 1.0, %v1697
        %v1699 = vrcp.pop %v1696
        %v1700 = vmul.f32 1.0, %v1699
        %1703 = vrot.lane.b32.xlu0 %v1698, 96
        %v1704 = vpop.permute.xlu0 %1703
        %1705 = vrot.lane.b32.xlu0 %v1700, 96
        %v1706 = vpop.permute.xlu0 %1705
        %v1709 = vmul.f32 %v1687, %v1704
        %v1710 = vmul.f32 %v1688, %v1706
        %v1711 = vpack.c.bf16 %v1710, %v1709
        %s1712 = scalar_lea.vmem [#allocation2], 272
        %v1713 = vld [vmem:[%s1712] sm:$0xf]
        %v1714 = vld [vmem:[%s1712 + $0x4] sm:$0xf]
        %v1715 = vld [vmem:[%s1712 + $0x8] sm:$0xf]
        %v1716 = vld [vmem:[%s1712 + $0xc] sm:$0xf]
        %v1717 = vld [vmem:[%s1338 + $0x1] sm:$0x1]
        %v1718 = vlaneseq
        %v1719 = vshrl.u32 %v1718, 7
        %v1720 = vsub.s32 0, %v1719
        %v1721 = vrot.slane %v1717, %v1720
        %v1726 = vunpack.c.l.b16 %v1713
        %v1727 = vunpack.c.l.b16 %v1714
        %v1728 = vunpack.c.l.b16 %v1715
        %v1729 = vunpack.c.l.b16 %v1716
        %v1730 = vpack.c.b16 %v1727, %v1726
        %v1731 = vpack.c.b16 %v1729, %v1728
        %v1735 = vsel %vm472, %v1711, 0
        %1737 = vmatprep.subr.bf16.mxu0 0
        %1738 = vmatpush1.bf16.msra.mxu0 0
        %1739 = vmatprep.subr.bf16.mxu0 0
        %1740 = vmatpush1.bf16.msra.mxu0 0
        %1741 = vmatprep.subr.bf16.mxu0 0
        %1742 = vmatpush1.bf16.msra.mxu0 0
        %1743 = vmatprep.subr.bf16.mxu0 0
        %1744 = vmatpush1.bf16.msra.mxu0 0
        %1745 = vmatprep.subr.bf16.mxu0 0
        %1746 = vmatpush1.bf16.msra.mxu0 0
        %1747 = vmatprep.subr.bf16.mxu0 0
        %1748 = vmatpush1.bf16.msra.mxu0 0
        %1749 = vmatprep.subr.bf16.mxu0 0
        %1750 = vmatpush1.bf16.msra.mxu0 %v1731
        %1751 = vmatprep.subr.bf16.mxu0 0
        %1752 = vmatpush1.bf16.msra.mxu0 %v1730
        %1753 = vmatprep.subr.bf16.mxu0 0
        %1754 = vmatpush2.bf16.msra.mxu0 0
        %1755 = vmatprep.subr.bf16.mxu0 0
        %1756 = vmatpush2.bf16.msra.mxu0 0
        %1757 = vmatprep.subr.bf16.mxu0 0
        %1758 = vmatpush2.bf16.msra.mxu0 0
        %1759 = vmatprep.subr.bf16.mxu0 0
        %1760 = vmatpush2.bf16.msra.mxu0 0
        %1761 = vmatprep.subr.bf16.mxu0 0
        %1762 = vmatpush2.bf16.msra.mxu0 0
        %1763 = vmatprep.subr.bf16.mxu0 0
        %1764 = vmatpush2.bf16.msra.mxu0 0
        %1765 = vmatprep.subr.bf16.mxu0 0
        %1766 = vmatpush2.bf16.msra.mxu0 0
        %1767 = vmatprep.subr.bf16.mxu0 0
        %1768 = vmatpush2.bf16.msra.mxu0 0
        %1769 = vmatprep.mubr.bf16.mxu0 0
        %1770 = vmatmul.mubr.bf16.gmra.mxu0 %v1735
        %v1771 = vpop.f32.mrf.mxu0
        %v1772 = vadd.f32 %v1721, %v1771
        %v1773 = vpop.f32.mrf.mxu0
        %v1774 = vpop.f32.mrf.mxu0
        %v1775 = vadd.f32 %v1721, %v1774
        %v1776 = vpop.f32.mrf.mxu0
        %1777 = vdwg.mxu0
        %v1778 = vadd.f32 %v1333, %v1772
        %v1779 = vadd.f32 %v1334, %v1775
        %v1780 = vmul.f32 %v1778, %v341
        %v1781 = vmul.f32 %v1779, %v346
        %v1782 = vadd.f32 %v1335, %v1772
        %v1783 = vadd.f32 %v1336, %v1775
        %v1784 = vpack.c.bf16 %v1781, %v1780
        %s1785 = scalar_lea.vmem %s3, 6
        %v1786 = vld [vmem:[%s1785] sm:$0x1]
        %v1787 = vlaneseq
        %v1788 = vshrl.u32 %v1787, 7
        %v1789 = vsub.s32 0, %v1788
        %v1790 = vrot.slane %v1786, %v1789
        %v1791 = vrot.slane %v1780, 6
        %v1792 = vrot.slane %v1781, 6
        %v1793 = vsel %vm450, %v1791, %v1792
        %v1794 = vsel %vm450, %v1792, %v1791
        %v1795 = vmul.f32 %v1794, %v361
        %v1796 = vmul.f32 %v1793, %v362
        %v1797 = vpack.c.bf16 %v1796, %v1795
        %s1798 = scalar_lea.vmem [#allocation2], 288
        %v1799 = vld [vmem:[%s1798] sm:$0xf]
        %v1800 = vld [vmem:[%s1798 + $0x4] sm:$0xf]
        %v1801 = vld [vmem:[%s1798 + $0x8] sm:$0xf]
        %v1802 = vld [vmem:[%s1798 + $0xc] sm:$0xf]
        %v1807 = vunpack.c.l.b16 %v1799
        %v1808 = vunpack.c.l.b16 %v1800
        %v1809 = vunpack.c.l.b16 %v1801
        %v1810 = vunpack.c.l.b16 %v1802
        %v1811 = vpack.c.b16 %v1808, %v1807
        %v1812 = vpack.c.b16 %v1810, %v1809
        %v1816 = vsel %vm472, %v1797, 0
        %1818 = vmatprep.subr.bf16.mxu0 0
        %1819 = vmatpush1.bf16.msra.mxu0 0
        %1820 = vmatprep.subr.bf16.mxu0 0
        %1821 = vmatpush1.bf16.msra.mxu0 0
        %1822 = vmatprep.subr.bf16.mxu0 0
        %1823 = vmatpush1.bf16.msra.mxu0 0
        %1824 = vmatprep.subr.bf16.mxu0 0
        %1825 = vmatpush1.bf16.msra.mxu0 0
        %1826 = vmatprep.subr.bf16.mxu0 0
        %1827 = vmatpush1.bf16.msra.mxu0 0
        %1828 = vmatprep.subr.bf16.mxu0 0
        %1829 = vmatpush1.bf16.msra.mxu0 0
        %1830 = vmatprep.subr.bf16.mxu0 0
        %1831 = vmatpush1.bf16.msra.mxu0 %v1812
        %1832 = vmatprep.subr.bf16.mxu0 0
        %1833 = vmatpush1.bf16.msra.mxu0 %v1811
        %1834 = vmatprep.subr.bf16.mxu0 0
        %1835 = vmatpush2.bf16.msra.mxu0 0
        %1836 = vmatprep.subr.bf16.mxu0 0
        %1837 = vmatpush2.bf16.msra.mxu0 0
        %1838 = vmatprep.subr.bf16.mxu0 0
        %1839 = vmatpush2.bf16.msra.mxu0 0
        %1840 = vmatprep.subr.bf16.mxu0 0
        %1841 = vmatpush2.bf16.msra.mxu0 0
        %1842 = vmatprep.subr.bf16.mxu0 0
        %1843 = vmatpush2.bf16.msra.mxu0 0
        %1844 = vmatprep.subr.bf16.mxu0 0
        %1845 = vmatpush2.bf16.msra.mxu0 0
        %1846 = vmatprep.subr.bf16.mxu0 0
        %1847 = vmatpush2.bf16.msra.mxu0 0
        %1848 = vmatprep.subr.bf16.mxu0 0
        %1849 = vmatpush2.bf16.msra.mxu0 0
        %1850 = vmatprep.mubr.bf16.mxu0 0
        %1851 = vmatmul.mubr.bf16.gmra.mxu0 %v1816
        %v1852 = vpop.f32.mrf.mxu0
        %v1853 = vadd.f32 0.0, %v1852
        %v1854 = vpop.f32.mrf.mxu0
        %v1855 = vpop.f32.mrf.mxu0
        %v1856 = vadd.f32 0.0, %v1855
        %v1857 = vpop.f32.mrf.mxu0
        %1858 = vdwg.mxu0
        %v1859 = vadd.f32 %v1790, %v1853
        %v1860 = vadd.f32 %v1790, %v1856
        %v1861 = vrot.slane %v1780, 7
        %v1862 = vrot.slane %v1781, 7
        %v1863 = vsel %vm521, %v1861, %v1862
        %v1864 = vsel %vm521, %v1862, %v1861
        %v1865 = vmul.f32 %v1864, %v373
        %v1866 = vmul.f32 %v1863, %v374
        %v1867 = vpack.c.bf16 %v1866, %v1865
        %s1868 = scalar_lea.vmem [#allocation2], 304
        %v1869 = vld [vmem:[%s1868] sm:$0xf]
        %v1870 = vld [vmem:[%s1868 + $0x4] sm:$0xf]
        %v1871 = vld [vmem:[%s1868 + $0x8] sm:$0xf]
        %v1872 = vld [vmem:[%s1868 + $0xc] sm:$0xf]
        %v1877 = vunpack.c.l.b16 %v1869
        %v1878 = vunpack.c.l.b16 %v1870
        %v1879 = vunpack.c.l.b16 %v1871
        %v1880 = vunpack.c.l.b16 %v1872
        %v1881 = vpack.c.b16 %v1878, %v1877
        %v1882 = vpack.c.b16 %v1880, %v1879
        %v1886 = vsel %vm472, %v1867, 0
        %1888 = vmatprep.subr.bf16.mxu0 0
        %1889 = vmatpush1.bf16.msra.mxu0 0
        %1890 = vmatprep.subr.bf16.mxu0 0
        %1891 = vmatpush1.bf16.msra.mxu0 0
        %1892 = vmatprep.subr.bf16.mxu0 0
        %1893 = vmatpush1.bf16.msra.mxu0 0
        %1894 = vmatprep.subr.bf16.mxu0 0
        %1895 = vmatpush1.bf16.msra.mxu0 0
        %1896 = vmatprep.subr.bf16.mxu0 0
        %1897 = vmatpush1.bf16.msra.mxu0 0
        %1898 = vmatprep.subr.bf16.mxu0 0
        %1899 = vmatpush1.bf16.msra.mxu0 0
        %1900 = vmatprep.subr.bf16.mxu0 0
        %1901 = vmatpush1.bf16.msra.mxu0 %v1882
        %1902 = vmatprep.subr.bf16.mxu0 0
        %1903 = vmatpush1.bf16.msra.mxu0 %v1881
        %1904 = vmatprep.subr.bf16.mxu0 0
        %1905 = vmatpush2.bf16.msra.mxu0 0
        %1906 = vmatprep.subr.bf16.mxu0 0
        %1907 = vmatpush2.bf16.msra.mxu0 0
        %1908 = vmatprep.subr.bf16.mxu0 0
        %1909 = vmatpush2.bf16.msra.mxu0 0
        %1910 = vmatprep.subr.bf16.mxu0 0
        %1911 = vmatpush2.bf16.msra.mxu0 0
        %1912 = vmatprep.subr.bf16.mxu0 0
        %1913 = vmatpush2.bf16.msra.mxu0 0
        %1914 = vmatprep.subr.bf16.mxu0 0
        %1915 = vmatpush2.bf16.msra.mxu0 0
        %1916 = vmatprep.subr.bf16.mxu0 0
        %1917 = vmatpush2.bf16.msra.mxu0 0
        %1918 = vmatprep.subr.bf16.mxu0 0
        %1919 = vmatpush2.bf16.msra.mxu0 0
        %1920 = vmatprep.mubr.bf16.mxu0 0
        %1921 = vmatmul.mubr.bf16.gmra.mxu0 %v1886
        %v1922 = vpop.f32.mrf.mxu0
        %v1923 = vadd.f32 0.0, %v1922
        %v1924 = vpop.f32.mrf.mxu0
        %v1925 = vpop.f32.mrf.mxu0
        %v1926 = vadd.f32 0.0, %v1925
        %v1927 = vpop.f32.mrf.mxu0
        %1928 = vdwg.mxu0
        %v1929 = vadd.f32 %v1859, %v1923
        %v1930 = vadd.f32 %v1860, %v1926
        %s1931 = scalar_lea.vmem [#allocation2], 320
        %v1932 = vld [vmem:[%s1931] sm:$0xf]
        %v1933 = vld [vmem:[%s1931 + $0x4] sm:$0xf]
        %v1934 = vld [vmem:[%s1931 + $0x8] sm:$0xf]
        %v1935 = vld [vmem:[%s1931 + $0xc] sm:$0xf]
        %v1940 = vunpack.c.l.b16 %v1932
        %v1941 = vunpack.c.l.b16 %v1933
        %v1942 = vunpack.c.l.b16 %v1934
        %v1943 = vunpack.c.l.b16 %v1935
        %v1944 = vpack.c.b16 %v1941, %v1940
        %v1945 = vpack.c.b16 %v1943, %v1942
        %v1949 = vsel %vm472, %v1784, 0
        %1951 = vmatprep.subr.bf16.mxu0 0
        %1952 = vmatpush1.bf16.msra.mxu0 0
        %1953 = vmatprep.subr.bf16.mxu0 0
        %1954 = vmatpush1.bf16.msra.mxu0 0
        %1955 = vmatprep.subr.bf16.mxu0 0
        %1956 = vmatpush1.bf16.msra.mxu0 0
        %1957 = vmatprep.subr.bf16.mxu0 0
        %1958 = vmatpush1.bf16.msra.mxu0 0
        %1959 = vmatprep.subr.bf16.mxu0 0
        %1960 = vmatpush1.bf16.msra.mxu0 0
        %1961 = vmatprep.subr.bf16.mxu0 0
        %1962 = vmatpush1.bf16.msra.mxu0 0
        %1963 = vmatprep.subr.bf16.mxu0 0
        %1964 = vmatpush1.bf16.msra.mxu0 %v1945
        %1965 = vmatprep.subr.bf16.mxu0 0
        %1966 = vmatpush1.bf16.msra.mxu0 %v1944
        %1967 = vmatprep.subr.bf16.mxu0 0
        %1968 = vmatpush2.bf16.msra.mxu0 0
        %1969 = vmatprep.subr.bf16.mxu0 0
        %1970 = vmatpush2.bf16.msra.mxu0 0
        %1971 = vmatprep.subr.bf16.mxu0 0
        %1972 = vmatpush2.bf16.msra.mxu0 0
        %1973 = vmatprep.subr.bf16.mxu0 0
        %1974 = vmatpush2.bf16.msra.mxu0 0
        %1975 = vmatprep.subr.bf16.mxu0 0
        %1976 = vmatpush2.bf16.msra.mxu0 0
        %1977 = vmatprep.subr.bf16.mxu0 0
        %1978 = vmatpush2.bf16.msra.mxu0 0
        %1979 = vmatprep.subr.bf16.mxu0 0
        %1980 = vmatpush2.bf16.msra.mxu0 0
        %1981 = vmatprep.subr.bf16.mxu0 0
        %1982 = vmatpush2.bf16.msra.mxu0 0
        %1983 = vmatprep.mubr.bf16.mxu0 0
        %1984 = vmatmul.mubr.bf16.gmra.mxu0 %v1949
        %v1985 = vpop.f32.mrf.mxu0
        %v1986 = vadd.f32 0.0, %v1985
        %v1987 = vpop.f32.mrf.mxu0
        %v1988 = vpop.f32.mrf.mxu0
        %v1989 = vadd.f32 0.0, %v1988
        %v1990 = vpop.f32.mrf.mxu0
        %1991 = vdwg.mxu0
        %v1992 = vadd.f32 %v1929, %v1986
        %v1993 = vadd.f32 %v1930, %v1989
        %v1994 = vrot.slane %v1780, 1
        %v1995 = vrot.slane %v1781, 1
        %v1996 = vsel %vm655, %v1994, %v1995
        %v1997 = vsel %vm655, %v1995, %v1994
        %v1998 = vmul.f32 %v1996, %v385
        %v1999 = vmul.f32 %v1997, %v386
        %v2000 = vpack.c.bf16 %v1999, %v1998
        %s2001 = scalar_lea.vmem [#allocation2], 336
        %v2002 = vld [vmem:[%s2001] sm:$0xf]
        %v2003 = vld [vmem:[%s2001 + $0x4] sm:$0xf]
        %v2004 = vld [vmem:[%s2001 + $0x8] sm:$0xf]
        %v2005 = vld [vmem:[%s2001 + $0xc] sm:$0xf]
        %v2010 = vunpack.c.l.b16 %v2002
        %v2011 = vunpack.c.l.b16 %v2003
        %v2012 = vunpack.c.l.b16 %v2004
        %v2013 = vunpack.c.l.b16 %v2005
        %v2014 = vpack.c.b16 %v2011, %v2010
        %v2015 = vpack.c.b16 %v2013, %v2012
        %v2019 = vsel %vm472, %v2000, 0
        %2021 = vmatprep.subr.bf16.mxu0 0
        %2022 = vmatpush1.bf16.msra.mxu0 0
        %2023 = vmatprep.subr.bf16.mxu0 0
        %2024 = vmatpush1.bf16.msra.mxu0 0
        %2025 = vmatprep.subr.bf16.mxu0 0
        %2026 = vmatpush1.bf16.msra.mxu0 0
        %2027 = vmatprep.subr.bf16.mxu0 0
        %2028 = vmatpush1.bf16.msra.mxu0 0
        %2029 = vmatprep.subr.bf16.mxu0 0
        %2030 = vmatpush1.bf16.msra.mxu0 0
        %2031 = vmatprep.subr.bf16.mxu0 0
        %2032 = vmatpush1.bf16.msra.mxu0 0
        %2033 = vmatprep.subr.bf16.mxu0 0
        %2034 = vmatpush1.bf16.msra.mxu0 %v2015
        %2035 = vmatprep.subr.bf16.mxu0 0
        %2036 = vmatpush1.bf16.msra.mxu0 %v2014
        %2037 = vmatprep.subr.bf16.mxu0 0
        %2038 = vmatpush2.bf16.msra.mxu0 0
        %2039 = vmatprep.subr.bf16.mxu0 0
        %2040 = vmatpush2.bf16.msra.mxu0 0
        %2041 = vmatprep.subr.bf16.mxu0 0
        %2042 = vmatpush2.bf16.msra.mxu0 0
        %2043 = vmatprep.subr.bf16.mxu0 0
        %2044 = vmatpush2.bf16.msra.mxu0 0
        %2045 = vmatprep.subr.bf16.mxu0 0
        %2046 = vmatpush2.bf16.msra.mxu0 0
        %2047 = vmatprep.subr.bf16.mxu0 0
        %2048 = vmatpush2.bf16.msra.mxu0 0
        %2049 = vmatprep.subr.bf16.mxu0 0
        %2050 = vmatpush2.bf16.msra.mxu0 0
        %2051 = vmatprep.subr.bf16.mxu0 0
        %2052 = vmatpush2.bf16.msra.mxu0 0
        %2053 = vmatprep.mubr.bf16.mxu0 0
        %2054 = vmatmul.mubr.bf16.gmra.mxu0 %v2019
        %v2055 = vpop.f32.mrf.mxu0
        %v2056 = vadd.f32 0.0, %v2055
        %v2057 = vpop.f32.mrf.mxu0
        %v2058 = vpop.f32.mrf.mxu0
        %v2059 = vadd.f32 0.0, %v2058
        %v2060 = vpop.f32.mrf.mxu0
        %2061 = vdwg.mxu0
        %v2062 = vadd.f32 %v1992, %v2056
        %v2063 = vadd.f32 %v1993, %v2059
        %v2064 = vrot.slane %v1780, 2
        %v2065 = vrot.slane %v1781, 2
        %v2066 = vsel %vm726, %v2064, %v2065
        %v2067 = vsel %vm726, %v2065, %v2064
        %v2068 = vmul.f32 %v2066, %v397
        %v2069 = vmul.f32 %v2067, %v398
        %v2070 = vpack.c.bf16 %v2069, %v2068
        %s2071 = scalar_lea.vmem [#allocation2], 352
        %v2072 = vld [vmem:[%s2071] sm:$0xf]
        %v2073 = vld [vmem:[%s2071 + $0x4] sm:$0xf]
        %v2074 = vld [vmem:[%s2071 + $0x8] sm:$0xf]
        %v2075 = vld [vmem:[%s2071 + $0xc] sm:$0xf]
        %v2080 = vunpack.c.l.b16 %v2072
        %v2081 = vunpack.c.l.b16 %v2073
        %v2082 = vunpack.c.l.b16 %v2074
        %v2083 = vunpack.c.l.b16 %v2075
        %v2084 = vpack.c.b16 %v2081, %v2080
        %v2085 = vpack.c.b16 %v2083, %v2082
        %v2089 = vsel %vm472, %v2070, 0
        %2091 = vmatprep.subr.bf16.mxu0 0
        %2092 = vmatpush1.bf16.msra.mxu0 0
        %2093 = vmatprep.subr.bf16.mxu0 0
        %2094 = vmatpush1.bf16.msra.mxu0 0
        %2095 = vmatprep.subr.bf16.mxu0 0
        %2096 = vmatpush1.bf16.msra.mxu0 0
        %2097 = vmatprep.subr.bf16.mxu0 0
        %2098 = vmatpush1.bf16.msra.mxu0 0
        %2099 = vmatprep.subr.bf16.mxu0 0
        %2100 = vmatpush1.bf16.msra.mxu0 0
        %2101 = vmatprep.subr.bf16.mxu0 0
        %2102 = vmatpush1.bf16.msra.mxu0 0
        %2103 = vmatprep.subr.bf16.mxu0 0
        %2104 = vmatpush1.bf16.msra.mxu0 %v2085
        %2105 = vmatprep.subr.bf16.mxu0 0
        %2106 = vmatpush1.bf16.msra.mxu0 %v2084
        %2107 = vmatprep.subr.bf16.mxu0 0
        %2108 = vmatpush2.bf16.msra.mxu0 0
        %2109 = vmatprep.subr.bf16.mxu0 0
        %2110 = vmatpush2.bf16.msra.mxu0 0
        %2111 = vmatprep.subr.bf16.mxu0 0
        %2112 = vmatpush2.bf16.msra.mxu0 0
        %2113 = vmatprep.subr.bf16.mxu0 0
        %2114 = vmatpush2.bf16.msra.mxu0 0
        %2115 = vmatprep.subr.bf16.mxu0 0
        %2116 = vmatpush2.bf16.msra.mxu0 0
        %2117 = vmatprep.subr.bf16.mxu0 0
        %2118 = vmatpush2.bf16.msra.mxu0 0
        %2119 = vmatprep.subr.bf16.mxu0 0
        %2120 = vmatpush2.bf16.msra.mxu0 0
        %2121 = vmatprep.subr.bf16.mxu0 0
        %2122 = vmatpush2.bf16.msra.mxu0 0
        %2123 = vmatprep.mubr.bf16.mxu0 0
        %2124 = vmatmul.mubr.bf16.gmra.mxu0 %v2089
        %v2125 = vpop.f32.mrf.mxu0
        %v2126 = vadd.f32 0.0, %v2125
        %v2127 = vpop.f32.mrf.mxu0
        %v2128 = vpop.f32.mrf.mxu0
        %v2129 = vadd.f32 0.0, %v2128
        %v2130 = vpop.f32.mrf.mxu0
        %2131 = vdwg.mxu0
        %v2132 = vadd.f32 %v2062, %v2126
        %v2133 = vadd.f32 %v2063, %v2129
        %v2134 = vtanh.pop %v2132
        %v2135 = vtanh.pop %v2133
        %v2136 = vxor.u32 %v2132, 2147483648
        %v2137 = vxor.u32 %v2133, 2147483648
        %v2138 = vmul.f32 %v2136, 1.442695
        %v2139 = vpow.pop %v2138
        %v2140 = vmul.f32 %v2137, 1.442695
        %v2141 = vpow.pop %v2140
        %v2142 = vadd.f32 %v2139, 1.0
        %v2143 = vadd.f32 %v2141, 1.0
        %v2144 = vrcp.pop %v2142
        %v2145 = vmul.f32 1.0, %v2144
        %v2146 = vrcp.pop %v2143
        %v2147 = vmul.f32 1.0, %v2146
        %2150 = vrot.lane.b32.xlu0 %v2145, 96
        %v2151 = vpop.permute.xlu0 %2150
        %2152 = vrot.lane.b32.xlu0 %v2147, 96
        %v2153 = vpop.permute.xlu0 %2152
        %v2156 = vmul.f32 %v2134, %v2151
        %v2157 = vmul.f32 %v2135, %v2153
        %v2158 = vpack.c.bf16 %v2157, %v2156
        %s2159 = scalar_lea.vmem [#allocation2], 368
        %v2160 = vld [vmem:[%s2159] sm:$0xf]
        %v2161 = vld [vmem:[%s2159 + $0x4] sm:$0xf]
        %v2162 = vld [vmem:[%s2159 + $0x8] sm:$0xf]
        %v2163 = vld [vmem:[%s2159 + $0xc] sm:$0xf]
        %v2164 = vld [vmem:[%s1785 + $0x1] sm:$0x1]
        %v2165 = vlaneseq
        %v2166 = vshrl.u32 %v2165, 7
        %v2167 = vsub.s32 0, %v2166
        %v2168 = vrot.slane %v2164, %v2167
        %v2173 = vunpack.c.l.b16 %v2160
        %v2174 = vunpack.c.l.b16 %v2161
        %v2175 = vunpack.c.l.b16 %v2162
        %v2176 = vunpack.c.l.b16 %v2163
        %v2177 = vpack.c.b16 %v2174, %v2173
        %v2178 = vpack.c.b16 %v2176, %v2175
        %v2182 = vsel %vm472, %v2158, 0
        %2184 = vmatprep.subr.bf16.mxu0 0
        %2185 = vmatpush1.bf16.msra.mxu0 0
        %2186 = vmatprep.subr.bf16.mxu0 0
        %2187 = vmatpush1.bf16.msra.mxu0 0
        %2188 = vmatprep.subr.bf16.mxu0 0
        %2189 = vmatpush1.bf16.msra.mxu0 0
        %2190 = vmatprep.subr.bf16.mxu0 0
        %2191 = vmatpush1.bf16.msra.mxu0 0
        %2192 = vmatprep.subr.bf16.mxu0 0
        %2193 = vmatpush1.bf16.msra.mxu0 0
        %2194 = vmatprep.subr.bf16.mxu0 0
        %2195 = vmatpush1.bf16.msra.mxu0 0
        %2196 = vmatprep.subr.bf16.mxu0 0
        %2197 = vmatpush1.bf16.msra.mxu0 %v2178
        %2198 = vmatprep.subr.bf16.mxu0 0
        %2199 = vmatpush1.bf16.msra.mxu0 %v2177
        %2200 = vmatprep.subr.bf16.mxu0 0
        %2201 = vmatpush2.bf16.msra.mxu0 0
        %2202 = vmatprep.subr.bf16.mxu0 0
        %2203 = vmatpush2.bf16.msra.mxu0 0
        %2204 = vmatprep.subr.bf16.mxu0 0
        %2205 = vmatpush2.bf16.msra.mxu0 0
        %2206 = vmatprep.subr.bf16.mxu0 0
        %2207 = vmatpush2.bf16.msra.mxu0 0
        %2208 = vmatprep.subr.bf16.mxu0 0
        %2209 = vmatpush2.bf16.msra.mxu0 0
        %2210 = vmatprep.subr.bf16.mxu0 0
        %2211 = vmatpush2.bf16.msra.mxu0 0
        %2212 = vmatprep.subr.bf16.mxu0 0
        %2213 = vmatpush2.bf16.msra.mxu0 0
        %2214 = vmatprep.subr.bf16.mxu0 0
        %2215 = vmatpush2.bf16.msra.mxu0 0
        %2216 = vmatprep.mubr.bf16.mxu0 0
        %2217 = vmatmul.mubr.bf16.gmra.mxu0 %v2182
        %v2218 = vpop.f32.mrf.mxu0
        %v2219 = vadd.f32 %v2168, %v2218
        %v2220 = vpop.f32.mrf.mxu0
        %v2221 = vpop.f32.mrf.mxu0
        %v2222 = vadd.f32 %v2168, %v2221
        %v2223 = vpop.f32.mrf.mxu0
        %2224 = vdwg.mxu0
        %2227 = vrot.lane.b32.xlu0 %v2219, 32
        %v2228 = vpop.permute.xlu0 %2227
        %2229 = vrot.lane.b32.xlu0 %v2222, 32
        %v2230 = vpop.permute.xlu0 %2229
        %v2233 = vadd.f32 %v1782, %v2228
        %v2234 = vadd.f32 %v1783, %v2230
        %v2235 = vmul.f32 %v2233, %v341
        %v2236 = vmul.f32 %v2234, %v346
        %v2237 = vld [vmem:[%s5] sm:$0xff]
        %v2238 = vld [vmem:[%s5 + $0x8] sm:$0xff]
        %v2239 = vld [vmem:[%s5 + $0x10] sm:$0xff]
        %v2240 = vld [vmem:[%s5 + $0x18] sm:$0xff]
        %v2241 = vld [vmem:[%s5 + $0x20] sm:$0x1]
        %v2242 = vlaneseq
        %v2243 = vshrl.u32 %v2242, 7
        %v2244 = vsub.s32 0, %v2243
        %v2245 = vrot.slane %v2241, %v2244
        %2248 = vrot.lane.b32.xlu0 %v2235, 96
        %v2249 = vpop.permute.xlu0 %2248
        %2250 = vrot.lane.b32.xlu0 %v2236, 96
        %v2251 = vpop.permute.xlu0 %2250
        %v2252 = vsel %vm472, %v2249, 0
        %v2254 = vsel %vm472, %v2251, 0
        %2256 = vmatprep.subr.mxu0 0.0
        %2257 = vmatpush1.msra.mxu0 0.0
        %2258 = vmatprep.subr.mxu0 0.0
        %2259 = vmatpush1.msra.mxu0 0.0
        %2260 = vmatprep.subr.mxu0 0.0
        %2261 = vmatpush1.msra.mxu0 0.0
        %2262 = vmatprep.subr.mxu0 0.0
        %2263 = vmatpush1.msra.mxu0 0.0
        %2264 = vmatprep.subr.mxu0 0.0
        %2265 = vmatpush1.msra.mxu0 0.0
        %2266 = vmatprep.subr.mxu0 0.0
        %2267 = vmatpush1.msra.mxu0 0.0
        %2268 = vmatprep.subr.mxu0 0.0
        %2269 = vmatpush1.msra.mxu0 0.0
        %2270 = vmatprep.subr.mxu0 0.0
        %2271 = vmatpush1.msra.mxu0 0.0
        %2272 = vmatprep.subr.mxu0 0.0
        %2273 = vmatpush1.msra.mxu0 0.0
        %2274 = vmatprep.subr.mxu0 0.0
        %2275 = vmatpush1.msra.mxu0 0.0
        %2276 = vmatprep.subr.mxu0 0.0
        %2277 = vmatpush1.msra.mxu0 0.0
        %2278 = vmatprep.subr.mxu0 0.0
        %2279 = vmatpush1.msra.mxu0 0.0
        %2280 = vmatprep.subr.mxu0 0.0
        %2281 = vmatpush1.msra.mxu0 %v2240
        %2282 = vmatprep.subr.mxu0 0.0
        %2283 = vmatpush1.msra.mxu0 %v2239
        %2284 = vmatprep.subr.mxu0 0.0
        %2285 = vmatpush1.msra.mxu0 %v2238
        %2286 = vmatprep.subr.mxu0 0.0
        %2287 = vmatpush1.msra.mxu0 %v2237
        %2288 = vmatprep.subr.mxu0 0.0
        %2289 = vmatpush2.msra.mxu0 0.0
        %2290 = vmatprep.subr.mxu0 0.0
        %2291 = vmatpush2.msra.mxu0 0.0
        %2292 = vmatprep.subr.mxu0 0.0
        %2293 = vmatpush2.msra.mxu0 0.0
        %2294 = vmatprep.subr.mxu0 0.0
        %2295 = vmatpush2.msra.mxu0 0.0
        %2296 = vmatprep.subr.mxu0 0.0
        %2297 = vmatpush2.msra.mxu0 0.0
        %2298 = vmatprep.subr.mxu0 0.0
        %2299 = vmatpush2.msra.mxu0 0.0
        %2300 = vmatprep.subr.mxu0 0.0
        %2301 = vmatpush2.msra.mxu0 0.0
        %2302 = vmatprep.subr.mxu0 0.0
        %2303 = vmatpush2.msra.mxu0 0.0
        %2304 = vmatprep.subr.mxu0 0.0
        %2305 = vmatpush2.msra.mxu0 0.0
        %2306 = vmatprep.subr.mxu0 0.0
        %2307 = vmatpush2.msra.mxu0 0.0
        %2308 = vmatprep.subr.mxu0 0.0
        %2309 = vmatpush2.msra.mxu0 0.0
        %2310 = vmatprep.subr.mxu0 0.0
        %2311 = vmatpush2.msra.mxu0 0.0
        %2312 = vmatprep.subr.mxu0 0.0
        %2313 = vmatpush2.msra.mxu0 0.0
        %2314 = vmatprep.subr.mxu0 0.0
        %2315 = vmatpush2.msra.mxu0 0.0
        %2316 = vmatprep.subr.mxu0 0.0
        %2317 = vmatpush2.msra.mxu0 0.0
        %2318 = vmatprep.subr.mxu0 0.0
        %2319 = vmatpush2.msra.mxu0 0.0
        %2320 = vmatprep.mubr.f32.mxu0 0.0
        %2321 = vmatmul.mubr.f32.gmra.mxu0 %v2252
        %v2322 = vpop.f32.mrf.mxu0
        %v2323 = vadd.f32 %v2245, %v2322
        %v2324 = vpop.f32.mrf.mxu0
        %2325 = vmatprep.mubr.f32.mxu0 0.0
        %2326 = vmatmul.mubr.f32.gmra.mxu0 %v2254
        %v2327 = vpop.f32.mrf.mxu0
        %v2328 = vadd.f32 %v2245, %v2327
        %v2329 = vpop.f32.mrf.mxu0
        %2330 = vdwg.mxu0
        %v2331 = vmul.f32 %v2323, %v341
        %v2332 = vmul.f32 %v2328, %v346
        %v2333 = vmul.f32 %v2331, 1.442695
        %v2334 = vpow.pop %v2333
        %v2335 = vmul.f32 %v2332, 1.442695
        %v2336 = vpow.pop %v2335
        %v2337 = vmul.f32 %v334, %v2334
        %v2338 = vmul.f32 %v335, %v2336
        %v2339 = vmul.f32 %v2337, %v341
        %v2340 = vmul.f32 %v2338, %v346
        %2343 = vrot.lane.b32.xlu0 %v2339, 126
        %v2344 = vpop.permute.xlu0 %2343
        %2345 = vrot.lane.b32.xlu0 %v2340, 126
        %v2346 = vpop.permute.xlu0 %2345
        %v2349 = vadd.f32 %v2331, %v2344
        %v2350 = vadd.f32 %v2332, %v2346
        %vm2351 = vcmask 15360
        %2352 = vst.msk [vmem:[%s325] sm:$0xff] %vm2351, %v334
        %2353 = vst.msk [vmem:[%s325 + $0x8] sm:$0xff] %vm2351, %v335
        %2356 = vrot.lane.b32.xlu0 %v2349, 2
        %v2357 = vpop.permute.xlu0 %2356
        %2358 = vrot.lane.b32.xlu0 %v2350, 2
        %v2359 = vpop.permute.xlu0 %2358
        %vm2362 = vcmask 31760
        %2363 = vst.msk [vmem:[%s325] sm:$0xff] %vm2362, %v2357
        %2364 = vst.msk [vmem:[%s325 + $0x8] sm:$0xff] %vm2362, %v2359
        %2367 = vrot.lane.b32.xlu0 %v2331, 126
        %v2368 = vpop.permute.xlu0 %2367
        %2369 = vrot.lane.b32.xlu0 %v2332, 126
        %v2370 = vpop.permute.xlu0 %2369
        %v2373 = vsel %vm2351, %v2368, 0.0
        %2374 = vadd.xlane.f32.xlu0 %v2373
        %v2375 = vpop.xlane.xlu0 %2374
        %v2376 = vsel %vm2351, %v2370, 0.0
        %2377 = vadd.xlane.f32.xlu0 %v2376
        %v2378 = vpop.xlane.xlu0 %2377
        %vm2379 = vcmask 7168
        %2380 = vst.msk [vmem:[%s331] sm:$0xff] %vm2379, %v2375
        %2381 = vst.msk [vmem:[%s331 + $0x8] sm:$0xff] %vm2379, %v2378
        %s2382 = smul.u32 2, %s20
        %p2383 = scmp.lt.s32.totalorder %s2382, 3
        %s2384 = scalar_select %p2383, %s2382, 3
        %s2385 = smul.addr %s2384, 8
        %s2386 = scalar_lea.vmem %s6, %s2385
        %s2387 = smul.u32 2, %s20
        %p2388 = scmp.lt.s32.totalorder %s2387, 3
        %s2389 = scalar_select %p2388, %s2387, 3
        %s2390 = smul.addr %s2389, 8
        %s2391 = scalar_lea.vmem %s7, %s2390
        // Predicated region
        $region49: #{residual_coupling_forward.1} parent=43 // pred_check
          %p2392 = pneg %p174
        $region50: #{residual_coupling_forward.1} parent=43 // pred_check_branch
          %2394 = sbr.rel (%p2392) target = $region52
        $region51: #{residual_coupling_forward.1} parent=43 // pred_region
          %s2395 = smul.u32 2, %s20
        $region52: #{residual_coupling_forward.1} parent=43 // pred_fallthru
          _
        // Predicated region
        $region53: #{residual_coupling_forward.1} parent=43 // pred_check
          %p2396 = pneg %p200
        $region54: #{residual_coupling_forward.1} parent=43 // pred_check_branch
          %2398 = sbr.rel (%p2396) target = $region56
        $region55: #{residual_coupling_forward.1} parent=43 // pred_region
          %s2399 = smul.u32 2, %s20
        $region56: #{residual_coupling_forward.1} parent=43 // pred_fallthru
          _
      $region44: #{residual_coupling_forward.1} parent=5 // pred_fallthru
        _
      %p2400 = scmp.le.s32.totalorder 2, %s15
      // Predicated region
      $region57: #{residual_coupling_forward.1} parent=5 // pred_check
        %p2401 = pneg %p2400
      $region58: #{residual_coupling_forward.1} parent=5 // pred_check_branch
        %2403 = sbr.rel (%p2401) target = $region60
      $region59: #{residual_coupling_forward.1} parent=5 // pred_region
        %s2404 = ssub.s32 %s15, 2
        // Predicated region
        $region61: #{residual_coupling_forward.1} parent=59 // pred_check
          %p2405 = pneg %p180
        $region62: #{residual_coupling_forward.1} parent=59 // pred_check_branch
          %2407 = sbr.rel (%p2405) target = $region64
        $region63: #{residual_coupling_forward.1} parent=59 // pred_region
          %s2408 = smul.u32 2, %s21
          %p2409 = scmp.lt.s32.totalorder %s2408, 3
          %s2410 = scalar_select %p2409, %s2408, 3
          %s2411 = smul.addr %s2410, 8
          %s2412 = scalar_lea.vmem %s6, %s2411
        $region64: #{residual_coupling_forward.1} parent=59 // pred_fallthru
          _
        // Predicated region
        $region65: #{residual_coupling_forward.1} parent=59 // pred_check
          %p2413 = pneg %p206
        $region66: #{residual_coupling_forward.1} parent=59 // pred_check_branch
          %2415 = sbr.rel (%p2413) target = $region68
        $region67: #{residual_coupling_forward.1} parent=59 // pred_region
          %s2416 = smul.u32 2, %s21
          %p2417 = scmp.lt.s32.totalorder %s2416, 3
          %s2418 = scalar_select %p2417, %s2416, 3
          %s2419 = smul.addr %s2418, 8
          %s2420 = scalar_lea.vmem %s7, %s2419
        $region68: #{residual_coupling_forward.1} parent=59 // pred_fallthru
          _
      $region60: #{residual_coupling_forward.1} parent=5 // pred_fallthru
        _
    $region6: #{residual_coupling_forward.1} parent=1 // loop_footer
      %s19 = sadd.s32 1, %s15
    $region7: #{residual_coupling_forward.1} parent=1 // loop_footer_branch
      %14 = sbr.rel target = $region3
    $region8: #{residual_coupling_forward.1} parent=1 // loop_exit
      _
    %2421 = vsyncpa [#allocation3], 1
    %s2422 = scalar_lea.sflag [#allocation3], 1
    %2423 = vsyncpa %s2422, 1

</llo_original>
